<compile_context>
chip_gen: v7x
topology: tpu7x:2x2x1
jax: 0.10.0
libtpu: 0.0.40
codegen_flags: <defaults>
</compile_context>

<pallas_src>
import functools

import jax
import jax.numpy as jnp
import numpy as np
from jax.experimental import pallas as pl
from jax.experimental.pallas import tpu as pltpu


@functools.lru_cache(maxsize=1)
def _vmem_capacity_bytes():
    try:
        return int(pltpu.get_tpu_info().vmem_capacity_bytes)
    except Exception:
        return 64 * 1024 * 1024  # conservative (v7x per-TC VMEM)


def _conv3x3_kernel(x_ref, w_ref, o_ref, xpad_ref, *, H, W, stride,
                    instance_norm, leaky_relu):
    """Fused 3x3 'same' conv on one sample + optional InstanceNorm + LeakyReLU.

    x_ref:    (1, H, W, Cin)   unpadded bf16 input tile (VMEM)
    w_ref:    (9, Cin, Cout)   bf16 conv weights, tap index = dy*3 + dx
    o_ref:    (1, H/s, W/s, Cout)
    xpad_ref: (H+2, W+2, Cin)  bf16 VMEM scratch used for in-kernel zero padding
    """
    cin = x_ref.shape[-1]
    cout = o_ref.shape[-1]

    # In-kernel zero padding: no jnp.pad / extra HBM round trip in the wrapper.
    # Full re-zero every step keeps the scratch independent of grid scheduling
    # (megacore-safe); it is negligible next to the conv itself.
    xpad_ref[...] = jnp.zeros(xpad_ref.shape, xpad_ref.dtype)
    xpad_ref[pl.ds(1, H), pl.ds(1, W), :] = x_ref[0]

    # 9-tap shifted-window conv: each tap is a bf16 (H*W, Cin) @ (Cin, Cout) MXU matmul
    # accumulated in f32.
    acc = jnp.zeros((H * W, cout), jnp.float32)
    for dy in range(3):
        for dx in range(3):
            patch = xpad_ref[pl.ds(dy, H), pl.ds(dx, W), :].reshape(H * W, cin)
            acc = acc + jnp.dot(patch, w_ref[dy * 3 + dx],
                                preferred_element_type=jnp.float32)

    if instance_norm:
        # nn.InstanceNorm2d(affine=False): per-sample, per-channel, biased var, eps=1e-5.
        mean = jnp.mean(acc, axis=0, keepdims=True)
        var = jnp.mean(jnp.square(acc - mean), axis=0, keepdims=True)
        acc = (acc - mean) * jax.lax.rsqrt(var + 1e-5)

    y = acc.reshape(H, W, cout)
    if stride == 2:
        # Fused stride-2: keep only even rows/cols before the store, so the output block
        # (and its HBM write) is (H/2, W/2, Cout). Exact: stride-2 k3/p1 conv ==
        # stride-1 conv sampled at even positions, and LeakyReLU commutes with it.
        y = y.reshape(H // 2, 2, W, cout)[:, 0]
        y = y.reshape(H // 2, W // 2, 2, cout)[:, :, 0]
    if leaky_relu:
        y = jnp.where(y >= 0, y, 0.2 * y)
    o_ref[0] = y.astype(o_ref.dtype)


def conv3x3_block(x_nhwc, w9, *, stride, instance_norm, leaky_relu, out_dtype):
    """3x3 'same' conv (stride 1 or 2) + fused IN/LReLU. Grid = batch."""
    N, H, W, Cin = x_nhwc.shape
    Cout = w9.shape[-1]
    if stride == 2:
        assert H % 2 == 0 and W % 2 == 0
        assert not instance_norm  # strided layers in this net never have IN
    Ho, Wo = H // stride, W // stride

    kernel = functools.partial(_conv3x3_kernel, H=H, W=W, stride=stride,
                               instance_norm=instance_norm, leaky_relu=leaky_relu)

    # Rough per-call VMEM budget: double-buffered in/out/weight blocks + padded scratch.
    bytes_in = H * W * Cin * 2
    bytes_w = 9 * Cin * Cout * 2
    bytes_out = Ho * Wo * Cout * jnp.dtype(out_dtype).itemsize
    bytes_pad = (H + 2) * (W + 2) * Cin * 2
    est = 2 * (bytes_in + bytes_w + bytes_out) + bytes_pad
    vmem_limit = int(min(0.75 * _vmem_capacity_bytes(),
                         max(32 * 1024 * 1024, 2 * est)))

    return pl.pallas_call(
        kernel,
        out_shape=jax.ShapeDtypeStruct((N, Ho, Wo, Cout), out_dtype),
        grid=(N,),
        in_specs=[
            pl.BlockSpec((1, H, W, Cin), lambda b: (b, 0, 0, 0)),
            pl.BlockSpec((9, Cin, Cout), lambda b: (0, 0, 0)),
        ],
        out_specs=pl.BlockSpec((1, Ho, Wo, Cout), lambda b: (b, 0, 0, 0)),
        scratch_shapes=[pltpu.VMEM((H + 2, W + 2, Cin), jnp.bfloat16)],
        compiler_params=pltpu.CompilerParams(
            dimension_semantics=("parallel",),
            vmem_limit_bytes=vmem_limit),
    )(x_nhwc, w9)


class Config:
    dataset = "anime"
    d_layers = 1
    use_spectral_norm = False  # TODO(synk): spectral_norm power iteration not implemented


def init_params(config, key):
    """Mirror ImageDiscriminator.__init__ layer structure; weights ~ N(0, 0.02), no bias."""
    specs = []  # (cin, cout, stride, instance_norm, leaky_relu)
    c = 32
    specs.append((3, c, 1, False, True))
    for _ in range(config.d_layers):
        specs.append((c, 2 * c, 2, False, True))
        specs.append((2 * c, 4 * c, 1, True, True))
        c *= 4
    specs.append((c, c, 1, True, True))
    specs.append((c, 1, 1, False, False))

    keys = jax.random.split(key, len(specs))
    params = []
    for k, (cin, cout, stride, inorm, lrelu) in zip(keys, specs):
        w = 0.02 * jax.random.normal(k, (3, 3, cin, cout), jnp.float32)  # HWIO
        # Lane-dense output for very narrow layers (final Cout=1): pad Cout to 128 with
        # zero weights; the wrapper slices the real channels back out. MXU cost is
        # identical, stores become unmasked lane-dense vst.
        cout_pad = 128 if cout < 8 else cout
        if cout_pad != cout:
            w = jnp.pad(w, ((0, 0), (0, 0), (0, 0), (0, cout_pad - cout)))
        params.append(dict(
            w=w.reshape(9, cin, cout_pad).astype(jnp.bfloat16),  # tap index = dy*3 + dx
            cout=cout, stride=stride, instance_norm=inorm, leaky_relu=lrelu))
    return params


def image_discriminator_forward(params, x_nchw):
    x = jnp.transpose(x_nchw, (0, 2, 3, 1)).astype(jnp.bfloat16)  # NCHW -> NHWC bf16
    for li, p in enumerate(params):
        last = li == len(params) - 1
        x = conv3x3_block(
            x, p["w"], stride=p["stride"], instance_norm=p["instance_norm"],
            leaky_relu=p["leaky_relu"],
            out_dtype=jnp.float32 if last else jnp.bfloat16)
    x = x[..., :params[-1]["cout"]]          # strip lane padding (128 -> 1)
    return jnp.transpose(x, (0, 3, 1, 2))    # NHWC -> NCHW


def reference_forward(params, x_nchw):
    """Pure-JAX reference with matching bf16 MXU inputs / f32 accumulation."""
    x = jnp.transpose(x_nchw, (0, 2, 3, 1)).astype(jnp.bfloat16)
    for li, p in enumerate(params):
        cin = p["w"].shape[1]
        cout = p["cout"]
        w = p["w"].reshape(3, 3, cin, -1)[..., :cout]  # bf16 HWIO, true Cout
        s = p["stride"]
        y = jax.lax.conv_general_dilated(
            x, w, (s, s), ((1, 1), (1, 1)),
            dimension_numbers=("NHWC", "HWIO", "NHWC"),
            preferred_element_type=jnp.float32)
        if p["instance_norm"]:
            mean = jnp.mean(y, axis=(1, 2), keepdims=True)
            var = jnp.mean(jnp.square(y - mean), axis=(1, 2), keepdims=True)
            y = (y - mean) * jax.lax.rsqrt(var + 1e-5)
        if p["leaky_relu"]:
            y = jnp.where(y >= 0, y, 0.2 * y)
        x = y.astype(jnp.bfloat16) if li < len(params) - 1 else y
    return jnp.transpose(x, (0, 3, 1, 2))


if __name__ == "__main__":
    cfg = Config()
    pkey, xkey = jax.random.split(jax.random.PRNGKey(0))
    params = init_params(cfg, pkey)

    # NCHW input, like the PyTorch module (3-channel image).
    x = jax.random.normal(xkey, (2, 3, 16, 16), jnp.float32)

    out = jax.block_until_ready(image_discriminator_forward(params, x))
    assert out.shape == (2, 1, 8, 8), out.shape

    ref = jax.block_until_ready(reference_forward(params, x))
    np.testing.assert_allclose(np.asarray(out, dtype=np.float32),
                               np.asarray(ref, dtype=np.float32),
                               atol=1e-2, rtol=1e-2)

    print("KERNEL_OK")
</pallas_src>

<mosaic_0001>
module attributes {stable_mosaic.version = 11 : i64} {
  func.func @_conv3x3_kernel(%arg0: i32, %arg1: memref<1x16x16x3xbf16, #tpu.memory_space<vmem>>, %arg2: memref<9x3x32xbf16, #tpu.memory_space<vmem>>, %arg3: memref<1x16x16x32xbf16, #tpu.memory_space<vmem>>, %arg4: memref<18x18x3xbf16, #tpu.memory_space<vmem>>) attributes {dimension_semantics = [#tpu.dimension_semantics<parallel>], iteration_bounds = array<i64: 2>, scalar_prefetch = 0 : i64, scratch_operands = 1 : i64, tpu.core_type = #tpu.core_type<tc>, window_params = [{transform_indices = @transform_0, window_bounds = array<i64: 1, 16, 16, 3>}, {pipeline_mode = #tpu.pipeline_mode<synchronous>, transform_indices = @transform_1, window_bounds = array<i64: 9, 3, 32>}, {transform_indices = @transform_2, window_bounds = array<i64: 1, 16, 16, 32>}]} {
    %cst = arith.constant 0.000000e+00 : bf16
    %0 = vector.broadcast %cst : bf16 to vector<18x18x3xbf16>
    %c0 = arith.constant 0 : index
    %c0_0 = arith.constant 0 : index
    %c0_1 = arith.constant 0 : index
    %1 = vector.load %arg4[%c0, %c0_0, %c0_1] : memref<18x18x3xbf16, #tpu.memory_space<vmem>>, vector<18x18x3xbf16>
    tpu.vector_store %arg4[%c0, %c0_0, %c0_1], %0 {strides = array<i32>} : memref<18x18x3xbf16, #tpu.memory_space<vmem>>, vector<18x18x3xbf16>,
    %c0_2 = arith.constant 0 : index
    %c0_3 = arith.constant 0 : index
    %c0_4 = arith.constant 0 : index
    %c0_5 = arith.constant 0 : index
    %2 = vector.load %arg1[%c0_2, %c0_3, %c0_4, %c0_5] : memref<1x16x16x3xbf16, #tpu.memory_space<vmem>>, vector<1x16x16x3xbf16>
    %3 = vector.shape_cast %2 : vector<1x16x16x3xbf16> to vector<16x16x3xbf16>
    %c1 = arith.constant 1 : index
    %c1_6 = arith.constant 1 : index
    %c0_7 = arith.constant 0 : index
    %4 = vector.load %arg4[%c1, %c1_6, %c0_7] : memref<18x18x3xbf16, #tpu.memory_space<vmem>>, vector<16x16x3xbf16>
    tpu.vector_store %arg4[%c1, %c1_6, %c0_7], %3 {strides = array<i32>} : memref<18x18x3xbf16, #tpu.memory_space<vmem>>, vector<16x16x3xbf16>,
    %cst_8 = arith.constant 0.000000e+00 : f32
    %5 = vector.broadcast %cst_8 : f32 to vector<256x32xf32>
    %c0_9 = arith.constant 0 : index
    %c0_10 = arith.constant 0 : index
    %c0_11 = arith.constant 0 : index
    %6 = vector.load %arg4[%c0_9, %c0_10, %c0_11] : memref<18x18x3xbf16, #tpu.memory_space<vmem>>, vector<16x16x3xbf16>
    %7 = vector.shape_cast %6 : vector<16x16x3xbf16> to vector<256x3xbf16>
    %c0_12 = arith.constant 0 : index
    %c0_13 = arith.constant 0 : index
    %c0_14 = arith.constant 0 : index
    %8 = vector.load %arg2[%c0_12, %c0_13, %c0_14] : memref<9x3x32xbf16, #tpu.memory_space<vmem>>, vector<1x3x32xbf16>
    %9 = vector.shape_cast %8 : vector<1x3x32xbf16> to vector<3x32xbf16>
    %cst_15 = arith.constant dense<0.000000e+00> : vector<256x32xf32>
    %10 = tpu.matmul %7, %9, %cst_15 {dimension_numbers = #tpu.dot_dimension_numbers<[1], [0], [0], [1], [0, 0, 1, 1], [], []>} : vector<256x3xbf16>, vector<3x32xbf16>, vector<256x32xf32> -> vector<256x32xf32>
    %11 = arith.addf %5, %10 : vector<256x32xf32>
    %c0_16 = arith.constant 0 : index
    %c1_17 = arith.constant 1 : index
    %c0_18 = arith.constant 0 : index
    %12 = vector.load %arg4[%c0_16, %c1_17, %c0_18] : memref<18x18x3xbf16, #tpu.memory_space<vmem>>, vector<16x16x3xbf16>
    %13 = vector.shape_cast %12 : vector<16x16x3xbf16> to vector<256x3xbf16>
    %c1_19 = arith.constant 1 : index
    %c0_20 = arith.constant 0 : index
    %c0_21 = arith.constant 0 : index
    %14 = vector.load %arg2[%c1_19, %c0_20, %c0_21] : memref<9x3x32xbf16, #tpu.memory_space<vmem>>, vector<1x3x32xbf16>
    %15 = vector.shape_cast %14 : vector<1x3x32xbf16> to vector<3x32xbf16>
    %cst_22 = arith.constant dense<0.000000e+00> : vector<256x32xf32>
    %16 = tpu.matmul %13, %15, %cst_22 {dimension_numbers = #tpu.dot_dimension_numbers<[1], [0], [0], [1], [0, 0, 1, 1], [], []>} : vector<256x3xbf16>, vector<3x32xbf16>, vector<256x32xf32> -> vector<256x32xf32>
    %17 = arith.addf %11, %16 : vector<256x32xf32>
    %c0_23 = arith.constant 0 : index
    %c2 = arith.constant 2 : index
    %c0_24 = arith.constant 0 : index
    %18 = vector.load %arg4[%c0_23, %c2, %c0_24] : memref<18x18x3xbf16, #tpu.memory_space<vmem>>, vector<16x16x3xbf16>
    %19 = vector.shape_cast %18 : vector<16x16x3xbf16> to vector<256x3xbf16>
    %c2_25 = arith.constant 2 : index
    %c0_26 = arith.constant 0 : index
    %c0_27 = arith.constant 0 : index
    %20 = vector.load %arg2[%c2_25, %c0_26, %c0_27] : memref<9x3x32xbf16, #tpu.memory_space<vmem>>, vector<1x3x32xbf16>
    %21 = vector.shape_cast %20 : vector<1x3x32xbf16> to vector<3x32xbf16>
    %cst_28 = arith.constant dense<0.000000e+00> : vector<256x32xf32>
    %22 = tpu.matmul %19, %21, %cst_28 {dimension_numbers = #tpu.dot_dimension_numbers<[1], [0], [0], [1], [0, 0, 1, 1], [], []>} : vector<256x3xbf16>, vector<3x32xbf16>, vector<256x32xf32> -> vector<256x32xf32>
    %23 = arith.addf %17, %22 : vector<256x32xf32>
    %c1_29 = arith.constant 1 : index
    %c0_30 = arith.constant 0 : index
    %c0_31 = arith.constant 0 : index
    %24 = vector.load %arg4[%c1_29, %c0_30, %c0_31] : memref<18x18x3xbf16, #tpu.memory_space<vmem>>, vector<16x16x3xbf16>
    %25 = vector.shape_cast %24 : vector<16x16x3xbf16> to vector<256x3xbf16>
    %c3 = arith.constant 3 : index
    %c0_32 = arith.constant 0 : index
    %c0_33 = arith.constant 0 : index
    %26 = vector.load %arg2[%c3, %c0_32, %c0_33] : memref<9x3x32xbf16, #tpu.memory_space<vmem>>, vector<1x3x32xbf16>
    %27 = vector.shape_cast %26 : vector<1x3x32xbf16> to vector<3x32xbf16>
    %cst_34 = arith.constant dense<0.000000e+00> : vector<256x32xf32>
    %28 = tpu.matmul %25, %27, %cst_34 {dimension_numbers = #tpu.dot_dimension_numbers<[1], [0], [0], [1], [0, 0, 1, 1], [], []>} : vector<256x3xbf16>, vector<3x32xbf16>, vector<256x32xf32> -> vector<256x32xf32>
    %29 = arith.addf %23, %28 : vector<256x32xf32>
    %c1_35 = arith.constant 1 : index
    %c1_36 = arith.constant 1 : index
    %c0_37 = arith.constant 0 : index
    %30 = vector.load %arg4[%c1_35, %c1_36, %c0_37] : memref<18x18x3xbf16, #tpu.memory_space<vmem>>, vector<16x16x3xbf16>
    %31 = vector.shape_cast %30 : vector<16x16x3xbf16> to vector<256x3xbf16>
    %c4 = arith.constant 4 : index
    %c0_38 = arith.constant 0 : index
    %c0_39 = arith.constant 0 : index
    %32 = vector.load %arg2[%c4, %c0_38, %c0_39] : memref<9x3x32xbf16, #tpu.memory_space<vmem>>, vector<1x3x32xbf16>
    %33 = vector.shape_cast %32 : vector<1x3x32xbf16> to vector<3x32xbf16>
    %cst_40 = arith.constant dense<0.000000e+00> : vector<256x32xf32>
    %34 = tpu.matmul %31, %33, %cst_40 {dimension_numbers = #tpu.dot_dimension_numbers<[1], [0], [0], [1], [0, 0, 1, 1], [], []>} : vector<256x3xbf16>, vector<3x32xbf16>, vector<256x32xf32> -> vector<256x32xf32>
    %35 = arith.addf %29, %34 : vector<256x32xf32>
    %c1_41 = arith.constant 1 : index
    %c2_42 = arith.constant 2 : index
    %c0_43 = arith.constant 0 : index
    %36 = vector.load %arg4[%c1_41, %c2_42, %c0_43] : memref<18x18x3xbf16, #tpu.memory_space<vmem>>, vector<16x16x3xbf16>
    %37 = vector.shape_cast %36 : vector<16x16x3xbf16> to vector<256x3xbf16>
    %c5 = arith.constant 5 : index
    %c0_44 = arith.constant 0 : index
    %c0_45 = arith.constant 0 : index
    %38 = vector.load %arg2[%c5, %c0_44, %c0_45] : memref<9x3x32xbf16, #tpu.memory_space<vmem>>, vector<1x3x32xbf16>
    %39 = vector.shape_cast %38 : vector<1x3x32xbf16> to vector<3x32xbf16>
    %cst_46 = arith.constant dense<0.000000e+00> : vector<256x32xf32>
    %40 = tpu.matmul %37, %39, %cst_46 {dimension_numbers = #tpu.dot_dimension_numbers<[1], [0], [0], [1], [0, 0, 1, 1], [], []>} : vector<256x3xbf16>, vector<3x32xbf16>, vector<256x32xf32> -> vector<256x32xf32>
    %41 = arith.addf %35, %40 : vector<256x32xf32>
    %c2_47 = arith.constant 2 : index
    %c0_48 = arith.constant 0 : index
    %c0_49 = arith.constant 0 : index
    %42 = vector.load %arg4[%c2_47, %c0_48, %c0_49] : memref<18x18x3xbf16, #tpu.memory_space<vmem>>, vector<16x16x3xbf16>
    %43 = vector.shape_cast %42 : vector<16x16x3xbf16> to vector<256x3xbf16>
    %c6 = arith.constant 6 : index
    %c0_50 = arith.constant 0 : index
    %c0_51 = arith.constant 0 : index
    %44 = vector.load %arg2[%c6, %c0_50, %c0_51] : memref<9x3x32xbf16, #tpu.memory_space<vmem>>, vector<1x3x32xbf16>
    %45 = vector.shape_cast %44 : vector<1x3x32xbf16> to vector<3x32xbf16>
    %cst_52 = arith.constant dense<0.000000e+00> : vector<256x32xf32>
    %46 = tpu.matmul %43, %45, %cst_52 {dimension_numbers = #tpu.dot_dimension_numbers<[1], [0], [0], [1], [0, 0, 1, 1], [], []>} : vector<256x3xbf16>, vector<3x32xbf16>, vector<256x32xf32> -> vector<256x32xf32>
    %47 = arith.addf %41, %46 : vector<256x32xf32>
    %c2_53 = arith.constant 2 : index
    %c1_54 = arith.constant 1 : index
    %c0_55 = arith.constant 0 : index
    %48 = vector.load %arg4[%c2_53, %c1_54, %c0_55] : memref<18x18x3xbf16, #tpu.memory_space<vmem>>, vector<16x16x3xbf16>
    %49 = vector.shape_cast %48 : vector<16x16x3xbf16> to vector<256x3xbf16>
    %c7 = arith.constant 7 : index
    %c0_56 = arith.constant 0 : index
    %c0_57 = arith.constant 0 : index
    %50 = vector.load %arg2[%c7, %c0_56, %c0_57] : memref<9x3x32xbf16, #tpu.memory_space<vmem>>, vector<1x3x32xbf16>
    %51 = vector.shape_cast %50 : vector<1x3x32xbf16> to vector<3x32xbf16>
    %cst_58 = arith.constant dense<0.000000e+00> : vector<256x32xf32>
    %52 = tpu.matmul %49, %51, %cst_58 {dimension_numbers = #tpu.dot_dimension_numbers<[1], [0], [0], [1], [0, 0, 1, 1], [], []>} : vector<256x3xbf16>, vector<3x32xbf16>, vector<256x32xf32> -> vector<256x32xf32>
    %53 = arith.addf %47, %52 : vector<256x32xf32>
    %c2_59 = arith.constant 2 : index
    %c2_60 = arith.constant 2 : index
    %c0_61 = arith.constant 0 : index
    %54 = vector.load %arg4[%c2_59, %c2_60, %c0_61] : memref<18x18x3xbf16, #tpu.memory_space<vmem>>, vector<16x16x3xbf16>
    %55 = vector.shape_cast %54 : vector<16x16x3xbf16> to vector<256x3xbf16>
    %c8 = arith.constant 8 : index
    %c0_62 = arith.constant 0 : index
    %c0_63 = arith.constant 0 : index
    %56 = vector.load %arg2[%c8, %c0_62, %c0_63] : memref<9x3x32xbf16, #tpu.memory_space<vmem>>, vector<1x3x32xbf16>
    %57 = vector.shape_cast %56 : vector<1x3x32xbf16> to vector<3x32xbf16>
    %cst_64 = arith.constant dense<0.000000e+00> : vector<256x32xf32>
    %58 = tpu.matmul %55, %57, %cst_64 {dimension_numbers = #tpu.dot_dimension_numbers<[1], [0], [0], [1], [0, 0, 1, 1], [], []>} : vector<256x3xbf16>, vector<3x32xbf16>, vector<256x32xf32> -> vector<256x32xf32>
    %59 = arith.addf %53, %58 : vector<256x32xf32>
    %60 = vector.shape_cast %59 : vector<256x32xf32> to vector<16x16x32xf32>
    %cst_65 = arith.constant 0.000000e+00 : f32
    %61 = vector.broadcast %cst_65 : f32 to vector<16x16x32xf32>
    %62 = arith.cmpf oge, %60, %61 : vector<16x16x32xf32>
    %cst_66 = arith.constant 2.000000e-01 : f32
    %63 = vector.broadcast %cst_66 : f32 to vector<16x16x32xf32>
    %64 = arith.mulf %63, %60 : vector<16x16x32xf32>
    %65 = arith.select %62, %60, %64 : vector<16x16x32xi1>, vector<16x16x32xf32>
    %66 = arith.truncf %65 : vector<16x16x32xf32> to vector<16x16x32xbf16>
    %c0_67 = arith.constant 0 : index
    %c0_68 = arith.constant 0 : index
    %c0_69 = arith.constant 0 : index
    %c0_70 = arith.constant 0 : index
    %67 = vector.load %arg3[%c0_67, %c0_68, %c0_69, %c0_70] : memref<1x16x16x32xbf16, #tpu.memory_space<vmem>>, vector<1x16x16x32xbf16>
    %68 = vector.shape_cast %67 : vector<1x16x16x32xbf16> to vector<16x16x32xbf16>
    %69 = vector.shape_cast %66 : vector<16x16x32xbf16> to vector<1x16x16x32xbf16>
    tpu.vector_store %arg3[%c0_67, %c0_68, %c0_69, %c0_70], %69 {strides = array<i32>} : memref<1x16x16x32xbf16, #tpu.memory_space<vmem>>, vector<1x16x16x32xbf16>,
    return
  }
  func.func @transform_0(%arg0: i32) -> (i32, i32, i32, i32) {
    %c0_i32 = arith.constant 0 : i32
    %c0_i32_0 = arith.constant 0 : i32
    %c0_i32_1 = arith.constant 0 : i32
    %c0_i32_2 = arith.constant 0 : i32
    return %arg0, %c0_i32, %c0_i32_0, %c0_i32_1 : i32, i32, i32, i32
  }
  func.func @transform_1(%arg0: i32) -> (i32, i32, i32) {
    %c0_i32 = arith.constant 0 : i32
    %c0_i32_0 = arith.constant 0 : i32
    %c0_i32_1 = arith.constant 0 : i32
    %c0_i32_2 = arith.constant 0 : i32
    return %c0_i32, %c0_i32_0, %c0_i32_1 : i32, i32, i32
  }
  func.func @transform_2(%arg0: i32) -> (i32, i32, i32, i32) {
    %c0_i32 = arith.constant 0 : i32
    %c0_i32_0 = arith.constant 0 : i32
    %c0_i32_1 = arith.constant 0 : i32
    %c0_i32_2 = arith.constant 0 : i32
    return %arg0, %c0_i32, %c0_i32_0, %c0_i32_1 : i32, i32, i32, i32
  }
}

</mosaic_0001>

<llo_original>
// kernel: tpu_custom_call.1
$region0: #{tpu_custom_call.1}
  #allocation0 [shape = 'u32[]', space=smem, size = 0x4, offset = 0x4, fixed_abs, tag = 'smem constant byte address 0x4 - core index']
  #allocation1 [shape = 'u32[144,128]{1,0:T(1,128)}', space=vmem, size = 0x12000, scoped, tag = 'internal scratch']
  #allocation2 [shape = 'bf16[18,18,3]{2,1,0:T(8,128)(2,1)}', space=vmem, size = 0x1b000, scoped, tag = 'scratch operand']
  %s0 = inlined_call_operand.vmem [shape: bf16[2,16,16,3], index: 0, kind: input, shape index: {}]
  %s1 = inlined_call_operand.vmem [shape: bf16[9,3,32], index: 1, kind: input, shape index: {}]
  %s2 = inlined_call_operand.hbm [shape: bf16[2,16,16,32], index: 2, kind: output, shape index: {}]
  %s3 = sld [smem:[#allocation0]]
  $region41: #{tpu_custom_call.1} parent=0
    _
  %s5 = ssub.s32 1, %s3
  %s6 = scalar_select 0, %s5, %s3
  $region1: #{tpu_custom_call.1} parent=0
    #allocation3 [shape = 'u8[131072]{0}', space=vmem, size = 0x20000, scoped, tag = 'output window, operand 0']
    #allocation4 [shape = 's32[2]{0}', space=sflag, size = 0x8, scoped, tag = 'scoped memory for tpu_custom_call.1']
    %7 = vsyncpa [#allocation4], 0
    %s8 = scalar_lea.sflag [#allocation4], 1
    %9 = vsyncpa %s8, 0
    loop: start=0, step=1, limit=4
    $region2: #{tpu_custom_call.1} parent=1 // loop_pre_header
      _
    $region3: #{tpu_custom_call.1} parent=1 // loop_header
      %s11 = sphi 0, %s15
      %p12 = scmp.ge.s32.totalorder %s11, 4
      %s21 = sphi 0, %s23
      %s24 = sphi 0, %s21
      %s25 = sphi 0, %s24
      %s41 = sphi 0, %s25
      %s45 = sphi 0, %s45
      %s47 = sphi 0, %s45
      %s48 = sphi 0, %s47
      %s62 = sphi 0, %s48
      %s68 = sphi 0, %s70
      %s71 = sphi 0, %s68
      %s72 = sphi 0, %s71
      %s88 = sphi 0, %s72
    $region4: #{tpu_custom_call.1} parent=1 // loop_header_branch
      %14 = sbr.rel (%p12) target = $region8
    $region5: #{tpu_custom_call.1} parent=1 // loop_body
      %s16 = ssub.s32 %s11, 1
      %s17 = ssub.s32 %s11, 2
      %s18 = sadd.s32 %s11, 1
      %s19 = ssub.s32 %s11, %s18
      %p20 = scmp.eq.s32.totalorder %s19, 0
      %s22 = sadd.s32 %s21, 1
      %s23 = scalar_select %p20, %s21, %s22
      %p26 = pneg %p20
      %p27 = scmp.eq.s32.totalorder %s11, 1
      %p28 = por %p26, %p27
      %p29 = scmp.ne.s32.totalorder %s21, %s24
      %p30 = scmp.eq.s32.totalorder %s11, 0
      %p31 = por %p29, %p30
      %p32 = scmp.ne.s32.totalorder %s21, %s24
      %p33 = scmp.eq.s32.totalorder %s16, 1
      %p34 = por %p32, %p33
      %p35 = scmp.ne.s32.totalorder %s24, %s25
      %p36 = scmp.eq.s32.totalorder %s16, 0
      %p37 = por %p35, %p36
      %p38 = scmp.ne.s32.totalorder %s24, %s25
      %p39 = scmp.eq.s32.totalorder %s17, 1
      %p40 = por %p38, %p39
      %p42 = scmp.ne.s32.totalorder %s25, %s41
      %p43 = scmp.eq.s32.totalorder %s17, 0
      %p44 = por %p42, %p43
      %s46 = sadd.s32 %s45, 1
      %p49 = scmp.eq.s32.totalorder %s11, 1
      %p50 = scmp.ne.s32.totalorder %s45, %s47
      %p51 = scmp.eq.s32.totalorder %s11, 0
      %p52 = por %p50, %p51
      %p53 = scmp.ne.s32.totalorder %s45, %s47
      %p54 = scmp.eq.s32.totalorder %s16, 1
      %p55 = por %p53, %p54
      %p56 = scmp.ne.s32.totalorder %s47, %s48
      %p57 = scmp.eq.s32.totalorder %s16, 0
      %p58 = por %p56, %p57
      %p59 = scmp.ne.s32.totalorder %s47, %s48
      %p60 = scmp.eq.s32.totalorder %s17, 1
      %p61 = por %p59, %p60
      %p63 = scmp.ne.s32.totalorder %s48, %s62
      %p64 = scmp.eq.s32.totalorder %s17, 0
      %p65 = por %p63, %p64
      %s66 = ssub.s32 %s11, %s18
      %p67 = scmp.eq.s32.totalorder %s66, 0
      %s69 = sadd.s32 %s68, 1
      %s70 = scalar_select %p67, %s68, %s69
      %p73 = pneg %p67
      %p74 = scmp.eq.s32.totalorder %s11, 1
      %p75 = por %p73, %p74
      %p76 = scmp.ne.s32.totalorder %s68, %s71
      %p77 = scmp.eq.s32.totalorder %s11, 0
      %p78 = por %p76, %p77
      %p79 = scmp.ne.s32.totalorder %s68, %s71
      %p80 = scmp.eq.s32.totalorder %s16, 1
      %p81 = por %p79, %p80
      %p82 = scmp.ne.s32.totalorder %s71, %s72
      %p83 = scmp.eq.s32.totalorder %s16, 0
      %p84 = por %p82, %p83
      %p85 = scmp.ne.s32.totalorder %s71, %s72
      %p86 = scmp.eq.s32.totalorder %s17, 1
      %p87 = por %p85, %p86
      %p89 = scmp.ne.s32.totalorder %s72, %s88
      %p90 = scmp.eq.s32.totalorder %s17, 0
      %p91 = por %p89, %p90
      %p92 = scmp.le.s32.totalorder 1, %s11
      %p93 = scmp.lt.s32.totalorder %s11, 3
      %p94 = pnand %p92, %p93
      %p95 = pneg %p94
      // Predicated region
      $region9: #{tpu_custom_call.1} parent=5 // pred_check
        _
      $region10: #{tpu_custom_call.1} parent=5 // pred_check_branch
        %97 = sbr.rel (%p94) target = $region12
      $region11: #{tpu_custom_call.1} parent=5 // pred_region
        %s98 = ssub.s32 %s11, 1
        // Predicated region
        $region13: #{tpu_custom_call.1} parent=11 // pred_check
          %p99 = pneg %p58
        $region14: #{tpu_custom_call.1} parent=11 // pred_check_branch
          %101 = sbr.rel (%p99) target = $region16
        $region15: #{tpu_custom_call.1} parent=11 // pred_region
          _
        $region16: #{tpu_custom_call.1} parent=11 // pred_fallthru
          _
      $region12: #{tpu_custom_call.1} parent=5 // pred_fallthru
        _
      %p102 = scmp.lt.s32.totalorder %s11, 2
      // Predicated region
      $region17: #{tpu_custom_call.1} parent=5 // pred_check
        %p103 = pneg %p102
      $region18: #{tpu_custom_call.1} parent=5 // pred_check_branch
        %105 = sbr.rel (%p103) target = $region20
      $region19: #{tpu_custom_call.1} parent=5 // pred_region
        // Predicated region
        $region21: #{tpu_custom_call.1} parent=19 // pred_check
          %p106 = pneg %p31
        $region22: #{tpu_custom_call.1} parent=19 // pred_check_branch
          %108 = sbr.rel (%p106) target = $region24
        $region23: #{tpu_custom_call.1} parent=19 // pred_region
          %p109 = scmp.lt.s32.totalorder %s11, 1
          %s110 = scalar_select %p109, %s11, 1
          %s111 = smul.addr %s110, 32
          %s112 = smul.addr %s111, 4
          %s113 = scalar_lea.vmem %s0, %s112
        $region24: #{tpu_custom_call.1} parent=19 // pred_fallthru
          _
      $region20: #{tpu_custom_call.1} parent=5 // pred_fallthru
        _
      %p114 = scmp.le.s32.totalorder 1, %s11
      %p115 = scmp.lt.s32.totalorder %s11, 3
      %p116 = pnand %p114, %p115
      %p117 = pneg %p116
      // Predicated region
      $region25: #{tpu_custom_call.1} parent=5 // pred_check
        _
      $region26: #{tpu_custom_call.1} parent=5 // pred_check_branch
        %119 = sbr.rel (%p116) target = $region28
      $region27: #{tpu_custom_call.1} parent=5 // pred_region
        %s120 = ssub.s32 %s11, 1
        %p121 = scmp.lt.s32.totalorder %s16, 1
        %s122 = scalar_select %p121, %s16, 1
        %s123 = smul.addr %s122, 32
        %s124 = smul.addr %s123, 4
        %s125 = scalar_lea.vmem %s0, %s124
        %p126 = pneg %p37
        %p127 = pneg %p34
        %p128 = pneg %p58
        %p129 = pneg %p55
        %p130 = pneg %p84
        %p131 = pneg %p81
        %s132 = sand.u32 %s71, 1
        %s133 = scalar_lea.sflag [#allocation4], %s132
        %s134 = sand.u32 %s71, 1
        %s135 = smul.addr %s134, 128
        %s136 = scalar_lea.vmem [#allocation3], %s135
        %p137 = scmp.lt.s32.totalorder %s16, 1
        %s138 = scalar_select %p137, %s16, 1
        %s139 = smul.addr %s138, 32
        %s140 = smul.addr %s139, 4
        %s141 = scalar_lea.vmem %s0, %s140
        %vm143 = vcmask 19456
        %144 = vst.msk [vmem:[#allocation2] sm:$0xf] %vm143, 0
        %145 = vst.msk [vmem:[#allocation2 + $0x4] sm:$0xf] %vm143, 0
        %vm146 = vcmask 16384
        %147 = vst.msk [vmem:[#allocation2 + $0x8] sm:$0x1] %vm146, 0
        %148 = vst.msk [vmem:[#allocation2 + $0xc] sm:$0xf] %vm143, 0
        %149 = vst.msk [vmem:[#allocation2 + $0x10] sm:$0xf] %vm143, 0
        %150 = vst.msk [vmem:[#allocation2 + $0x14] sm:$0x1] %vm146, 0
        %151 = vst.msk [vmem:[#allocation2 + $0x18] sm:$0xf] %vm143, 0
        %152 = vst.msk [vmem:[#allocation2 + $0x1c] sm:$0xf] %vm143, 0
        %153 = vst.msk [vmem:[#allocation2 + $0x20] sm:$0x1] %vm146, 0
        %154 = vst.msk [vmem:[#allocation2 + $0x24] sm:$0xf] %vm143, 0
        %155 = vst.msk [vmem:[#allocation2 + $0x28] sm:$0xf] %vm143, 0
        %156 = vst.msk [vmem:[#allocation2 + $0x2c] sm:$0x1] %vm146, 0
        %157 = vst.msk [vmem:[#allocation2 + $0x30] sm:$0xf] %vm143, 0
        %158 = vst.msk [vmem:[#allocation2 + $0x34] sm:$0xf] %vm143, 0
        %159 = vst.msk [vmem:[#allocation2 + $0x38] sm:$0x1] %vm146, 0
        %160 = vst.msk [vmem:[#allocation2 + $0x3c] sm:$0xf] %vm143, 0
        %161 = vst.msk [vmem:[#allocation2 + $0x40] sm:$0xf] %vm143, 0
        %162 = vst.msk [vmem:[#allocation2 + $0x44] sm:$0x1] %vm146, 0
        %163 = vst.msk [vmem:[#allocation2 + $0x48] sm:$0xf] %vm143, 0
        %164 = vst.msk [vmem:[#allocation2 + $0x4c] sm:$0xf] %vm143, 0
        %165 = vst.msk [vmem:[#allocation2 + $0x50] sm:$0x1] %vm146, 0
        %166 = vst.msk [vmem:[#allocation2 + $0x54] sm:$0xf] %vm143, 0
        %167 = vst.msk [vmem:[#allocation2 + $0x58] sm:$0xf] %vm143, 0
        %168 = vst.msk [vmem:[#allocation2 + $0x5c] sm:$0x1] %vm146, 0
        %169 = vst.msk [vmem:[#allocation2 + $0x60] sm:$0xf] %vm143, 0
        %170 = vst.msk [vmem:[#allocation2 + $0x64] sm:$0xf] %vm143, 0
        %171 = vst.msk [vmem:[#allocation2 + $0x68] sm:$0x1] %vm146, 0
        %172 = vst.msk [vmem:[#allocation2 + $0x6c] sm:$0xf] %vm143, 0
        %173 = vst.msk [vmem:[#allocation2 + $0x70] sm:$0xf] %vm143, 0
        %174 = vst.msk [vmem:[#allocation2 + $0x74] sm:$0x1] %vm146, 0
        %175 = vst.msk [vmem:[#allocation2 + $0x78] sm:$0xf] %vm143, 0
        %176 = vst.msk [vmem:[#allocation2 + $0x7c] sm:$0xf] %vm143, 0
        %177 = vst.msk [vmem:[#allocation2 + $0x80] sm:$0x1] %vm146, 0
        %178 = vst.msk [vmem:[#allocation2 + $0x84] sm:$0xf] %vm143, 0
        %179 = vst.msk [vmem:[#allocation2 + $0x88] sm:$0xf] %vm143, 0
        %180 = vst.msk [vmem:[#allocation2 + $0x8c] sm:$0x1] %vm146, 0
        %181 = vst.msk [vmem:[#allocation2 + $0x90] sm:$0xf] %vm143, 0
        %182 = vst.msk [vmem:[#allocation2 + $0x94] sm:$0xf] %vm143, 0
        %183 = vst.msk [vmem:[#allocation2 + $0x98] sm:$0x1] %vm146, 0
        %184 = vst.msk [vmem:[#allocation2 + $0x9c] sm:$0xf] %vm143, 0
        %185 = vst.msk [vmem:[#allocation2 + $0xa0] sm:$0xf] %vm143, 0
        %186 = vst.msk [vmem:[#allocation2 + $0xa4] sm:$0x1] %vm146, 0
        %187 = vst.msk [vmem:[#allocation2 + $0xa8] sm:$0xf] %vm143, 0
        %188 = vst.msk [vmem:[#allocation2 + $0xac] sm:$0xf] %vm143, 0
        %189 = vst.msk [vmem:[#allocation2 + $0xb0] sm:$0x1] %vm146, 0
        %190 = vst.msk [vmem:[#allocation2 + $0xb4] sm:$0xf] %vm143, 0
        %191 = vst.msk [vmem:[#allocation2 + $0xb8] sm:$0xf] %vm143, 0
        %192 = vst.msk [vmem:[#allocation2 + $0xbc] sm:$0x1] %vm146, 0
        %193 = vst.msk [vmem:[#allocation2 + $0xc0] sm:$0xf] %vm143, 0
        %194 = vst.msk [vmem:[#allocation2 + $0xc4] sm:$0xf] %vm143, 0
        %195 = vst.msk [vmem:[#allocation2 + $0xc8] sm:$0x1] %vm146, 0
        %196 = vst.msk [vmem:[#allocation2 + $0xcc] sm:$0xf] %vm143, 0
        %197 = vst.msk [vmem:[#allocation2 + $0xd0] sm:$0xf] %vm143, 0
        %198 = vst.msk [vmem:[#allocation2 + $0xd4] sm:$0x1] %vm146, 0
        %v199 = vld [vmem:[%s141] sm:$0xf]
        %v200 = vld [vmem:[%s141 + $0x4] sm:$0xf]
        %v201 = vld [vmem:[%s141 + $0x8] sm:$0xf]
        %v202 = vld [vmem:[%s141 + $0xc] sm:$0xf]
        %v203 = vld [vmem:[%s141 + $0x10] sm:$0xf]
        %v204 = vld [vmem:[%s141 + $0x14] sm:$0xf]
        %v205 = vld [vmem:[%s141 + $0x18] sm:$0xf]
        %v206 = vld [vmem:[%s141 + $0x1c] sm:$0xf]
        %v207 = vld [vmem:[%s141 + $0x20] sm:$0xf]
        %v208 = vld [vmem:[%s141 + $0x24] sm:$0xf]
        %v209 = vld [vmem:[%s141 + $0x28] sm:$0xf]
        %v210 = vld [vmem:[%s141 + $0x2c] sm:$0xf]
        %v211 = vld [vmem:[%s141 + $0x30] sm:$0xf]
        %v212 = vld [vmem:[%s141 + $0x34] sm:$0xf]
        %v213 = vld [vmem:[%s141 + $0x38] sm:$0xf]
        %v214 = vld [vmem:[%s141 + $0x3c] sm:$0xf]
        %v215 = vld [vmem:[%s141 + $0x40] sm:$0xf]
        %v216 = vld [vmem:[%s141 + $0x44] sm:$0xf]
        %v217 = vld [vmem:[%s141 + $0x48] sm:$0xf]
        %v218 = vld [vmem:[%s141 + $0x4c] sm:$0xf]
        %v219 = vld [vmem:[%s141 + $0x50] sm:$0xf]
        %v220 = vld [vmem:[%s141 + $0x54] sm:$0xf]
        %v221 = vld [vmem:[%s141 + $0x58] sm:$0xf]
        %v222 = vld [vmem:[%s141 + $0x5c] sm:$0xf]
        %v223 = vld [vmem:[%s141 + $0x60] sm:$0xf]
        %v224 = vld [vmem:[%s141 + $0x64] sm:$0xf]
        %v225 = vld [vmem:[%s141 + $0x68] sm:$0xf]
        %v226 = vld [vmem:[%s141 + $0x6c] sm:$0xf]
        %v227 = vld [vmem:[%s141 + $0x70] sm:$0xf]
        %v228 = vld [vmem:[%s141 + $0x74] sm:$0xf]
        %v229 = vld [vmem:[%s141 + $0x78] sm:$0xf]
        %v230 = vld [vmem:[%s141 + $0x7c] sm:$0xf]
        %vm231 = vsmask.f32 256
        %vm232 = vsmask.f32 4368
        %vm233 = vmor %vm231, %vm232
        %v235 = vshrl.u32 %v199, 16
        %v237 = vrot.slane %v235, 7
        %v238 = vshll.u32 %v199, 16
        %v240 = vor.u32 %v237, %v238
        %v241 = vrot.slane %v237, 4
        %v243 = vshrl.u32 %v200, 16
        %v245 = vrot.slane %v243, 7
        %v246 = vshll.u32 %v200, 16
        %v248 = vor.u32 %v245, %v246
        %v249 = vsel %vm233, %v241, %v248
        %v250 = vrot.slane %v245, 4
        %v252 = vshrl.u32 %v201, 16
        %v254 = vrot.slane %v252, 7
        %v255 = vshll.u32 %v201, 16
        %v257 = vor.u32 %v254, %v255
        %v258 = vrot.slane %v254, 4
        %v260 = vshrl.u32 %v202, 16
        %v262 = vrot.slane %v260, 7
        %v263 = vshll.u32 %v202, 16
        %v265 = vor.u32 %v262, %v263
        %v266 = vsel %vm233, %v258, %v265
        %v267 = vrot.slane %v262, 4
        %v269 = vshrl.u32 %v203, 16
        %v271 = vrot.slane %v269, 7
        %v272 = vshll.u32 %v203, 16
        %v274 = vor.u32 %v271, %v272
        %v275 = vrot.slane %v271, 4
        %v277 = vshrl.u32 %v204, 16
        %v279 = vrot.slane %v277, 7
        %v280 = vshll.u32 %v204, 16
        %v282 = vor.u32 %v279, %v280
        %v283 = vsel %vm233, %v275, %v282
        %v284 = vrot.slane %v279, 4
        %v286 = vshrl.u32 %v205, 16
        %v288 = vrot.slane %v286, 7
        %v289 = vshll.u32 %v205, 16
        %v291 = vor.u32 %v288, %v289
        %v292 = vrot.slane %v288, 4
        %v294 = vshrl.u32 %v206, 16
        %v296 = vrot.slane %v294, 7
        %v297 = vshll.u32 %v206, 16
        %v299 = vor.u32 %v296, %v297
        %v300 = vsel %vm233, %v292, %v299
        %v301 = vrot.slane %v296, 4
        %v303 = vshrl.u32 %v207, 16
        %v305 = vrot.slane %v303, 7
        %v306 = vshll.u32 %v207, 16
        %v308 = vor.u32 %v305, %v306
        %v309 = vrot.slane %v305, 4
        %v311 = vshrl.u32 %v208, 16
        %v313 = vrot.slane %v311, 7
        %v314 = vshll.u32 %v208, 16
        %v316 = vor.u32 %v313, %v314
        %v317 = vsel %vm233, %v309, %v316
        %v318 = vrot.slane %v313, 4
        %v320 = vshrl.u32 %v209, 16
        %v322 = vrot.slane %v320, 7
        %v323 = vshll.u32 %v209, 16
        %v325 = vor.u32 %v322, %v323
        %v326 = vrot.slane %v322, 4
        %v328 = vshrl.u32 %v210, 16
        %v330 = vrot.slane %v328, 7
        %v331 = vshll.u32 %v210, 16
        %v333 = vor.u32 %v330, %v331
        %v334 = vsel %vm233, %v326, %v333
        %v335 = vrot.slane %v330, 4
        %v337 = vshrl.u32 %v211, 16
        %v339 = vrot.slane %v337, 7
        %v340 = vshll.u32 %v211, 16
        %v342 = vor.u32 %v339, %v340
        %v343 = vrot.slane %v339, 4
        %v345 = vshrl.u32 %v212, 16
        %v347 = vrot.slane %v345, 7
        %v348 = vshll.u32 %v212, 16
        %v350 = vor.u32 %v347, %v348
        %v351 = vsel %vm233, %v343, %v350
        %v352 = vrot.slane %v347, 4
        %v354 = vshrl.u32 %v213, 16
        %v356 = vrot.slane %v354, 7
        %v357 = vshll.u32 %v213, 16
        %v359 = vor.u32 %v356, %v357
        %v360 = vrot.slane %v356, 4
        %v362 = vshrl.u32 %v214, 16
        %v364 = vrot.slane %v362, 7
        %v365 = vshll.u32 %v214, 16
        %v367 = vor.u32 %v364, %v365
        %v368 = vsel %vm233, %v360, %v367
        %v369 = vrot.slane %v364, 4
        %v371 = vshrl.u32 %v215, 16
        %v373 = vrot.slane %v371, 7
        %v374 = vshll.u32 %v215, 16
        %v376 = vor.u32 %v373, %v374
        %v377 = vrot.slane %v373, 4
        %v379 = vshrl.u32 %v216, 16
        %v381 = vrot.slane %v379, 7
        %v382 = vshll.u32 %v216, 16
        %v384 = vor.u32 %v381, %v382
        %v385 = vsel %vm233, %v377, %v384
        %v386 = vrot.slane %v381, 4
        %v388 = vshrl.u32 %v217, 16
        %v390 = vrot.slane %v388, 7
        %v391 = vshll.u32 %v217, 16
        %v393 = vor.u32 %v390, %v391
        %v394 = vrot.slane %v390, 4
        %v396 = vshrl.u32 %v218, 16
        %v398 = vrot.slane %v396, 7
        %v399 = vshll.u32 %v218, 16
        %v401 = vor.u32 %v398, %v399
        %v402 = vsel %vm233, %v394, %v401
        %v403 = vrot.slane %v398, 4
        %v405 = vshrl.u32 %v219, 16
        %v407 = vrot.slane %v405, 7
        %v408 = vshll.u32 %v219, 16
        %v410 = vor.u32 %v407, %v408
        %v411 = vrot.slane %v407, 4
        %v413 = vshrl.u32 %v220, 16
        %v415 = vrot.slane %v413, 7
        %v416 = vshll.u32 %v220, 16
        %v418 = vor.u32 %v415, %v416
        %v419 = vsel %vm233, %v411, %v418
        %v420 = vrot.slane %v415, 4
        %v422 = vshrl.u32 %v221, 16
        %v424 = vrot.slane %v422, 7
        %v425 = vshll.u32 %v221, 16
        %v427 = vor.u32 %v424, %v425
        %v428 = vrot.slane %v424, 4
        %v430 = vshrl.u32 %v222, 16
        %v432 = vrot.slane %v430, 7
        %v433 = vshll.u32 %v222, 16
        %v435 = vor.u32 %v432, %v433
        %v436 = vsel %vm233, %v428, %v435
        %v437 = vrot.slane %v432, 4
        %v439 = vshrl.u32 %v223, 16
        %v441 = vrot.slane %v439, 7
        %v442 = vshll.u32 %v223, 16
        %v444 = vor.u32 %v441, %v442
        %v445 = vrot.slane %v441, 4
        %v447 = vshrl.u32 %v224, 16
        %v449 = vrot.slane %v447, 7
        %v450 = vshll.u32 %v224, 16
        %v452 = vor.u32 %v449, %v450
        %v453 = vsel %vm233, %v445, %v452
        %v454 = vrot.slane %v449, 4
        %v456 = vshrl.u32 %v225, 16
        %v458 = vrot.slane %v456, 7
        %v459 = vshll.u32 %v225, 16
        %v461 = vor.u32 %v458, %v459
        %v462 = vrot.slane %v458, 4
        %v464 = vshrl.u32 %v226, 16
        %v466 = vrot.slane %v464, 7
        %v467 = vshll.u32 %v226, 16
        %v469 = vor.u32 %v466, %v467
        %v470 = vsel %vm233, %v462, %v469
        %v471 = vrot.slane %v466, 4
        %v473 = vshrl.u32 %v227, 16
        %v475 = vrot.slane %v473, 7
        %v476 = vshll.u32 %v227, 16
        %v478 = vor.u32 %v475, %v476
        %v479 = vrot.slane %v475, 4
        %v481 = vshrl.u32 %v228, 16
        %v483 = vrot.slane %v481, 7
        %v484 = vshll.u32 %v228, 16
        %v486 = vor.u32 %v483, %v484
        %v487 = vsel %vm233, %v479, %v486
        %v488 = vrot.slane %v483, 4
        %v490 = vshrl.u32 %v229, 16
        %v492 = vrot.slane %v490, 7
        %v493 = vshll.u32 %v229, 16
        %v495 = vor.u32 %v492, %v493
        %v496 = vrot.slane %v492, 4
        %v498 = vshrl.u32 %v230, 16
        %v500 = vrot.slane %v498, 7
        %v501 = vshll.u32 %v230, 16
        %v503 = vor.u32 %v500, %v501
        %v504 = vsel %vm233, %v496, %v503
        %v505 = vrot.slane %v500, 4
        %s554 = scalar_lea.vmem [#allocation2], 12
        %vm555 = vcmask 19456
        %vm556 = vsmask.f32 7938
        %vm557 = vmand %vm555, %vm556
        %v558 = vld [vmem:[%s554] sm:$0xf]
        %v559 = vsel %vm557, %v240, %v558
        %560 = vst [vmem:[%s554] sm:$0xf] %v559
        %561 = vst.msk [vmem:[%s554 + $0x4] sm:$0xf] %vm143, %v249
        %vm562 = vcmask 16384
        %vm563 = vmand %vm562, %vm231
        %v564 = vld [vmem:[%s554 + $0x8] sm:$0x1]
        %v565 = vsel %vm563, %v250, %v564
        %566 = vst [vmem:[%s554 + $0x8] sm:$0x1] %v565
        %v567 = vld [vmem:[%s554 + $0xc] sm:$0xf]
        %v568 = vsel %vm557, %v257, %v567
        %569 = vst [vmem:[%s554 + $0xc] sm:$0xf] %v568
        %570 = vst.msk [vmem:[%s554 + $0x10] sm:$0xf] %vm143, %v266
        %v571 = vld [vmem:[%s554 + $0x14] sm:$0x1]
        %v572 = vsel %vm563, %v267, %v571
        %573 = vst [vmem:[%s554 + $0x14] sm:$0x1] %v572
        %v574 = vld [vmem:[%s554 + $0x18] sm:$0xf]
        %v575 = vsel %vm557, %v274, %v574
        %576 = vst [vmem:[%s554 + $0x18] sm:$0xf] %v575
        %577 = vst.msk [vmem:[%s554 + $0x1c] sm:$0xf] %vm143, %v283
        %v578 = vld [vmem:[%s554 + $0x20] sm:$0x1]
        %v579 = vsel %vm563, %v284, %v578
        %580 = vst [vmem:[%s554 + $0x20] sm:$0x1] %v579
        %v581 = vld [vmem:[%s554 + $0x24] sm:$0xf]
        %v582 = vsel %vm557, %v291, %v581
        %583 = vst [vmem:[%s554 + $0x24] sm:$0xf] %v582
        %584 = vst.msk [vmem:[%s554 + $0x28] sm:$0xf] %vm143, %v300
        %v585 = vld [vmem:[%s554 + $0x2c] sm:$0x1]
        %v586 = vsel %vm563, %v301, %v585
        %587 = vst [vmem:[%s554 + $0x2c] sm:$0x1] %v586
        %v588 = vld [vmem:[%s554 + $0x30] sm:$0xf]
        %v589 = vsel %vm557, %v308, %v588
        %590 = vst [vmem:[%s554 + $0x30] sm:$0xf] %v589
        %591 = vst.msk [vmem:[%s554 + $0x34] sm:$0xf] %vm143, %v317
        %v592 = vld [vmem:[%s554 + $0x38] sm:$0x1]
        %v593 = vsel %vm563, %v318, %v592
        %594 = vst [vmem:[%s554 + $0x38] sm:$0x1] %v593
        %v595 = vld [vmem:[%s554 + $0x3c] sm:$0xf]
        %v596 = vsel %vm557, %v325, %v595
        %597 = vst [vmem:[%s554 + $0x3c] sm:$0xf] %v596
        %598 = vst.msk [vmem:[%s554 + $0x40] sm:$0xf] %vm143, %v334
        %v599 = vld [vmem:[%s554 + $0x44] sm:$0x1]
        %v600 = vsel %vm563, %v335, %v599
        %601 = vst [vmem:[%s554 + $0x44] sm:$0x1] %v600
        %v602 = vld [vmem:[%s554 + $0x48] sm:$0xf]
        %v603 = vsel %vm557, %v342, %v602
        %604 = vst [vmem:[%s554 + $0x48] sm:$0xf] %v603
        %605 = vst.msk [vmem:[%s554 + $0x4c] sm:$0xf] %vm143, %v351
        %v606 = vld [vmem:[%s554 + $0x50] sm:$0x1]
        %v607 = vsel %vm563, %v352, %v606
        %608 = vst [vmem:[%s554 + $0x50] sm:$0x1] %v607
        %v609 = vld [vmem:[%s554 + $0x54] sm:$0xf]
        %v610 = vsel %vm557, %v359, %v609
        %611 = vst [vmem:[%s554 + $0x54] sm:$0xf] %v610
        %612 = vst.msk [vmem:[%s554 + $0x58] sm:$0xf] %vm143, %v368
        %v613 = vld [vmem:[%s554 + $0x5c] sm:$0x1]
        %v614 = vsel %vm563, %v369, %v613
        %615 = vst [vmem:[%s554 + $0x5c] sm:$0x1] %v614
        %v616 = vld [vmem:[%s554 + $0x60] sm:$0xf]
        %v617 = vsel %vm557, %v376, %v616
        %618 = vst [vmem:[%s554 + $0x60] sm:$0xf] %v617
        %619 = vst.msk [vmem:[%s554 + $0x64] sm:$0xf] %vm143, %v385
        %v620 = vld [vmem:[%s554 + $0x68] sm:$0x1]
        %v621 = vsel %vm563, %v386, %v620
        %622 = vst [vmem:[%s554 + $0x68] sm:$0x1] %v621
        %v623 = vld [vmem:[%s554 + $0x6c] sm:$0xf]
        %v624 = vsel %vm557, %v393, %v623
        %625 = vst [vmem:[%s554 + $0x6c] sm:$0xf] %v624
        %626 = vst.msk [vmem:[%s554 + $0x70] sm:$0xf] %vm143, %v402
        %v627 = vld [vmem:[%s554 + $0x74] sm:$0x1]
        %v628 = vsel %vm563, %v403, %v627
        %629 = vst [vmem:[%s554 + $0x74] sm:$0x1] %v628
        %v630 = vld [vmem:[%s554 + $0x78] sm:$0xf]
        %v631 = vsel %vm557, %v410, %v630
        %632 = vst [vmem:[%s554 + $0x78] sm:$0xf] %v631
        %633 = vst.msk [vmem:[%s554 + $0x7c] sm:$0xf] %vm143, %v419
        %v634 = vld [vmem:[%s554 + $0x80] sm:$0x1]
        %v635 = vsel %vm563, %v420, %v634
        %636 = vst [vmem:[%s554 + $0x80] sm:$0x1] %v635
        %v637 = vld [vmem:[%s554 + $0x84] sm:$0xf]
        %v638 = vsel %vm557, %v427, %v637
        %639 = vst [vmem:[%s554 + $0x84] sm:$0xf] %v638
        %640 = vst.msk [vmem:[%s554 + $0x88] sm:$0xf] %vm143, %v436
        %v641 = vld [vmem:[%s554 + $0x8c] sm:$0x1]
        %v642 = vsel %vm563, %v437, %v641
        %643 = vst [vmem:[%s554 + $0x8c] sm:$0x1] %v642
        %v644 = vld [vmem:[%s554 + $0x90] sm:$0xf]
        %v645 = vsel %vm557, %v444, %v644
        %646 = vst [vmem:[%s554 + $0x90] sm:$0xf] %v645
        %647 = vst.msk [vmem:[%s554 + $0x94] sm:$0xf] %vm143, %v453
        %v648 = vld [vmem:[%s554 + $0x98] sm:$0x1]
        %v649 = vsel %vm563, %v454, %v648
        %650 = vst [vmem:[%s554 + $0x98] sm:$0x1] %v649
        %v651 = vld [vmem:[%s554 + $0x9c] sm:$0xf]
        %v652 = vsel %vm557, %v461, %v651
        %653 = vst [vmem:[%s554 + $0x9c] sm:$0xf] %v652
        %654 = vst.msk [vmem:[%s554 + $0xa0] sm:$0xf] %vm143, %v470
        %v655 = vld [vmem:[%s554 + $0xa4] sm:$0x1]
        %v656 = vsel %vm563, %v471, %v655
        %657 = vst [vmem:[%s554 + $0xa4] sm:$0x1] %v656
        %v658 = vld [vmem:[%s554 + $0xa8] sm:$0xf]
        %v659 = vsel %vm557, %v478, %v658
        %660 = vst [vmem:[%s554 + $0xa8] sm:$0xf] %v659
        %661 = vst.msk [vmem:[%s554 + $0xac] sm:$0xf] %vm143, %v487
        %v662 = vld [vmem:[%s554 + $0xb0] sm:$0x1]
        %v663 = vsel %vm563, %v488, %v662
        %664 = vst [vmem:[%s554 + $0xb0] sm:$0x1] %v663
        %v665 = vld [vmem:[%s554 + $0xb4] sm:$0xf]
        %v666 = vsel %vm557, %v495, %v665
        %667 = vst [vmem:[%s554 + $0xb4] sm:$0xf] %v666
        %668 = vst.msk [vmem:[%s554 + $0xb8] sm:$0xf] %vm143, %v504
        %v669 = vld [vmem:[%s554 + $0xbc] sm:$0x1]
        %v670 = vsel %vm563, %v505, %v669
        %671 = vst [vmem:[%s554 + $0xbc] sm:$0x1] %v670
        %v672 = vld [vmem:[#allocation2] sm:$0xf]
        %v673 = vld [vmem:[#allocation2 + $0x4] sm:$0xf]
        %v674 = vld [vmem:[#allocation2 + $0xc] sm:$0xf]
        %v675 = vld [vmem:[#allocation2 + $0x10] sm:$0xf]
        %v676 = vld [vmem:[#allocation2 + $0x18] sm:$0xf]
        %v677 = vld [vmem:[#allocation2 + $0x1c] sm:$0xf]
        %v678 = vld [vmem:[#allocation2 + $0x24] sm:$0xf]
        %v679 = vld [vmem:[#allocation2 + $0x28] sm:$0xf]
        %v680 = vld [vmem:[#allocation2 + $0x30] sm:$0xf]
        %v681 = vld [vmem:[#allocation2 + $0x34] sm:$0xf]
        %v682 = vld [vmem:[#allocation2 + $0x3c] sm:$0xf]
        %v683 = vld [vmem:[#allocation2 + $0x40] sm:$0xf]
        %v684 = vld [vmem:[#allocation2 + $0x48] sm:$0xf]
        %v685 = vld [vmem:[#allocation2 + $0x4c] sm:$0xf]
        %v686 = vld [vmem:[#allocation2 + $0x54] sm:$0xf]
        %v687 = vld [vmem:[#allocation2 + $0x58] sm:$0xf]
        %v688 = vld [vmem:[#allocation2 + $0x60] sm:$0xf]
        %v689 = vld [vmem:[#allocation2 + $0x64] sm:$0xf]
        %v690 = vld [vmem:[#allocation2 + $0x6c] sm:$0xf]
        %v691 = vld [vmem:[#allocation2 + $0x70] sm:$0xf]
        %v692 = vld [vmem:[#allocation2 + $0x78] sm:$0xf]
        %v693 = vld [vmem:[#allocation2 + $0x7c] sm:$0xf]
        %v694 = vld [vmem:[#allocation2 + $0x84] sm:$0xf]
        %v695 = vld [vmem:[#allocation2 + $0x88] sm:$0xf]
        %v696 = vld [vmem:[#allocation2 + $0x90] sm:$0xf]
        %v697 = vld [vmem:[#allocation2 + $0x94] sm:$0xf]
        %v698 = vld [vmem:[#allocation2 + $0x9c] sm:$0xf]
        %v699 = vld [vmem:[#allocation2 + $0xa0] sm:$0xf]
        %v700 = vld [vmem:[#allocation2 + $0xa8] sm:$0xf]
        %v701 = vld [vmem:[#allocation2 + $0xac] sm:$0xf]
        %v702 = vld [vmem:[#allocation2 + $0xb4] sm:$0xf]
        %v703 = vld [vmem:[#allocation2 + $0xb8] sm:$0xf]
        %v704 = vld [vmem:[%s1] sm:$0x3]
        %v705 = vld [vmem:[#allocation2 + $0x8] sm:$0x1]
        %v706 = vld [vmem:[#allocation2 + $0x14] sm:$0x1]
        %v707 = vld [vmem:[#allocation2 + $0x20] sm:$0x1]
        %v708 = vld [vmem:[#allocation2 + $0x2c] sm:$0x1]
        %v709 = vld [vmem:[#allocation2 + $0x38] sm:$0x1]
        %v710 = vld [vmem:[#allocation2 + $0x44] sm:$0x1]
        %v711 = vld [vmem:[#allocation2 + $0x50] sm:$0x1]
        %v712 = vld [vmem:[#allocation2 + $0x5c] sm:$0x1]
        %v713 = vld [vmem:[#allocation2 + $0x68] sm:$0x1]
        %v714 = vld [vmem:[#allocation2 + $0x74] sm:$0x1]
        %v715 = vld [vmem:[#allocation2 + $0x80] sm:$0x1]
        %v716 = vld [vmem:[#allocation2 + $0x8c] sm:$0x1]
        %v717 = vld [vmem:[#allocation2 + $0x98] sm:$0x1]
        %v718 = vld [vmem:[#allocation2 + $0xa4] sm:$0x1]
        %v719 = vld [vmem:[#allocation2 + $0xb0] sm:$0x1]
        %v720 = vld [vmem:[#allocation2 + $0xbc] sm:$0x1]
        %vm721 = vsmask.f32 3328
        %vm722 = vsmask.f32 7440
        %vm723 = vmor %vm721, %vm722
        %v725 = vshrl.u32 %v672, 16
        %v727 = vrot.slane %v725, 4
        %v728 = vshll.u32 %v672, 16
        %v730 = vrot.slane %v728, 5
        %v731 = vor.u32 %v727, %v730
        %v732 = vrot.slane %v731, 4
        %v734 = vshll.u32 %v673, 16
        %v736 = vrot.slane %v734, 5
        %v737 = vsel %vm723, %v732, %v736
        %v738 = vshrl.u32 %v673, 16
        %v740 = vrot.slane %v738, 4
        %v741 = vor.u32 %v740, %v736
        %v742 = vrot.slane %v741, 4
        %v744 = vshll.u32 %v705, 16
        %v746 = vrot.slane %v744, 5
        %v747 = vsel %vm723, %v742, %v746
        %v749 = vshrl.u32 %v674, 16
        %v751 = vrot.slane %v749, 4
        %v752 = vshll.u32 %v674, 16
        %v754 = vrot.slane %v752, 5
        %v755 = vor.u32 %v751, %v754
        %v756 = vrot.slane %v755, 4
        %v758 = vshll.u32 %v675, 16
        %v760 = vrot.slane %v758, 5
        %v761 = vsel %vm723, %v756, %v760
        %v762 = vshrl.u32 %v675, 16
        %v764 = vrot.slane %v762, 4
        %v765 = vor.u32 %v764, %v760
        %v766 = vrot.slane %v765, 4
        %v768 = vshll.u32 %v706, 16
        %v770 = vrot.slane %v768, 5
        %v771 = vsel %vm723, %v766, %v770
        %v773 = vshrl.u32 %v676, 16
        %v775 = vrot.slane %v773, 4
        %v776 = vshll.u32 %v676, 16
        %v778 = vrot.slane %v776, 5
        %v779 = vor.u32 %v775, %v778
        %v780 = vrot.slane %v779, 4
        %v782 = vshll.u32 %v677, 16
        %v784 = vrot.slane %v782, 5
        %v785 = vsel %vm723, %v780, %v784
        %v786 = vshrl.u32 %v677, 16
        %v788 = vrot.slane %v786, 4
        %v789 = vor.u32 %v788, %v784
        %v790 = vrot.slane %v789, 4
        %v792 = vshll.u32 %v707, 16
        %v794 = vrot.slane %v792, 5
        %v795 = vsel %vm723, %v790, %v794
        %v797 = vshrl.u32 %v678, 16
        %v799 = vrot.slane %v797, 4
        %v800 = vshll.u32 %v678, 16
        %v802 = vrot.slane %v800, 5
        %v803 = vor.u32 %v799, %v802
        %v804 = vrot.slane %v803, 4
        %v806 = vshll.u32 %v679, 16
        %v808 = vrot.slane %v806, 5
        %v809 = vsel %vm723, %v804, %v808
        %v810 = vshrl.u32 %v679, 16
        %v812 = vrot.slane %v810, 4
        %v813 = vor.u32 %v812, %v808
        %v814 = vrot.slane %v813, 4
        %v816 = vshll.u32 %v708, 16
        %v818 = vrot.slane %v816, 5
        %v819 = vsel %vm723, %v814, %v818
        %v821 = vshrl.u32 %v680, 16
        %v823 = vrot.slane %v821, 4
        %v824 = vshll.u32 %v680, 16
        %v826 = vrot.slane %v824, 5
        %v827 = vor.u32 %v823, %v826
        %v828 = vrot.slane %v827, 4
        %v830 = vshll.u32 %v681, 16
        %v832 = vrot.slane %v830, 5
        %v833 = vsel %vm723, %v828, %v832
        %v834 = vshrl.u32 %v681, 16
        %v836 = vrot.slane %v834, 4
        %v837 = vor.u32 %v836, %v832
        %v838 = vrot.slane %v837, 4
        %v840 = vshll.u32 %v709, 16
        %v842 = vrot.slane %v840, 5
        %v843 = vsel %vm723, %v838, %v842
        %v845 = vshrl.u32 %v682, 16
        %v847 = vrot.slane %v845, 4
        %v848 = vshll.u32 %v682, 16
        %v850 = vrot.slane %v848, 5
        %v851 = vor.u32 %v847, %v850
        %v852 = vrot.slane %v851, 4
        %v854 = vshll.u32 %v683, 16
        %v856 = vrot.slane %v854, 5
        %v857 = vsel %vm723, %v852, %v856
        %v858 = vshrl.u32 %v683, 16
        %v860 = vrot.slane %v858, 4
        %v861 = vor.u32 %v860, %v856
        %v862 = vrot.slane %v861, 4
        %v864 = vshll.u32 %v710, 16
        %v866 = vrot.slane %v864, 5
        %v867 = vsel %vm723, %v862, %v866
        %v869 = vshrl.u32 %v684, 16
        %v871 = vrot.slane %v869, 4
        %v872 = vshll.u32 %v684, 16
        %v874 = vrot.slane %v872, 5
        %v875 = vor.u32 %v871, %v874
        %v876 = vrot.slane %v875, 4
        %v878 = vshll.u32 %v685, 16
        %v880 = vrot.slane %v878, 5
        %v881 = vsel %vm723, %v876, %v880
        %v882 = vshrl.u32 %v685, 16
        %v884 = vrot.slane %v882, 4
        %v885 = vor.u32 %v884, %v880
        %v886 = vrot.slane %v885, 4
        %v888 = vshll.u32 %v711, 16
        %v890 = vrot.slane %v888, 5
        %v891 = vsel %vm723, %v886, %v890
        %v893 = vshrl.u32 %v686, 16
        %v895 = vrot.slane %v893, 4
        %v896 = vshll.u32 %v686, 16
        %v898 = vrot.slane %v896, 5
        %v899 = vor.u32 %v895, %v898
        %v900 = vrot.slane %v899, 4
        %v902 = vshll.u32 %v687, 16
        %v904 = vrot.slane %v902, 5
        %v905 = vsel %vm723, %v900, %v904
        %v906 = vshrl.u32 %v687, 16
        %v908 = vrot.slane %v906, 4
        %v909 = vor.u32 %v908, %v904
        %v910 = vrot.slane %v909, 4
        %v912 = vshll.u32 %v712, 16
        %v914 = vrot.slane %v912, 5
        %v915 = vsel %vm723, %v910, %v914
        %v917 = vshrl.u32 %v688, 16
        %v919 = vrot.slane %v917, 4
        %v920 = vshll.u32 %v688, 16
        %v922 = vrot.slane %v920, 5
        %v923 = vor.u32 %v919, %v922
        %v924 = vrot.slane %v923, 4
        %v926 = vshll.u32 %v689, 16
        %v928 = vrot.slane %v926, 5
        %v929 = vsel %vm723, %v924, %v928
        %v930 = vshrl.u32 %v689, 16
        %v932 = vrot.slane %v930, 4
        %v933 = vor.u32 %v932, %v928
        %v934 = vrot.slane %v933, 4
        %v936 = vshll.u32 %v713, 16
        %v938 = vrot.slane %v936, 5
        %v939 = vsel %vm723, %v934, %v938
        %v941 = vshrl.u32 %v690, 16
        %v943 = vrot.slane %v941, 4
        %v944 = vshll.u32 %v690, 16
        %v946 = vrot.slane %v944, 5
        %v947 = vor.u32 %v943, %v946
        %v948 = vrot.slane %v947, 4
        %v950 = vshll.u32 %v691, 16
        %v952 = vrot.slane %v950, 5
        %v953 = vsel %vm723, %v948, %v952
        %v954 = vshrl.u32 %v691, 16
        %v956 = vrot.slane %v954, 4
        %v957 = vor.u32 %v956, %v952
        %v958 = vrot.slane %v957, 4
        %v960 = vshll.u32 %v714, 16
        %v962 = vrot.slane %v960, 5
        %v963 = vsel %vm723, %v958, %v962
        %v965 = vshrl.u32 %v692, 16
        %v967 = vrot.slane %v965, 4
        %v968 = vshll.u32 %v692, 16
        %v970 = vrot.slane %v968, 5
        %v971 = vor.u32 %v967, %v970
        %v972 = vrot.slane %v971, 4
        %v974 = vshll.u32 %v693, 16
        %v976 = vrot.slane %v974, 5
        %v977 = vsel %vm723, %v972, %v976
        %v978 = vshrl.u32 %v693, 16
        %v980 = vrot.slane %v978, 4
        %v981 = vor.u32 %v980, %v976
        %v982 = vrot.slane %v981, 4
        %v984 = vshll.u32 %v715, 16
        %v986 = vrot.slane %v984, 5
        %v987 = vsel %vm723, %v982, %v986
        %v989 = vshrl.u32 %v694, 16
        %v991 = vrot.slane %v989, 4
        %v992 = vshll.u32 %v694, 16
        %v994 = vrot.slane %v992, 5
        %v995 = vor.u32 %v991, %v994
        %v996 = vrot.slane %v995, 4
        %v998 = vshll.u32 %v695, 16
        %v1000 = vrot.slane %v998, 5
        %v1001 = vsel %vm723, %v996, %v1000
        %v1002 = vshrl.u32 %v695, 16
        %v1004 = vrot.slane %v1002, 4
        %v1005 = vor.u32 %v1004, %v1000
        %v1006 = vrot.slane %v1005, 4
        %v1008 = vshll.u32 %v716, 16
        %v1010 = vrot.slane %v1008, 5
        %v1011 = vsel %vm723, %v1006, %v1010
        %v1013 = vshrl.u32 %v696, 16
        %v1015 = vrot.slane %v1013, 4
        %v1016 = vshll.u32 %v696, 16
        %v1018 = vrot.slane %v1016, 5
        %v1019 = vor.u32 %v1015, %v1018
        %v1020 = vrot.slane %v1019, 4
        %v1022 = vshll.u32 %v697, 16
        %v1024 = vrot.slane %v1022, 5
        %v1025 = vsel %vm723, %v1020, %v1024
        %v1026 = vshrl.u32 %v697, 16
        %v1028 = vrot.slane %v1026, 4
        %v1029 = vor.u32 %v1028, %v1024
        %v1030 = vrot.slane %v1029, 4
        %v1032 = vshll.u32 %v717, 16
        %v1034 = vrot.slane %v1032, 5
        %v1035 = vsel %vm723, %v1030, %v1034
        %v1037 = vshrl.u32 %v698, 16
        %v1039 = vrot.slane %v1037, 4
        %v1040 = vshll.u32 %v698, 16
        %v1042 = vrot.slane %v1040, 5
        %v1043 = vor.u32 %v1039, %v1042
        %v1044 = vrot.slane %v1043, 4
        %v1046 = vshll.u32 %v699, 16
        %v1048 = vrot.slane %v1046, 5
        %v1049 = vsel %vm723, %v1044, %v1048
        %v1050 = vshrl.u32 %v699, 16
        %v1052 = vrot.slane %v1050, 4
        %v1053 = vor.u32 %v1052, %v1048
        %v1054 = vrot.slane %v1053, 4
        %v1056 = vshll.u32 %v718, 16
        %v1058 = vrot.slane %v1056, 5
        %v1059 = vsel %vm723, %v1054, %v1058
        %v1061 = vshrl.u32 %v700, 16
        %v1063 = vrot.slane %v1061, 4
        %v1064 = vshll.u32 %v700, 16
        %v1066 = vrot.slane %v1064, 5
        %v1067 = vor.u32 %v1063, %v1066
        %v1068 = vrot.slane %v1067, 4
        %v1070 = vshll.u32 %v701, 16
        %v1072 = vrot.slane %v1070, 5
        %v1073 = vsel %vm723, %v1068, %v1072
        %v1074 = vshrl.u32 %v701, 16
        %v1076 = vrot.slane %v1074, 4
        %v1077 = vor.u32 %v1076, %v1072
        %v1078 = vrot.slane %v1077, 4
        %v1080 = vshll.u32 %v719, 16
        %v1082 = vrot.slane %v1080, 5
        %v1083 = vsel %vm723, %v1078, %v1082
        %v1085 = vshrl.u32 %v702, 16
        %v1087 = vrot.slane %v1085, 4
        %v1088 = vshll.u32 %v702, 16
        %v1090 = vrot.slane %v1088, 5
        %v1091 = vor.u32 %v1087, %v1090
        %v1092 = vrot.slane %v1091, 4
        %v1094 = vshll.u32 %v703, 16
        %v1096 = vrot.slane %v1094, 5
        %v1097 = vsel %vm723, %v1092, %v1096
        %v1098 = vshrl.u32 %v703, 16
        %v1100 = vrot.slane %v1098, 4
        %v1101 = vor.u32 %v1100, %v1096
        %v1102 = vrot.slane %v1101, 4
        %v1104 = vshll.u32 %v720, 16
        %v1106 = vrot.slane %v1104, 5
        %v1107 = vsel %vm723, %v1102, %v1106
        %s1108 = scalar_lea.vmem %s1, 2
        %v1109 = vld [vmem:[%s1108] sm:$0x3]
        %v1110 = vunpack.c.l.b16 %v737
        %v1111 = vunpack.c.l.b16 %v747
        %v1112 = vunpack.c.l.b16 %v761
        %v1113 = vunpack.c.l.b16 %v771
        %v1114 = vunpack.c.l.b16 %v785
        %v1115 = vunpack.c.l.b16 %v795
        %v1116 = vunpack.c.l.b16 %v809
        %v1117 = vunpack.c.l.b16 %v819
        %v1118 = vunpack.c.l.b16 %v833
        %v1119 = vunpack.c.l.b16 %v843
        %v1120 = vunpack.c.l.b16 %v857
        %v1121 = vunpack.c.l.b16 %v867
        %v1122 = vunpack.c.l.b16 %v881
        %v1123 = vunpack.c.l.b16 %v891
        %v1124 = vunpack.c.l.b16 %v905
        %v1125 = vunpack.c.l.b16 %v915
        %v1126 = vunpack.c.l.b16 %v929
        %v1127 = vunpack.c.l.b16 %v939
        %v1128 = vunpack.c.l.b16 %v953
        %v1129 = vunpack.c.l.b16 %v963
        %v1130 = vunpack.c.l.b16 %v977
        %v1131 = vunpack.c.l.b16 %v987
        %v1132 = vunpack.c.l.b16 %v1001
        %v1133 = vunpack.c.l.b16 %v1011
        %v1134 = vunpack.c.l.b16 %v1025
        %v1135 = vunpack.c.l.b16 %v1035
        %v1136 = vunpack.c.l.b16 %v1049
        %v1137 = vunpack.c.l.b16 %v1059
        %v1138 = vunpack.c.l.b16 %v1073
        %v1139 = vunpack.c.l.b16 %v1083
        %v1140 = vunpack.c.l.b16 %v1097
        %v1141 = vunpack.c.l.b16 %v1107
        %v1142 = vpack.c.b16 %v1111, %v1110
        %v1143 = vpack.c.b16 %v1113, %v1112
        %v1144 = vpack.c.b16 %v1115, %v1114
        %v1145 = vpack.c.b16 %v1117, %v1116
        %v1146 = vpack.c.b16 %v1119, %v1118
        %v1147 = vpack.c.b16 %v1121, %v1120
        %v1148 = vpack.c.b16 %v1123, %v1122
        %v1149 = vpack.c.b16 %v1125, %v1124
        %v1150 = vpack.c.b16 %v1127, %v1126
        %v1151 = vpack.c.b16 %v1129, %v1128
        %v1152 = vpack.c.b16 %v1131, %v1130
        %v1153 = vpack.c.b16 %v1133, %v1132
        %v1154 = vpack.c.b16 %v1135, %v1134
        %v1155 = vpack.c.b16 %v1137, %v1136
        %v1156 = vpack.c.b16 %v1139, %v1138
        %v1157 = vpack.c.b16 %v1141, %v1140
        %vm1158 = vcmask 23552
        %v1160 = vsel %vm1158, %v1142, 0
        %v1163 = vsel %vm1158, %v1143, 0
        %v1166 = vsel %vm1158, %v1144, 0
        %v1169 = vsel %vm1158, %v1145, 0
        %v1172 = vsel %vm1158, %v1146, 0
        %v1175 = vsel %vm1158, %v1147, 0
        %v1178 = vsel %vm1158, %v1148, 0
        %v1181 = vsel %vm1158, %v1149, 0
        %v1184 = vsel %vm1158, %v1150, 0
        %v1187 = vsel %vm1158, %v1151, 0
        %v1190 = vsel %vm1158, %v1152, 0
        %v1193 = vsel %vm1158, %v1153, 0
        %v1196 = vsel %vm1158, %v1154, 0
        %v1199 = vsel %vm1158, %v1155, 0
        %v1202 = vsel %vm1158, %v1156, 0
        %v1205 = vsel %vm1158, %v1157, 0
        %vm1207 = vcmask 1040384
        %vm1208 = vcmask 1041408
        %v1209 = vsel %vm1207, 4294967295, 65535
        %v1210 = vsel %vm1208, %v1209, 0
        %v1212 = vand.u32 %v1109, %v1210
        %1214 = vmatprep.subr.bf16.mxu0 0
        %1215 = vmatpush1.bf16.msra.mxu0 %v1212
        %1216 = vmatprep.subr.bf16.mxu0 0
        %1217 = vmatpush1.bf16.msra.mxu0 0
        %1218 = vmatprep.subr.bf16.mxu0 0
        %1219 = vmatpush1.bf16.msra.mxu0 0
        %1220 = vmatprep.subr.bf16.mxu0 0
        %1221 = vmatpush1.bf16.msra.mxu0 0
        %1222 = vmatprep.subr.bf16.mxu0 0
        %1223 = vmatpush1.bf16.msra.mxu0 0
        %1224 = vmatprep.subr.bf16.mxu0 0
        %1225 = vmatpush1.bf16.msra.mxu0 0
        %1226 = vmatprep.subr.bf16.mxu0 0
        %1227 = vmatpush1.bf16.msra.mxu0 0
        %1228 = vmatprep.subr.bf16.mxu0 0
        %1229 = vmatpush1.bf16.msra.mxu0 0
        %1230 = vmatprep.subr.bf16.mxu0 0
        %1231 = vmatpush1.bf16.msra.mxu0 0
        %1232 = vmatprep.subr.bf16.mxu0 0
        %1233 = vmatpush1.bf16.msra.mxu0 0
        %1234 = vmatprep.subr.bf16.mxu0 0
        %1235 = vmatpush1.bf16.msra.mxu0 0
        %1236 = vmatprep.subr.bf16.mxu0 0
        %1237 = vmatpush1.bf16.msra.mxu0 0
        %1238 = vmatprep.subr.bf16.mxu0 0
        %1239 = vmatpush1.bf16.msra.mxu0 0
        %1240 = vmatprep.subr.bf16.mxu0 0
        %1241 = vmatpush1.bf16.msra.mxu0 0
        %1242 = vmatprep.subr.bf16.mxu0 0
        %1243 = vmatpush1.bf16.msra.mxu0 0
        %1244 = vmatprep.subr.bf16.mxu0 0
        %1245 = vmatpush1.bf16.msra.mxu0 0
        %1246 = vmatprep.mubr.bf16.mxu0 0
        %1247 = vmatmul.mubr.bf16.gmra.mrb[0].mxu0 %v1160
        %v1248 = vpop.f32.mrb[0].mxu0
        %v1249 = vadd.f32 0.0, %v1248
        %v1250 = vpop.f32.mrb[0].mxu0
        %v1251 = vpop.f32.mrb[0].mxu0
        %v1252 = vadd.f32 0.0, %v1251
        %v1253 = vpop.f32.mrb[0].mxu0
        %1254 = vmatprep.mubr.bf16.mxu0 0
        %1255 = vmatmul.mubr.bf16.gmra.mrb[0].mxu0 %v1163
        %v1256 = vpop.f32.mrb[0].mxu0
        %v1257 = vadd.f32 0.0, %v1256
        %v1258 = vpop.f32.mrb[0].mxu0
        %v1259 = vpop.f32.mrb[0].mxu0
        %v1260 = vadd.f32 0.0, %v1259
        %v1261 = vpop.f32.mrb[0].mxu0
        %1262 = vmatprep.mubr.bf16.mxu0 0
        %1263 = vmatmul.mubr.bf16.gmra.mrb[0].mxu0 %v1166
        %v1264 = vpop.f32.mrb[0].mxu0
        %v1265 = vadd.f32 0.0, %v1264
        %v1266 = vpop.f32.mrb[0].mxu0
        %v1267 = vpop.f32.mrb[0].mxu0
        %v1268 = vadd.f32 0.0, %v1267
        %v1269 = vpop.f32.mrb[0].mxu0
        %1270 = vmatprep.mubr.bf16.mxu0 0
        %1271 = vmatmul.mubr.bf16.gmra.mrb[0].mxu0 %v1169
        %v1272 = vpop.f32.mrb[0].mxu0
        %v1273 = vadd.f32 0.0, %v1272
        %v1274 = vpop.f32.mrb[0].mxu0
        %v1275 = vpop.f32.mrb[0].mxu0
        %v1276 = vadd.f32 0.0, %v1275
        %v1277 = vpop.f32.mrb[0].mxu0
        %1278 = vmatprep.mubr.bf16.mxu0 0
        %1279 = vmatmul.mubr.bf16.gmra.mrb[0].mxu0 %v1172
        %v1280 = vpop.f32.mrb[0].mxu0
        %v1281 = vadd.f32 0.0, %v1280
        %v1282 = vpop.f32.mrb[0].mxu0
        %v1283 = vpop.f32.mrb[0].mxu0
        %v1284 = vadd.f32 0.0, %v1283
        %v1285 = vpop.f32.mrb[0].mxu0
        %1286 = vmatprep.mubr.bf16.mxu0 0
        %1287 = vmatmul.mubr.bf16.gmra.mrb[0].mxu0 %v1175
        %v1288 = vpop.f32.mrb[0].mxu0
        %v1289 = vadd.f32 0.0, %v1288
        %v1290 = vpop.f32.mrb[0].mxu0
        %v1291 = vpop.f32.mrb[0].mxu0
        %v1292 = vadd.f32 0.0, %v1291
        %v1293 = vpop.f32.mrb[0].mxu0
        %1294 = vmatprep.mubr.bf16.mxu0 0
        %1295 = vmatmul.mubr.bf16.gmra.mrb[0].mxu0 %v1178
        %v1296 = vpop.f32.mrb[0].mxu0
        %v1297 = vadd.f32 0.0, %v1296
        %v1298 = vpop.f32.mrb[0].mxu0
        %v1299 = vpop.f32.mrb[0].mxu0
        %v1300 = vadd.f32 0.0, %v1299
        %v1301 = vpop.f32.mrb[0].mxu0
        %1302 = vmatprep.mubr.bf16.mxu0 0
        %1303 = vmatmul.mubr.bf16.gmra.mrb[0].mxu0 %v1181
        %v1304 = vpop.f32.mrb[0].mxu0
        %v1305 = vadd.f32 0.0, %v1304
        %v1306 = vpop.f32.mrb[0].mxu0
        %v1307 = vpop.f32.mrb[0].mxu0
        %v1308 = vadd.f32 0.0, %v1307
        %v1309 = vpop.f32.mrb[0].mxu0
        %1310 = vmatprep.mubr.bf16.mxu0 0
        %1311 = vmatmul.mubr.bf16.gmra.mrb[0].mxu0 %v1184
        %v1312 = vpop.f32.mrb[0].mxu0
        %v1313 = vadd.f32 0.0, %v1312
        %v1314 = vpop.f32.mrb[0].mxu0
        %v1315 = vpop.f32.mrb[0].mxu0
        %v1316 = vadd.f32 0.0, %v1315
        %v1317 = vpop.f32.mrb[0].mxu0
        %1318 = vmatprep.mubr.bf16.mxu0 0
        %1319 = vmatmul.mubr.bf16.gmra.mrb[0].mxu0 %v1187
        %v1320 = vpop.f32.mrb[0].mxu0
        %v1321 = vadd.f32 0.0, %v1320
        %v1322 = vpop.f32.mrb[0].mxu0
        %v1323 = vpop.f32.mrb[0].mxu0
        %v1324 = vadd.f32 0.0, %v1323
        %v1325 = vpop.f32.mrb[0].mxu0
        %1326 = vmatprep.mubr.bf16.mxu0 0
        %1327 = vmatmul.mubr.bf16.gmra.mrb[0].mxu0 %v1190
        %v1328 = vpop.f32.mrb[0].mxu0
        %v1329 = vadd.f32 0.0, %v1328
        %v1330 = vpop.f32.mrb[0].mxu0
        %v1331 = vpop.f32.mrb[0].mxu0
        %v1332 = vadd.f32 0.0, %v1331
        %v1333 = vpop.f32.mrb[0].mxu0
        %1334 = vmatprep.mubr.bf16.mxu0 0
        %1335 = vmatmul.mubr.bf16.gmra.mrb[0].mxu0 %v1193
        %v1336 = vpop.f32.mrb[0].mxu0
        %v1337 = vadd.f32 0.0, %v1336
        %v1338 = vpop.f32.mrb[0].mxu0
        %v1339 = vpop.f32.mrb[0].mxu0
        %v1340 = vadd.f32 0.0, %v1339
        %v1341 = vpop.f32.mrb[0].mxu0
        %1342 = vmatprep.mubr.bf16.mxu0 0
        %1343 = vmatmul.mubr.bf16.gmra.mrb[0].mxu0 %v1196
        %v1344 = vpop.f32.mrb[0].mxu0
        %v1345 = vadd.f32 0.0, %v1344
        %v1346 = vpop.f32.mrb[0].mxu0
        %v1347 = vpop.f32.mrb[0].mxu0
        %v1348 = vadd.f32 0.0, %v1347
        %v1349 = vpop.f32.mrb[0].mxu0
        %1350 = vmatprep.mubr.bf16.mxu0 0
        %1351 = vmatmul.mubr.bf16.gmra.mrb[0].mxu0 %v1199
        %v1352 = vpop.f32.mrb[0].mxu0
        %v1353 = vadd.f32 0.0, %v1352
        %v1354 = vpop.f32.mrb[0].mxu0
        %v1355 = vpop.f32.mrb[0].mxu0
        %v1356 = vadd.f32 0.0, %v1355
        %v1357 = vpop.f32.mrb[0].mxu0
        %1358 = vmatprep.mubr.bf16.mxu0 0
        %1359 = vmatmul.mubr.bf16.gmra.mrb[0].mxu0 %v1202
        %v1360 = vpop.f32.mrb[0].mxu0
        %v1361 = vadd.f32 0.0, %v1360
        %v1362 = vpop.f32.mrb[0].mxu0
        %v1363 = vpop.f32.mrb[0].mxu0
        %v1364 = vadd.f32 0.0, %v1363
        %v1365 = vpop.f32.mrb[0].mxu0
        %1366 = vmatprep.mubr.bf16.mxu0 0
        %1367 = vmatmul.mubr.bf16.gmra.mrb[0].mxu0 %v1205
        %v1368 = vpop.f32.mrb[0].mxu0
        %v1369 = vadd.f32 0.0, %v1368
        %v1370 = vpop.f32.mrb[0].mxu0
        %v1371 = vpop.f32.mrb[0].mxu0
        %v1372 = vadd.f32 0.0, %v1371
        %v1373 = vpop.f32.mrb[0].mxu0
        %1374 = vdwg.mxu0
        %v1407 = vunpack.c.l.b16 %v672
        %v1408 = vunpack.c.l.b16 %v673
        %v1409 = vunpack.c.l.b16 %v674
        %v1410 = vunpack.c.l.b16 %v675
        %v1411 = vunpack.c.l.b16 %v676
        %v1412 = vunpack.c.l.b16 %v677
        %v1413 = vunpack.c.l.b16 %v678
        %v1414 = vunpack.c.l.b16 %v679
        %v1415 = vunpack.c.l.b16 %v680
        %v1416 = vunpack.c.l.b16 %v681
        %v1417 = vunpack.c.l.b16 %v682
        %v1418 = vunpack.c.l.b16 %v683
        %v1419 = vunpack.c.l.b16 %v684
        %v1420 = vunpack.c.l.b16 %v685
        %v1421 = vunpack.c.l.b16 %v686
        %v1422 = vunpack.c.l.b16 %v687
        %v1423 = vunpack.c.l.b16 %v688
        %v1424 = vunpack.c.l.b16 %v689
        %v1425 = vunpack.c.l.b16 %v690
        %v1426 = vunpack.c.l.b16 %v691
        %v1427 = vunpack.c.l.b16 %v692
        %v1428 = vunpack.c.l.b16 %v693
        %v1429 = vunpack.c.l.b16 %v694
        %v1430 = vunpack.c.l.b16 %v695
        %v1431 = vunpack.c.l.b16 %v696
        %v1432 = vunpack.c.l.b16 %v697
        %v1433 = vunpack.c.l.b16 %v698
        %v1434 = vunpack.c.l.b16 %v699
        %v1435 = vunpack.c.l.b16 %v700
        %v1436 = vunpack.c.l.b16 %v701
        %v1437 = vunpack.c.l.b16 %v702
        %v1438 = vunpack.c.l.b16 %v703
        %v1439 = vpack.c.b16 %v1408, %v1407
        %v1440 = vpack.c.b16 %v1410, %v1409
        %v1441 = vpack.c.b16 %v1412, %v1411
        %v1442 = vpack.c.b16 %v1414, %v1413
        %v1443 = vpack.c.b16 %v1416, %v1415
        %v1444 = vpack.c.b16 %v1418, %v1417
        %v1445 = vpack.c.b16 %v1420, %v1419
        %v1446 = vpack.c.b16 %v1422, %v1421
        %v1447 = vpack.c.b16 %v1424, %v1423
        %v1448 = vpack.c.b16 %v1426, %v1425
        %v1449 = vpack.c.b16 %v1428, %v1427
        %v1450 = vpack.c.b16 %v1430, %v1429
        %v1451 = vpack.c.b16 %v1432, %v1431
        %v1452 = vpack.c.b16 %v1434, %v1433
        %v1453 = vpack.c.b16 %v1436, %v1435
        %v1454 = vpack.c.b16 %v1438, %v1437
        %v1456 = vsel %vm1158, %v1439, 0
        %v1459 = vsel %vm1158, %v1440, 0
        %v1462 = vsel %vm1158, %v1441, 0
        %v1465 = vsel %vm1158, %v1442, 0
        %v1468 = vsel %vm1158, %v1443, 0
        %v1471 = vsel %vm1158, %v1444, 0
        %v1474 = vsel %vm1158, %v1445, 0
        %v1477 = vsel %vm1158, %v1446, 0
        %v1480 = vsel %vm1158, %v1447, 0
        %v1483 = vsel %vm1158, %v1448, 0
        %v1486 = vsel %vm1158, %v1449, 0
        %v1489 = vsel %vm1158, %v1450, 0
        %v1492 = vsel %vm1158, %v1451, 0
        %v1495 = vsel %vm1158, %v1452, 0
        %v1498 = vsel %vm1158, %v1453, 0
        %v1501 = vsel %vm1158, %v1454, 0
        %v1504 = vand.u32 %v704, %v1210
        %1506 = vmatprep.subr.bf16.mxu0 0
        %1507 = vmatpush1.bf16.msra.mxu0 %v1504
        %1508 = vmatprep.subr.bf16.mxu0 0
        %1509 = vmatpush1.bf16.msra.mxu0 0
        %1510 = vmatprep.subr.bf16.mxu0 0
        %1511 = vmatpush1.bf16.msra.mxu0 0
        %1512 = vmatprep.subr.bf16.mxu0 0
        %1513 = vmatpush1.bf16.msra.mxu0 0
        %1514 = vmatprep.subr.bf16.mxu0 0
        %1515 = vmatpush1.bf16.msra.mxu0 0
        %1516 = vmatprep.subr.bf16.mxu0 0
        %1517 = vmatpush1.bf16.msra.mxu0 0
        %1518 = vmatprep.subr.bf16.mxu0 0
        %1519 = vmatpush1.bf16.msra.mxu0 0
        %1520 = vmatprep.subr.bf16.mxu0 0
        %1521 = vmatpush1.bf16.msra.mxu0 0
        %1522 = vmatprep.subr.bf16.mxu0 0
        %1523 = vmatpush1.bf16.msra.mxu0 0
        %1524 = vmatprep.subr.bf16.mxu0 0
        %1525 = vmatpush1.bf16.msra.mxu0 0
        %1526 = vmatprep.subr.bf16.mxu0 0
        %1527 = vmatpush1.bf16.msra.mxu0 0
        %1528 = vmatprep.subr.bf16.mxu0 0
        %1529 = vmatpush1.bf16.msra.mxu0 0
        %1530 = vmatprep.subr.bf16.mxu0 0
        %1531 = vmatpush1.bf16.msra.mxu0 0
        %1532 = vmatprep.subr.bf16.mxu0 0
        %1533 = vmatpush1.bf16.msra.mxu0 0
        %1534 = vmatprep.subr.bf16.mxu0 0
        %1535 = vmatpush1.bf16.msra.mxu0 0
        %1536 = vmatprep.subr.bf16.mxu0 0
        %1537 = vmatpush1.bf16.msra.mxu0 0
        %1538 = vmatprep.mubr.bf16.mxu0 0
        %1539 = vmatmul.mubr.bf16.gmra.mrb[0].mxu0 %v1456
        %v1540 = vpop.f32.mrb[0].mxu0
        %v1541 = vadd.f32 %v1249, %v1540
        %v1542 = vpop.f32.mrb[0].mxu0
        %v1543 = vpop.f32.mrb[0].mxu0
        %v1544 = vadd.f32 %v1252, %v1543
        %v1545 = vpop.f32.mrb[0].mxu0
        %1546 = vmatprep.mubr.bf16.mxu0 0
        %1547 = vmatmul.mubr.bf16.gmra.mrb[0].mxu0 %v1459
        %v1548 = vpop.f32.mrb[0].mxu0
        %v1549 = vadd.f32 %v1257, %v1548
        %v1550 = vpop.f32.mrb[0].mxu0
        %v1551 = vpop.f32.mrb[0].mxu0
        %v1552 = vadd.f32 %v1260, %v1551
        %v1553 = vpop.f32.mrb[0].mxu0
        %1554 = vmatprep.mubr.bf16.mxu0 0
        %1555 = vmatmul.mubr.bf16.gmra.mrb[0].mxu0 %v1462
        %v1556 = vpop.f32.mrb[0].mxu0
        %v1557 = vadd.f32 %v1265, %v1556
        %v1558 = vpop.f32.mrb[0].mxu0
        %v1559 = vpop.f32.mrb[0].mxu0
        %v1560 = vadd.f32 %v1268, %v1559
        %v1561 = vpop.f32.mrb[0].mxu0
        %1562 = vmatprep.mubr.bf16.mxu0 0
        %1563 = vmatmul.mubr.bf16.gmra.mrb[0].mxu0 %v1465
        %v1564 = vpop.f32.mrb[0].mxu0
        %v1565 = vadd.f32 %v1273, %v1564
        %v1566 = vpop.f32.mrb[0].mxu0
        %v1567 = vpop.f32.mrb[0].mxu0
        %v1568 = vadd.f32 %v1276, %v1567
        %v1569 = vpop.f32.mrb[0].mxu0
        %1570 = vmatprep.mubr.bf16.mxu0 0
        %1571 = vmatmul.mubr.bf16.gmra.mrb[0].mxu0 %v1468
        %v1572 = vpop.f32.mrb[0].mxu0
        %v1573 = vadd.f32 %v1281, %v1572
        %v1574 = vpop.f32.mrb[0].mxu0
        %v1575 = vpop.f32.mrb[0].mxu0
        %v1576 = vadd.f32 %v1284, %v1575
        %v1577 = vpop.f32.mrb[0].mxu0
        %1578 = vmatprep.mubr.bf16.mxu0 0
        %1579 = vmatmul.mubr.bf16.gmra.mrb[0].mxu0 %v1471
        %v1580 = vpop.f32.mrb[0].mxu0
        %v1581 = vadd.f32 %v1289, %v1580
        %v1582 = vpop.f32.mrb[0].mxu0
        %v1583 = vpop.f32.mrb[0].mxu0
        %v1584 = vadd.f32 %v1292, %v1583
        %v1585 = vpop.f32.mrb[0].mxu0
        %1586 = vmatprep.mubr.bf16.mxu0 0
        %1587 = vmatmul.mubr.bf16.gmra.mrb[0].mxu0 %v1474
        %v1588 = vpop.f32.mrb[0].mxu0
        %v1589 = vadd.f32 %v1297, %v1588
        %v1590 = vpop.f32.mrb[0].mxu0
        %v1591 = vpop.f32.mrb[0].mxu0
        %v1592 = vadd.f32 %v1300, %v1591
        %v1593 = vpop.f32.mrb[0].mxu0
        %1594 = vmatprep.mubr.bf16.mxu0 0
        %1595 = vmatmul.mubr.bf16.gmra.mrb[0].mxu0 %v1477
        %v1596 = vpop.f32.mrb[0].mxu0
        %v1597 = vadd.f32 %v1305, %v1596
        %v1598 = vpop.f32.mrb[0].mxu0
        %v1599 = vpop.f32.mrb[0].mxu0
        %v1600 = vadd.f32 %v1308, %v1599
        %v1601 = vpop.f32.mrb[0].mxu0
        %1602 = vmatprep.mubr.bf16.mxu0 0
        %1603 = vmatmul.mubr.bf16.gmra.mrb[0].mxu0 %v1480
        %v1604 = vpop.f32.mrb[0].mxu0
        %v1605 = vadd.f32 %v1313, %v1604
        %v1606 = vpop.f32.mrb[0].mxu0
        %v1607 = vpop.f32.mrb[0].mxu0
        %v1608 = vadd.f32 %v1316, %v1607
        %v1609 = vpop.f32.mrb[0].mxu0
        %1610 = vmatprep.mubr.bf16.mxu0 0
        %1611 = vmatmul.mubr.bf16.gmra.mrb[0].mxu0 %v1483
        %v1612 = vpop.f32.mrb[0].mxu0
        %v1613 = vadd.f32 %v1321, %v1612
        %v1614 = vpop.f32.mrb[0].mxu0
        %v1615 = vpop.f32.mrb[0].mxu0
        %v1616 = vadd.f32 %v1324, %v1615
        %v1617 = vpop.f32.mrb[0].mxu0
        %1618 = vmatprep.mubr.bf16.mxu0 0
        %1619 = vmatmul.mubr.bf16.gmra.mrb[0].mxu0 %v1486
        %v1620 = vpop.f32.mrb[0].mxu0
        %v1621 = vadd.f32 %v1329, %v1620
        %v1622 = vpop.f32.mrb[0].mxu0
        %v1623 = vpop.f32.mrb[0].mxu0
        %v1624 = vadd.f32 %v1332, %v1623
        %v1625 = vpop.f32.mrb[0].mxu0
        %1626 = vmatprep.mubr.bf16.mxu0 0
        %1627 = vmatmul.mubr.bf16.gmra.mrb[0].mxu0 %v1489
        %v1628 = vpop.f32.mrb[0].mxu0
        %v1629 = vadd.f32 %v1337, %v1628
        %v1630 = vpop.f32.mrb[0].mxu0
        %v1631 = vpop.f32.mrb[0].mxu0
        %v1632 = vadd.f32 %v1340, %v1631
        %v1633 = vpop.f32.mrb[0].mxu0
        %1634 = vmatprep.mubr.bf16.mxu0 0
        %1635 = vmatmul.mubr.bf16.gmra.mrb[0].mxu0 %v1492
        %v1636 = vpop.f32.mrb[0].mxu0
        %v1637 = vadd.f32 %v1345, %v1636
        %v1638 = vpop.f32.mrb[0].mxu0
        %v1639 = vpop.f32.mrb[0].mxu0
        %v1640 = vadd.f32 %v1348, %v1639
        %v1641 = vpop.f32.mrb[0].mxu0
        %1642 = vmatprep.mubr.bf16.mxu0 0
        %1643 = vmatmul.mubr.bf16.gmra.mrb[0].mxu0 %v1495
        %v1644 = vpop.f32.mrb[0].mxu0
        %v1645 = vadd.f32 %v1353, %v1644
        %v1646 = vpop.f32.mrb[0].mxu0
        %v1647 = vpop.f32.mrb[0].mxu0
        %v1648 = vadd.f32 %v1356, %v1647
        %v1649 = vpop.f32.mrb[0].mxu0
        %1650 = vmatprep.mubr.bf16.mxu0 0
        %1651 = vmatmul.mubr.bf16.gmra.mrb[0].mxu0 %v1498
        %v1652 = vpop.f32.mrb[0].mxu0
        %v1653 = vadd.f32 %v1361, %v1652
        %v1654 = vpop.f32.mrb[0].mxu0
        %v1655 = vpop.f32.mrb[0].mxu0
        %v1656 = vadd.f32 %v1364, %v1655
        %v1657 = vpop.f32.mrb[0].mxu0
        %1658 = vmatprep.mubr.bf16.mxu0 0
        %1659 = vmatmul.mubr.bf16.gmra.mrb[0].mxu0 %v1501
        %v1660 = vpop.f32.mrb[0].mxu0
        %v1661 = vadd.f32 %v1369, %v1660
        %v1662 = vpop.f32.mrb[0].mxu0
        %v1663 = vpop.f32.mrb[0].mxu0
        %v1664 = vadd.f32 %v1372, %v1663
        %v1665 = vpop.f32.mrb[0].mxu0
        %1666 = vdwg.mxu0
        %v1667 = vld [vmem:[#allocation2] sm:$0xe]
        %v1668 = vld [vmem:[#allocation2 + $0xc] sm:$0xe]
        %v1669 = vld [vmem:[#allocation2 + $0x18] sm:$0xe]
        %v1670 = vld [vmem:[#allocation2 + $0x24] sm:$0xe]
        %v1671 = vld [vmem:[#allocation2 + $0x30] sm:$0xe]
        %v1672 = vld [vmem:[#allocation2 + $0x3c] sm:$0xe]
        %v1673 = vld [vmem:[#allocation2 + $0x48] sm:$0xe]
        %v1674 = vld [vmem:[#allocation2 + $0x54] sm:$0xe]
        %v1675 = vld [vmem:[#allocation2 + $0x60] sm:$0xe]
        %v1676 = vld [vmem:[#allocation2 + $0x6c] sm:$0xe]
        %v1677 = vld [vmem:[#allocation2 + $0x78] sm:$0xe]
        %v1678 = vld [vmem:[#allocation2 + $0x84] sm:$0xe]
        %v1679 = vld [vmem:[#allocation2 + $0x90] sm:$0xe]
        %v1680 = vld [vmem:[#allocation2 + $0x9c] sm:$0xe]
        %v1681 = vld [vmem:[#allocation2 + $0xa8] sm:$0xe]
        %v1682 = vld [vmem:[#allocation2 + $0xb4] sm:$0xe]
        %vm1715 = vcmask 1042432
        %vm1716 = vcmask 1046532
        %vm1717 = vmor %vm1715, %vm1716
        %v1718 = vrot.slane %v1667, 5
        %v1719 = vrot.slane %v1718, 4
        %v1720 = vrot.slane %v673, 5
        %v1721 = vsel %vm1717, %v1719, %v1720
        %v1722 = vrot.slane %v1720, 4
        %v1723 = vrot.slane %v705, 5
        %v1724 = vsel %vm1717, %v1722, %v1723
        %v1725 = vrot.slane %v1668, 5
        %v1726 = vrot.slane %v1725, 4
        %v1727 = vrot.slane %v675, 5
        %v1728 = vsel %vm1717, %v1726, %v1727
        %v1729 = vrot.slane %v1727, 4
        %v1730 = vrot.slane %v706, 5
        %v1731 = vsel %vm1717, %v1729, %v1730
        %v1732 = vrot.slane %v1669, 5
        %v1733 = vrot.slane %v1732, 4
        %v1734 = vrot.slane %v677, 5
        %v1735 = vsel %vm1717, %v1733, %v1734
        %v1736 = vrot.slane %v1734, 4
        %v1737 = vrot.slane %v707, 5
        %v1738 = vsel %vm1717, %v1736, %v1737
        %v1739 = vrot.slane %v1670, 5
        %v1740 = vrot.slane %v1739, 4
        %v1741 = vrot.slane %v679, 5
        %v1742 = vsel %vm1717, %v1740, %v1741
        %v1743 = vrot.slane %v1741, 4
        %v1744 = vrot.slane %v708, 5
        %v1745 = vsel %vm1717, %v1743, %v1744
        %v1746 = vrot.slane %v1671, 5
        %v1747 = vrot.slane %v1746, 4
        %v1748 = vrot.slane %v681, 5
        %v1749 = vsel %vm1717, %v1747, %v1748
        %v1750 = vrot.slane %v1748, 4
        %v1751 = vrot.slane %v709, 5
        %v1752 = vsel %vm1717, %v1750, %v1751
        %v1753 = vrot.slane %v1672, 5
        %v1754 = vrot.slane %v1753, 4
        %v1755 = vrot.slane %v683, 5
        %v1756 = vsel %vm1717, %v1754, %v1755
        %v1757 = vrot.slane %v1755, 4
        %v1758 = vrot.slane %v710, 5
        %v1759 = vsel %vm1717, %v1757, %v1758
        %v1760 = vrot.slane %v1673, 5
        %v1761 = vrot.slane %v1760, 4
        %v1762 = vrot.slane %v685, 5
        %v1763 = vsel %vm1717, %v1761, %v1762
        %v1764 = vrot.slane %v1762, 4
        %v1765 = vrot.slane %v711, 5
        %v1766 = vsel %vm1717, %v1764, %v1765
        %v1767 = vrot.slane %v1674, 5
        %v1768 = vrot.slane %v1767, 4
        %v1769 = vrot.slane %v687, 5
        %v1770 = vsel %vm1717, %v1768, %v1769
        %v1771 = vrot.slane %v1769, 4
        %v1772 = vrot.slane %v712, 5
        %v1773 = vsel %vm1717, %v1771, %v1772
        %v1774 = vrot.slane %v1675, 5
        %v1775 = vrot.slane %v1774, 4
        %v1776 = vrot.slane %v689, 5
        %v1777 = vsel %vm1717, %v1775, %v1776
        %v1778 = vrot.slane %v1776, 4
        %v1779 = vrot.slane %v713, 5
        %v1780 = vsel %vm1717, %v1778, %v1779
        %v1781 = vrot.slane %v1676, 5
        %v1782 = vrot.slane %v1781, 4
        %v1783 = vrot.slane %v691, 5
        %v1784 = vsel %vm1717, %v1782, %v1783
        %v1785 = vrot.slane %v1783, 4
        %v1786 = vrot.slane %v714, 5
        %v1787 = vsel %vm1717, %v1785, %v1786
        %v1788 = vrot.slane %v1677, 5
        %v1789 = vrot.slane %v1788, 4
        %v1790 = vrot.slane %v693, 5
        %v1791 = vsel %vm1717, %v1789, %v1790
        %v1792 = vrot.slane %v1790, 4
        %v1793 = vrot.slane %v715, 5
        %v1794 = vsel %vm1717, %v1792, %v1793
        %v1795 = vrot.slane %v1678, 5
        %v1796 = vrot.slane %v1795, 4
        %v1797 = vrot.slane %v695, 5
        %v1798 = vsel %vm1717, %v1796, %v1797
        %v1799 = vrot.slane %v1797, 4
        %v1800 = vrot.slane %v716, 5
        %v1801 = vsel %vm1717, %v1799, %v1800
        %v1802 = vrot.slane %v1679, 5
        %v1803 = vrot.slane %v1802, 4
        %v1804 = vrot.slane %v697, 5
        %v1805 = vsel %vm1717, %v1803, %v1804
        %v1806 = vrot.slane %v1804, 4
        %v1807 = vrot.slane %v717, 5
        %v1808 = vsel %vm1717, %v1806, %v1807
        %v1809 = vrot.slane %v1680, 5
        %v1810 = vrot.slane %v1809, 4
        %v1811 = vrot.slane %v699, 5
        %v1812 = vsel %vm1717, %v1810, %v1811
        %v1813 = vrot.slane %v1811, 4
        %v1814 = vrot.slane %v718, 5
        %v1815 = vsel %vm1717, %v1813, %v1814
        %v1816 = vrot.slane %v1681, 5
        %v1817 = vrot.slane %v1816, 4
        %v1818 = vrot.slane %v701, 5
        %v1819 = vsel %vm1717, %v1817, %v1818
        %v1820 = vrot.slane %v1818, 4
        %v1821 = vrot.slane %v719, 5
        %v1822 = vsel %vm1717, %v1820, %v1821
        %v1823 = vrot.slane %v1682, 5
        %v1824 = vrot.slane %v1823, 4
        %v1825 = vrot.slane %v703, 5
        %v1826 = vsel %vm1717, %v1824, %v1825
        %v1827 = vrot.slane %v1825, 4
        %v1828 = vrot.slane %v720, 5
        %v1829 = vsel %vm1717, %v1827, %v1828
        %s1830 = scalar_lea.vmem %s1, 4
        %v1831 = vld [vmem:[%s1830] sm:$0x3]
        %v1832 = vunpack.c.l.b16 %v1721
        %v1833 = vunpack.c.l.b16 %v1724
        %v1834 = vunpack.c.l.b16 %v1728
        %v1835 = vunpack.c.l.b16 %v1731
        %v1836 = vunpack.c.l.b16 %v1735
        %v1837 = vunpack.c.l.b16 %v1738
        %v1838 = vunpack.c.l.b16 %v1742
        %v1839 = vunpack.c.l.b16 %v1745
        %v1840 = vunpack.c.l.b16 %v1749
        %v1841 = vunpack.c.l.b16 %v1752
        %v1842 = vunpack.c.l.b16 %v1756
        %v1843 = vunpack.c.l.b16 %v1759
        %v1844 = vunpack.c.l.b16 %v1763
        %v1845 = vunpack.c.l.b16 %v1766
        %v1846 = vunpack.c.l.b16 %v1770
        %v1847 = vunpack.c.l.b16 %v1773
        %v1848 = vunpack.c.l.b16 %v1777
        %v1849 = vunpack.c.l.b16 %v1780
        %v1850 = vunpack.c.l.b16 %v1784
        %v1851 = vunpack.c.l.b16 %v1787
        %v1852 = vunpack.c.l.b16 %v1791
        %v1853 = vunpack.c.l.b16 %v1794
        %v1854 = vunpack.c.l.b16 %v1798
        %v1855 = vunpack.c.l.b16 %v1801
        %v1856 = vunpack.c.l.b16 %v1805
        %v1857 = vunpack.c.l.b16 %v1808
        %v1858 = vunpack.c.l.b16 %v1812
        %v1859 = vunpack.c.l.b16 %v1815
        %v1860 = vunpack.c.l.b16 %v1819
        %v1861 = vunpack.c.l.b16 %v1822
        %v1862 = vunpack.c.l.b16 %v1826
        %v1863 = vunpack.c.l.b16 %v1829
        %v1864 = vpack.c.b16 %v1833, %v1832
        %v1865 = vpack.c.b16 %v1835, %v1834
        %v1866 = vpack.c.b16 %v1837, %v1836
        %v1867 = vpack.c.b16 %v1839, %v1838
        %v1868 = vpack.c.b16 %v1841, %v1840
        %v1869 = vpack.c.b16 %v1843, %v1842
        %v1870 = vpack.c.b16 %v1845, %v1844
        %v1871 = vpack.c.b16 %v1847, %v1846
        %v1872 = vpack.c.b16 %v1849, %v1848
        %v1873 = vpack.c.b16 %v1851, %v1850
        %v1874 = vpack.c.b16 %v1853, %v1852
        %v1875 = vpack.c.b16 %v1855, %v1854
        %v1876 = vpack.c.b16 %v1857, %v1856
        %v1877 = vpack.c.b16 %v1859, %v1858
        %v1878 = vpack.c.b16 %v1861, %v1860
        %v1879 = vpack.c.b16 %v1863, %v1862
        %v1881 = vsel %vm1158, %v1864, 0
        %v1884 = vsel %vm1158, %v1865, 0
        %v1887 = vsel %vm1158, %v1866, 0
        %v1890 = vsel %vm1158, %v1867, 0
        %v1893 = vsel %vm1158, %v1868, 0
        %v1896 = vsel %vm1158, %v1869, 0
        %v1899 = vsel %vm1158, %v1870, 0
        %v1902 = vsel %vm1158, %v1871, 0
        %v1905 = vsel %vm1158, %v1872, 0
        %v1908 = vsel %vm1158, %v1873, 0
        %v1911 = vsel %vm1158, %v1874, 0
        %v1914 = vsel %vm1158, %v1875, 0
        %v1917 = vsel %vm1158, %v1876, 0
        %v1920 = vsel %vm1158, %v1877, 0
        %v1923 = vsel %vm1158, %v1878, 0
        %v1926 = vsel %vm1158, %v1879, 0
        %v1929 = vand.u32 %v1831, %v1210
        %1931 = vmatprep.subr.bf16.mxu0 0
        %1932 = vmatpush1.bf16.msra.mxu0 %v1929
        %1933 = vmatprep.subr.bf16.mxu0 0
        %1934 = vmatpush1.bf16.msra.mxu0 0
        %1935 = vmatprep.subr.bf16.mxu0 0
        %1936 = vmatpush1.bf16.msra.mxu0 0
        %1937 = vmatprep.subr.bf16.mxu0 0
        %1938 = vmatpush1.bf16.msra.mxu0 0
        %1939 = vmatprep.subr.bf16.mxu0 0
        %1940 = vmatpush1.bf16.msra.mxu0 0
        %1941 = vmatprep.subr.bf16.mxu0 0
        %1942 = vmatpush1.bf16.msra.mxu0 0
        %1943 = vmatprep.subr.bf16.mxu0 0
        %1944 = vmatpush1.bf16.msra.mxu0 0
        %1945 = vmatprep.subr.bf16.mxu0 0
        %1946 = vmatpush1.bf16.msra.mxu0 0
        %1947 = vmatprep.subr.bf16.mxu0 0
        %1948 = vmatpush1.bf16.msra.mxu0 0
        %1949 = vmatprep.subr.bf16.mxu0 0
        %1950 = vmatpush1.bf16.msra.mxu0 0
        %1951 = vmatprep.subr.bf16.mxu0 0
        %1952 = vmatpush1.bf16.msra.mxu0 0
        %1953 = vmatprep.subr.bf16.mxu0 0
        %1954 = vmatpush1.bf16.msra.mxu0 0
        %1955 = vmatprep.subr.bf16.mxu0 0
        %1956 = vmatpush1.bf16.msra.mxu0 0
        %1957 = vmatprep.subr.bf16.mxu0 0
        %1958 = vmatpush1.bf16.msra.mxu0 0
        %1959 = vmatprep.subr.bf16.mxu0 0
        %1960 = vmatpush1.bf16.msra.mxu0 0
        %1961 = vmatprep.subr.bf16.mxu0 0
        %1962 = vmatpush1.bf16.msra.mxu0 0
        %1963 = vmatprep.mubr.bf16.mxu0 0
        %1964 = vmatmul.mubr.bf16.gmra.mrb[0].mxu0 %v1881
        %v1965 = vpop.f32.mrb[0].mxu0
        %v1966 = vadd.f32 0.0, %v1965
        %v1967 = vpop.f32.mrb[0].mxu0
        %v1968 = vpop.f32.mrb[0].mxu0
        %v1969 = vadd.f32 0.0, %v1968
        %v1970 = vpop.f32.mrb[0].mxu0
        %1971 = vmatprep.mubr.bf16.mxu0 0
        %1972 = vmatmul.mubr.bf16.gmra.mrb[0].mxu0 %v1884
        %v1973 = vpop.f32.mrb[0].mxu0
        %v1974 = vadd.f32 0.0, %v1973
        %v1975 = vpop.f32.mrb[0].mxu0
        %v1976 = vpop.f32.mrb[0].mxu0
        %v1977 = vadd.f32 0.0, %v1976
        %v1978 = vpop.f32.mrb[0].mxu0
        %1979 = vmatprep.mubr.bf16.mxu0 0
        %1980 = vmatmul.mubr.bf16.gmra.mrb[0].mxu0 %v1887
        %v1981 = vpop.f32.mrb[0].mxu0
        %v1982 = vadd.f32 0.0, %v1981
        %v1983 = vpop.f32.mrb[0].mxu0
        %v1984 = vpop.f32.mrb[0].mxu0
        %v1985 = vadd.f32 0.0, %v1984
        %v1986 = vpop.f32.mrb[0].mxu0
        %1987 = vmatprep.mubr.bf16.mxu0 0
        %1988 = vmatmul.mubr.bf16.gmra.mrb[0].mxu0 %v1890
        %v1989 = vpop.f32.mrb[0].mxu0
        %v1990 = vadd.f32 0.0, %v1989
        %v1991 = vpop.f32.mrb[0].mxu0
        %v1992 = vpop.f32.mrb[0].mxu0
        %v1993 = vadd.f32 0.0, %v1992
        %v1994 = vpop.f32.mrb[0].mxu0
        %1995 = vmatprep.mubr.bf16.mxu0 0
        %1996 = vmatmul.mubr.bf16.gmra.mrb[0].mxu0 %v1893
        %v1997 = vpop.f32.mrb[0].mxu0
        %v1998 = vadd.f32 0.0, %v1997
        %v1999 = vpop.f32.mrb[0].mxu0
        %v2000 = vpop.f32.mrb[0].mxu0
        %v2001 = vadd.f32 0.0, %v2000
        %v2002 = vpop.f32.mrb[0].mxu0
        %2003 = vmatprep.mubr.bf16.mxu0 0
        %2004 = vmatmul.mubr.bf16.gmra.mrb[0].mxu0 %v1896
        %v2005 = vpop.f32.mrb[0].mxu0
        %v2006 = vadd.f32 0.0, %v2005
        %v2007 = vpop.f32.mrb[0].mxu0
        %v2008 = vpop.f32.mrb[0].mxu0
        %v2009 = vadd.f32 0.0, %v2008
        %v2010 = vpop.f32.mrb[0].mxu0
        %2011 = vmatprep.mubr.bf16.mxu0 0
        %2012 = vmatmul.mubr.bf16.gmra.mrb[0].mxu0 %v1899
        %v2013 = vpop.f32.mrb[0].mxu0
        %v2014 = vadd.f32 0.0, %v2013
        %v2015 = vpop.f32.mrb[0].mxu0
        %v2016 = vpop.f32.mrb[0].mxu0
        %v2017 = vadd.f32 0.0, %v2016
        %v2018 = vpop.f32.mrb[0].mxu0
        %2019 = vmatprep.mubr.bf16.mxu0 0
        %2020 = vmatmul.mubr.bf16.gmra.mrb[0].mxu0 %v1902
        %v2021 = vpop.f32.mrb[0].mxu0
        %v2022 = vadd.f32 0.0, %v2021
        %v2023 = vpop.f32.mrb[0].mxu0
        %v2024 = vpop.f32.mrb[0].mxu0
        %v2025 = vadd.f32 0.0, %v2024
        %v2026 = vpop.f32.mrb[0].mxu0
        %2027 = vmatprep.mubr.bf16.mxu0 0
        %2028 = vmatmul.mubr.bf16.gmra.mrb[0].mxu0 %v1905
        %v2029 = vpop.f32.mrb[0].mxu0
        %v2030 = vadd.f32 0.0, %v2029
        %v2031 = vpop.f32.mrb[0].mxu0
        %v2032 = vpop.f32.mrb[0].mxu0
        %v2033 = vadd.f32 0.0, %v2032
        %v2034 = vpop.f32.mrb[0].mxu0
        %2035 = vmatprep.mubr.bf16.mxu0 0
        %2036 = vmatmul.mubr.bf16.gmra.mrb[0].mxu0 %v1908
        %v2037 = vpop.f32.mrb[0].mxu0
        %v2038 = vadd.f32 0.0, %v2037
        %v2039 = vpop.f32.mrb[0].mxu0
        %v2040 = vpop.f32.mrb[0].mxu0
        %v2041 = vadd.f32 0.0, %v2040
        %v2042 = vpop.f32.mrb[0].mxu0
        %2043 = vmatprep.mubr.bf16.mxu0 0
        %2044 = vmatmul.mubr.bf16.gmra.mrb[0].mxu0 %v1911
        %v2045 = vpop.f32.mrb[0].mxu0
        %v2046 = vadd.f32 0.0, %v2045
        %v2047 = vpop.f32.mrb[0].mxu0
        %v2048 = vpop.f32.mrb[0].mxu0
        %v2049 = vadd.f32 0.0, %v2048
        %v2050 = vpop.f32.mrb[0].mxu0
        %2051 = vmatprep.mubr.bf16.mxu0 0
        %2052 = vmatmul.mubr.bf16.gmra.mrb[0].mxu0 %v1914
        %v2053 = vpop.f32.mrb[0].mxu0
        %v2054 = vadd.f32 0.0, %v2053
        %v2055 = vpop.f32.mrb[0].mxu0
        %v2056 = vpop.f32.mrb[0].mxu0
        %v2057 = vadd.f32 0.0, %v2056
        %v2058 = vpop.f32.mrb[0].mxu0
        %2059 = vmatprep.mubr.bf16.mxu0 0
        %2060 = vmatmul.mubr.bf16.gmra.mrb[0].mxu0 %v1917
        %v2061 = vpop.f32.mrb[0].mxu0
        %v2062 = vadd.f32 0.0, %v2061
        %v2063 = vpop.f32.mrb[0].mxu0
        %v2064 = vpop.f32.mrb[0].mxu0
        %v2065 = vadd.f32 0.0, %v2064
        %v2066 = vpop.f32.mrb[0].mxu0
        %2067 = vmatprep.mubr.bf16.mxu0 0
        %2068 = vmatmul.mubr.bf16.gmra.mrb[0].mxu0 %v1920
        %v2069 = vpop.f32.mrb[0].mxu0
        %v2070 = vadd.f32 0.0, %v2069
        %v2071 = vpop.f32.mrb[0].mxu0
        %v2072 = vpop.f32.mrb[0].mxu0
        %v2073 = vadd.f32 0.0, %v2072
        %v2074 = vpop.f32.mrb[0].mxu0
        %2075 = vmatprep.mubr.bf16.mxu0 0
        %2076 = vmatmul.mubr.bf16.gmra.mrb[0].mxu0 %v1923
        %v2077 = vpop.f32.mrb[0].mxu0
        %v2078 = vadd.f32 0.0, %v2077
        %v2079 = vpop.f32.mrb[0].mxu0
        %v2080 = vpop.f32.mrb[0].mxu0
        %v2081 = vadd.f32 0.0, %v2080
        %v2082 = vpop.f32.mrb[0].mxu0
        %2083 = vmatprep.mubr.bf16.mxu0 0
        %2084 = vmatmul.mubr.bf16.gmra.mrb[0].mxu0 %v1926
        %v2085 = vpop.f32.mrb[0].mxu0
        %v2086 = vadd.f32 0.0, %v2085
        %v2087 = vpop.f32.mrb[0].mxu0
        %v2088 = vpop.f32.mrb[0].mxu0
        %v2089 = vadd.f32 0.0, %v2088
        %v2090 = vpop.f32.mrb[0].mxu0
        %2091 = vdwg.mxu0
        %v2092 = vadd.f32 %v1541, %v1966
        %v2093 = vadd.f32 %v1544, %v1969
        %v2094 = vadd.f32 %v1549, %v1974
        %v2095 = vadd.f32 %v1552, %v1977
        %v2096 = vadd.f32 %v1557, %v1982
        %v2097 = vadd.f32 %v1560, %v1985
        %v2098 = vadd.f32 %v1565, %v1990
        %v2099 = vadd.f32 %v1568, %v1993
        %v2100 = vadd.f32 %v1573, %v1998
        %v2101 = vadd.f32 %v1576, %v2001
        %v2102 = vadd.f32 %v1581, %v2006
        %v2103 = vadd.f32 %v1584, %v2009
        %v2104 = vadd.f32 %v1589, %v2014
        %v2105 = vadd.f32 %v1592, %v2017
        %v2106 = vadd.f32 %v1597, %v2022
        %v2107 = vadd.f32 %v1600, %v2025
        %v2108 = vadd.f32 %v1605, %v2030
        %v2109 = vadd.f32 %v1608, %v2033
        %v2110 = vadd.f32 %v1613, %v2038
        %v2111 = vadd.f32 %v1616, %v2041
        %v2112 = vadd.f32 %v1621, %v2046
        %v2113 = vadd.f32 %v1624, %v2049
        %v2114 = vadd.f32 %v1629, %v2054
        %v2115 = vadd.f32 %v1632, %v2057
        %v2116 = vadd.f32 %v1637, %v2062
        %v2117 = vadd.f32 %v1640, %v2065
        %v2118 = vadd.f32 %v1645, %v2070
        %v2119 = vadd.f32 %v1648, %v2073
        %v2120 = vadd.f32 %v1653, %v2078
        %v2121 = vadd.f32 %v1656, %v2081
        %v2122 = vadd.f32 %v1661, %v2086
        %v2123 = vadd.f32 %v1664, %v2089
        %v2124 = vld [vmem:[%s554] sm:$0xf]
        %v2125 = vld [vmem:[%s554 + $0x4] sm:$0xf]
        %v2126 = vld [vmem:[%s554 + $0xc] sm:$0xf]
        %v2127 = vld [vmem:[%s554 + $0x10] sm:$0xf]
        %v2128 = vld [vmem:[%s554 + $0x18] sm:$0xf]
        %v2129 = vld [vmem:[%s554 + $0x1c] sm:$0xf]
        %v2130 = vld [vmem:[%s554 + $0x24] sm:$0xf]
        %v2131 = vld [vmem:[%s554 + $0x28] sm:$0xf]
        %v2132 = vld [vmem:[%s554 + $0x30] sm:$0xf]
        %v2133 = vld [vmem:[%s554 + $0x34] sm:$0xf]
        %v2134 = vld [vmem:[%s554 + $0x3c] sm:$0xf]
        %v2135 = vld [vmem:[%s554 + $0x40] sm:$0xf]
        %v2136 = vld [vmem:[%s554 + $0x48] sm:$0xf]
        %v2137 = vld [vmem:[%s554 + $0x4c] sm:$0xf]
        %v2138 = vld [vmem:[%s554 + $0x54] sm:$0xf]
        %v2139 = vld [vmem:[%s554 + $0x58] sm:$0xf]
        %v2140 = vld [vmem:[%s554 + $0x60] sm:$0xf]
        %v2141 = vld [vmem:[%s554 + $0x64] sm:$0xf]
        %v2142 = vld [vmem:[%s554 + $0x6c] sm:$0xf]
        %v2143 = vld [vmem:[%s554 + $0x70] sm:$0xf]
        %v2144 = vld [vmem:[%s554 + $0x78] sm:$0xf]
        %v2145 = vld [vmem:[%s554 + $0x7c] sm:$0xf]
        %v2146 = vld [vmem:[%s554 + $0x84] sm:$0xf]
        %v2147 = vld [vmem:[%s554 + $0x88] sm:$0xf]
        %v2148 = vld [vmem:[%s554 + $0x90] sm:$0xf]
        %v2149 = vld [vmem:[%s554 + $0x94] sm:$0xf]
        %v2150 = vld [vmem:[%s554 + $0x9c] sm:$0xf]
        %v2151 = vld [vmem:[%s554 + $0xa0] sm:$0xf]
        %v2152 = vld [vmem:[%s554 + $0xa8] sm:$0xf]
        %v2153 = vld [vmem:[%s554 + $0xac] sm:$0xf]
        %v2154 = vld [vmem:[%s554 + $0xb4] sm:$0xf]
        %v2155 = vld [vmem:[%s554 + $0xb8] sm:$0xf]
        %s2156 = scalar_lea.vmem %s1, 6
        %v2157 = vld [vmem:[%s2156] sm:$0x3]
        %v2190 = vunpack.c.l.b16 %v2124
        %v2191 = vunpack.c.l.b16 %v2125
        %v2192 = vunpack.c.l.b16 %v2126
        %v2193 = vunpack.c.l.b16 %v2127
        %v2194 = vunpack.c.l.b16 %v2128
        %v2195 = vunpack.c.l.b16 %v2129
        %v2196 = vunpack.c.l.b16 %v2130
        %v2197 = vunpack.c.l.b16 %v2131
        %v2198 = vunpack.c.l.b16 %v2132
        %v2199 = vunpack.c.l.b16 %v2133
        %v2200 = vunpack.c.l.b16 %v2134
        %v2201 = vunpack.c.l.b16 %v2135
        %v2202 = vunpack.c.l.b16 %v2136
        %v2203 = vunpack.c.l.b16 %v2137
        %v2204 = vunpack.c.l.b16 %v2138
        %v2205 = vunpack.c.l.b16 %v2139
        %v2206 = vunpack.c.l.b16 %v2140
        %v2207 = vunpack.c.l.b16 %v2141
        %v2208 = vunpack.c.l.b16 %v2142
        %v2209 = vunpack.c.l.b16 %v2143
        %v2210 = vunpack.c.l.b16 %v2144
        %v2211 = vunpack.c.l.b16 %v2145
        %v2212 = vunpack.c.l.b16 %v2146
        %v2213 = vunpack.c.l.b16 %v2147
        %v2214 = vunpack.c.l.b16 %v2148
        %v2215 = vunpack.c.l.b16 %v2149
        %v2216 = vunpack.c.l.b16 %v2150
        %v2217 = vunpack.c.l.b16 %v2151
        %v2218 = vunpack.c.l.b16 %v2152
        %v2219 = vunpack.c.l.b16 %v2153
        %v2220 = vunpack.c.l.b16 %v2154
        %v2221 = vunpack.c.l.b16 %v2155
        %v2222 = vpack.c.b16 %v2191, %v2190
        %v2223 = vpack.c.b16 %v2193, %v2192
        %v2224 = vpack.c.b16 %v2195, %v2194
        %v2225 = vpack.c.b16 %v2197, %v2196
        %v2226 = vpack.c.b16 %v2199, %v2198
        %v2227 = vpack.c.b16 %v2201, %v2200
        %v2228 = vpack.c.b16 %v2203, %v2202
        %v2229 = vpack.c.b16 %v2205, %v2204
        %v2230 = vpack.c.b16 %v2207, %v2206
        %v2231 = vpack.c.b16 %v2209, %v2208
        %v2232 = vpack.c.b16 %v2211, %v2210
        %v2233 = vpack.c.b16 %v2213, %v2212
        %v2234 = vpack.c.b16 %v2215, %v2214
        %v2235 = vpack.c.b16 %v2217, %v2216
        %v2236 = vpack.c.b16 %v2219, %v2218
        %v2237 = vpack.c.b16 %v2221, %v2220
        %v2239 = vsel %vm1158, %v2222, 0
        %v2242 = vsel %vm1158, %v2223, 0
        %v2245 = vsel %vm1158, %v2224, 0
        %v2248 = vsel %vm1158, %v2225, 0
        %v2251 = vsel %vm1158, %v2226, 0
        %v2254 = vsel %vm1158, %v2227, 0
        %v2257 = vsel %vm1158, %v2228, 0
        %v2260 = vsel %vm1158, %v2229, 0
        %v2263 = vsel %vm1158, %v2230, 0
        %v2266 = vsel %vm1158, %v2231, 0
        %v2269 = vsel %vm1158, %v2232, 0
        %v2272 = vsel %vm1158, %v2233, 0
        %v2275 = vsel %vm1158, %v2234, 0
        %v2278 = vsel %vm1158, %v2235, 0
        %v2281 = vsel %vm1158, %v2236, 0
        %v2284 = vsel %vm1158, %v2237, 0
        %v2287 = vand.u32 %v2157, %v1210
        %2289 = vmatprep.subr.bf16.mxu0 0
        %2290 = vmatpush1.bf16.msra.mxu0 %v2287
        %2291 = vmatprep.subr.bf16.mxu0 0
        %2292 = vmatpush1.bf16.msra.mxu0 0
        %2293 = vmatprep.subr.bf16.mxu0 0
        %2294 = vmatpush1.bf16.msra.mxu0 0
        %2295 = vmatprep.subr.bf16.mxu0 0
        %2296 = vmatpush1.bf16.msra.mxu0 0
        %2297 = vmatprep.subr.bf16.mxu0 0
        %2298 = vmatpush1.bf16.msra.mxu0 0
        %2299 = vmatprep.subr.bf16.mxu0 0
        %2300 = vmatpush1.bf16.msra.mxu0 0
        %2301 = vmatprep.subr.bf16.mxu0 0
        %2302 = vmatpush1.bf16.msra.mxu0 0
        %2303 = vmatprep.subr.bf16.mxu0 0
        %2304 = vmatpush1.bf16.msra.mxu0 0
        %2305 = vmatprep.subr.bf16.mxu0 0
        %2306 = vmatpush1.bf16.msra.mxu0 0
        %2307 = vmatprep.subr.bf16.mxu0 0
        %2308 = vmatpush1.bf16.msra.mxu0 0
        %2309 = vmatprep.subr.bf16.mxu0 0
        %2310 = vmatpush1.bf16.msra.mxu0 0
        %2311 = vmatprep.subr.bf16.mxu0 0
        %2312 = vmatpush1.bf16.msra.mxu0 0
        %2313 = vmatprep.subr.bf16.mxu0 0
        %2314 = vmatpush1.bf16.msra.mxu0 0
        %2315 = vmatprep.subr.bf16.mxu0 0
        %2316 = vmatpush1.bf16.msra.mxu0 0
        %2317 = vmatprep.subr.bf16.mxu0 0
        %2318 = vmatpush1.bf16.msra.mxu0 0
        %2319 = vmatprep.subr.bf16.mxu0 0
        %2320 = vmatpush1.bf16.msra.mxu0 0
        %2321 = vmatprep.mubr.bf16.mxu0 0
        %2322 = vmatmul.mubr.bf16.gmra.mrb[0].mxu0 %v2239
        %v2323 = vpop.f32.mrb[0].mxu0
        %v2324 = vadd.f32 0.0, %v2323
        %v2325 = vpop.f32.mrb[0].mxu0
        %v2326 = vpop.f32.mrb[0].mxu0
        %v2327 = vadd.f32 0.0, %v2326
        %v2328 = vpop.f32.mrb[0].mxu0
        %2329 = vmatprep.mubr.bf16.mxu0 0
        %2330 = vmatmul.mubr.bf16.gmra.mrb[0].mxu0 %v2242
        %v2331 = vpop.f32.mrb[0].mxu0
        %v2332 = vadd.f32 0.0, %v2331
        %v2333 = vpop.f32.mrb[0].mxu0
        %v2334 = vpop.f32.mrb[0].mxu0
        %v2335 = vadd.f32 0.0, %v2334
        %v2336 = vpop.f32.mrb[0].mxu0
        %2337 = vmatprep.mubr.bf16.mxu0 0
        %2338 = vmatmul.mubr.bf16.gmra.mrb[0].mxu0 %v2245
        %v2339 = vpop.f32.mrb[0].mxu0
        %v2340 = vadd.f32 0.0, %v2339
        %v2341 = vpop.f32.mrb[0].mxu0
        %v2342 = vpop.f32.mrb[0].mxu0
        %v2343 = vadd.f32 0.0, %v2342
        %v2344 = vpop.f32.mrb[0].mxu0
        %2345 = vmatprep.mubr.bf16.mxu0 0
        %2346 = vmatmul.mubr.bf16.gmra.mrb[0].mxu0 %v2248
        %v2347 = vpop.f32.mrb[0].mxu0
        %v2348 = vadd.f32 0.0, %v2347
        %v2349 = vpop.f32.mrb[0].mxu0
        %v2350 = vpop.f32.mrb[0].mxu0
        %v2351 = vadd.f32 0.0, %v2350
        %v2352 = vpop.f32.mrb[0].mxu0
        %2353 = vmatprep.mubr.bf16.mxu0 0
        %2354 = vmatmul.mubr.bf16.gmra.mrb[0].mxu0 %v2251
        %v2355 = vpop.f32.mrb[0].mxu0
        %v2356 = vadd.f32 0.0, %v2355
        %v2357 = vpop.f32.mrb[0].mxu0
        %v2358 = vpop.f32.mrb[0].mxu0
        %v2359 = vadd.f32 0.0, %v2358
        %v2360 = vpop.f32.mrb[0].mxu0
        %2361 = vmatprep.mubr.bf16.mxu0 0
        %2362 = vmatmul.mubr.bf16.gmra.mrb[0].mxu0 %v2254
        %v2363 = vpop.f32.mrb[0].mxu0
        %v2364 = vadd.f32 0.0, %v2363
        %v2365 = vpop.f32.mrb[0].mxu0
        %v2366 = vpop.f32.mrb[0].mxu0
        %v2367 = vadd.f32 0.0, %v2366
        %v2368 = vpop.f32.mrb[0].mxu0
        %2369 = vmatprep.mubr.bf16.mxu0 0
        %2370 = vmatmul.mubr.bf16.gmra.mrb[0].mxu0 %v2257
        %v2371 = vpop.f32.mrb[0].mxu0
        %v2372 = vadd.f32 0.0, %v2371
        %v2373 = vpop.f32.mrb[0].mxu0
        %v2374 = vpop.f32.mrb[0].mxu0
        %v2375 = vadd.f32 0.0, %v2374
        %v2376 = vpop.f32.mrb[0].mxu0
        %2377 = vmatprep.mubr.bf16.mxu0 0
        %2378 = vmatmul.mubr.bf16.gmra.mrb[0].mxu0 %v2260
        %v2379 = vpop.f32.mrb[0].mxu0
        %v2380 = vadd.f32 0.0, %v2379
        %v2381 = vpop.f32.mrb[0].mxu0
        %v2382 = vpop.f32.mrb[0].mxu0
        %v2383 = vadd.f32 0.0, %v2382
        %v2384 = vpop.f32.mrb[0].mxu0
        %2385 = vmatprep.mubr.bf16.mxu0 0
        %2386 = vmatmul.mubr.bf16.gmra.mrb[0].mxu0 %v2263
        %v2387 = vpop.f32.mrb[0].mxu0
        %v2388 = vadd.f32 0.0, %v2387
        %v2389 = vpop.f32.mrb[0].mxu0
        %v2390 = vpop.f32.mrb[0].mxu0
        %v2391 = vadd.f32 0.0, %v2390
        %v2392 = vpop.f32.mrb[0].mxu0
        %2393 = vmatprep.mubr.bf16.mxu0 0
        %2394 = vmatmul.mubr.bf16.gmra.mrb[0].mxu0 %v2266
        %v2395 = vpop.f32.mrb[0].mxu0
        %v2396 = vadd.f32 0.0, %v2395
        %v2397 = vpop.f32.mrb[0].mxu0
        %v2398 = vpop.f32.mrb[0].mxu0
        %v2399 = vadd.f32 0.0, %v2398
        %v2400 = vpop.f32.mrb[0].mxu0
        %2401 = vmatprep.mubr.bf16.mxu0 0
        %2402 = vmatmul.mubr.bf16.gmra.mrb[0].mxu0 %v2269
        %v2403 = vpop.f32.mrb[0].mxu0
        %v2404 = vadd.f32 0.0, %v2403
        %v2405 = vpop.f32.mrb[0].mxu0
        %v2406 = vpop.f32.mrb[0].mxu0
        %v2407 = vadd.f32 0.0, %v2406
        %v2408 = vpop.f32.mrb[0].mxu0
        %2409 = vmatprep.mubr.bf16.mxu0 0
        %2410 = vmatmul.mubr.bf16.gmra.mrb[0].mxu0 %v2272
        %v2411 = vpop.f32.mrb[0].mxu0
        %v2412 = vadd.f32 0.0, %v2411
        %v2413 = vpop.f32.mrb[0].mxu0
        %v2414 = vpop.f32.mrb[0].mxu0
        %v2415 = vadd.f32 0.0, %v2414
        %v2416 = vpop.f32.mrb[0].mxu0
        %2417 = vmatprep.mubr.bf16.mxu0 0
        %2418 = vmatmul.mubr.bf16.gmra.mrb[0].mxu0 %v2275
        %v2419 = vpop.f32.mrb[0].mxu0
        %v2420 = vadd.f32 0.0, %v2419
        %v2421 = vpop.f32.mrb[0].mxu0
        %v2422 = vpop.f32.mrb[0].mxu0
        %v2423 = vadd.f32 0.0, %v2422
        %v2424 = vpop.f32.mrb[0].mxu0
        %2425 = vmatprep.mubr.bf16.mxu0 0
        %2426 = vmatmul.mubr.bf16.gmra.mrb[0].mxu0 %v2278
        %v2427 = vpop.f32.mrb[0].mxu0
        %v2428 = vadd.f32 0.0, %v2427
        %v2429 = vpop.f32.mrb[0].mxu0
        %v2430 = vpop.f32.mrb[0].mxu0
        %v2431 = vadd.f32 0.0, %v2430
        %v2432 = vpop.f32.mrb[0].mxu0
        %2433 = vmatprep.mubr.bf16.mxu0 0
        %2434 = vmatmul.mubr.bf16.gmra.mrb[0].mxu0 %v2281
        %v2435 = vpop.f32.mrb[0].mxu0
        %v2436 = vadd.f32 0.0, %v2435
        %v2437 = vpop.f32.mrb[0].mxu0
        %v2438 = vpop.f32.mrb[0].mxu0
        %v2439 = vadd.f32 0.0, %v2438
        %v2440 = vpop.f32.mrb[0].mxu0
        %2441 = vmatprep.mubr.bf16.mxu0 0
        %2442 = vmatmul.mubr.bf16.gmra.mrb[0].mxu0 %v2284
        %v2443 = vpop.f32.mrb[0].mxu0
        %v2444 = vadd.f32 0.0, %v2443
        %v2445 = vpop.f32.mrb[0].mxu0
        %v2446 = vpop.f32.mrb[0].mxu0
        %v2447 = vadd.f32 0.0, %v2446
        %v2448 = vpop.f32.mrb[0].mxu0
        %2449 = vdwg.mxu0
        %v2450 = vadd.f32 %v2092, %v2324
        %v2451 = vadd.f32 %v2093, %v2327
        %v2452 = vadd.f32 %v2094, %v2332
        %v2453 = vadd.f32 %v2095, %v2335
        %v2454 = vadd.f32 %v2096, %v2340
        %v2455 = vadd.f32 %v2097, %v2343
        %v2456 = vadd.f32 %v2098, %v2348
        %v2457 = vadd.f32 %v2099, %v2351
        %v2458 = vadd.f32 %v2100, %v2356
        %v2459 = vadd.f32 %v2101, %v2359
        %v2460 = vadd.f32 %v2102, %v2364
        %v2461 = vadd.f32 %v2103, %v2367
        %v2462 = vadd.f32 %v2104, %v2372
        %v2463 = vadd.f32 %v2105, %v2375
        %v2464 = vadd.f32 %v2106, %v2380
        %v2465 = vadd.f32 %v2107, %v2383
        %v2466 = vadd.f32 %v2108, %v2388
        %v2467 = vadd.f32 %v2109, %v2391
        %v2468 = vadd.f32 %v2110, %v2396
        %v2469 = vadd.f32 %v2111, %v2399
        %v2470 = vadd.f32 %v2112, %v2404
        %v2471 = vadd.f32 %v2113, %v2407
        %v2472 = vadd.f32 %v2114, %v2412
        %v2473 = vadd.f32 %v2115, %v2415
        %v2474 = vadd.f32 %v2116, %v2420
        %v2475 = vadd.f32 %v2117, %v2423
        %v2476 = vadd.f32 %v2118, %v2428
        %v2477 = vadd.f32 %v2119, %v2431
        %v2478 = vadd.f32 %v2120, %v2436
        %v2479 = vadd.f32 %v2121, %v2439
        %v2480 = vadd.f32 %v2122, %v2444
        %v2481 = vadd.f32 %v2123, %v2447
        %v2482 = vld [vmem:[%s554] sm:$0xf]
        %v2483 = vld [vmem:[%s554 + $0x4] sm:$0xf]
        %v2484 = vld [vmem:[%s554 + $0x8] sm:$0x1]
        %v2485 = vld [vmem:[%s554 + $0xc] sm:$0xf]
        %v2486 = vld [vmem:[%s554 + $0x10] sm:$0xf]
        %v2487 = vld [vmem:[%s554 + $0x14] sm:$0x1]
        %v2488 = vld [vmem:[%s554 + $0x18] sm:$0xf]
        %v2489 = vld [vmem:[%s554 + $0x1c] sm:$0xf]
        %v2490 = vld [vmem:[%s554 + $0x20] sm:$0x1]
        %v2491 = vld [vmem:[%s554 + $0x24] sm:$0xf]
        %v2492 = vld [vmem:[%s554 + $0x28] sm:$0xf]
        %v2493 = vld [vmem:[%s554 + $0x2c] sm:$0x1]
        %v2494 = vld [vmem:[%s554 + $0x30] sm:$0xf]
        %v2495 = vld [vmem:[%s554 + $0x34] sm:$0xf]
        %v2496 = vld [vmem:[%s554 + $0x38] sm:$0x1]
        %v2497 = vld [vmem:[%s554 + $0x3c] sm:$0xf]
        %v2498 = vld [vmem:[%s554 + $0x40] sm:$0xf]
        %v2499 = vld [vmem:[%s554 + $0x44] sm:$0x1]
        %v2500 = vld [vmem:[%s554 + $0x48] sm:$0xf]
        %v2501 = vld [vmem:[%s554 + $0x4c] sm:$0xf]
        %v2502 = vld [vmem:[%s554 + $0x50] sm:$0x1]
        %v2503 = vld [vmem:[%s554 + $0x54] sm:$0xf]
        %v2504 = vld [vmem:[%s554 + $0x58] sm:$0xf]
        %v2505 = vld [vmem:[%s554 + $0x5c] sm:$0x1]
        %v2506 = vld [vmem:[%s554 + $0x60] sm:$0xf]
        %v2507 = vld [vmem:[%s554 + $0x64] sm:$0xf]
        %v2508 = vld [vmem:[%s554 + $0x68] sm:$0x1]
        %v2509 = vld [vmem:[%s554 + $0x6c] sm:$0xf]
        %v2510 = vld [vmem:[%s554 + $0x70] sm:$0xf]
        %v2511 = vld [vmem:[%s554 + $0x74] sm:$0x1]
        %v2512 = vld [vmem:[%s554 + $0x78] sm:$0xf]
        %v2513 = vld [vmem:[%s554 + $0x7c] sm:$0xf]
        %v2514 = vld [vmem:[%s554 + $0x80] sm:$0x1]
        %v2515 = vld [vmem:[%s554 + $0x84] sm:$0xf]
        %v2516 = vld [vmem:[%s554 + $0x88] sm:$0xf]
        %v2517 = vld [vmem:[%s554 + $0x8c] sm:$0x1]
        %v2518 = vld [vmem:[%s554 + $0x90] sm:$0xf]
        %v2519 = vld [vmem:[%s554 + $0x94] sm:$0xf]
        %v2520 = vld [vmem:[%s554 + $0x98] sm:$0x1]
        %v2521 = vld [vmem:[%s554 + $0x9c] sm:$0xf]
        %v2522 = vld [vmem:[%s554 + $0xa0] sm:$0xf]
        %v2523 = vld [vmem:[%s554 + $0xa4] sm:$0x1]
        %v2524 = vld [vmem:[%s554 + $0xa8] sm:$0xf]
        %v2525 = vld [vmem:[%s554 + $0xac] sm:$0xf]
        %v2526 = vld [vmem:[%s554 + $0xb0] sm:$0x1]
        %v2527 = vld [vmem:[%s554 + $0xb4] sm:$0xf]
        %v2528 = vld [vmem:[%s554 + $0xb8] sm:$0xf]
        %v2529 = vld [vmem:[%s554 + $0xbc] sm:$0x1]
        %v2531 = vshrl.u32 %v2482, 16
        %v2533 = vrot.slane %v2531, 4
        %v2534 = vshll.u32 %v2482, 16
        %v2536 = vrot.slane %v2534, 5
        %v2537 = vor.u32 %v2533, %v2536
        %v2538 = vrot.slane %v2537, 4
        %v2540 = vshll.u32 %v2483, 16
        %v2542 = vrot.slane %v2540, 5
        %v2543 = vsel %vm723, %v2538, %v2542
        %v2544 = vshrl.u32 %v2483, 16
        %v2546 = vrot.slane %v2544, 4
        %v2547 = vor.u32 %v2546, %v2542
        %v2548 = vrot.slane %v2547, 4
        %v2550 = vshll.u32 %v2484, 16
        %v2552 = vrot.slane %v2550, 5
        %v2553 = vsel %vm723, %v2548, %v2552
        %v2555 = vshrl.u32 %v2485, 16
        %v2557 = vrot.slane %v2555, 4
        %v2558 = vshll.u32 %v2485, 16
        %v2560 = vrot.slane %v2558, 5
        %v2561 = vor.u32 %v2557, %v2560
        %v2562 = vrot.slane %v2561, 4
        %v2564 = vshll.u32 %v2486, 16
        %v2566 = vrot.slane %v2564, 5
        %v2567 = vsel %vm723, %v2562, %v2566
        %v2568 = vshrl.u32 %v2486, 16
        %v2570 = vrot.slane %v2568, 4
        %v2571 = vor.u32 %v2570, %v2566
        %v2572 = vrot.slane %v2571, 4
        %v2574 = vshll.u32 %v2487, 16
        %v2576 = vrot.slane %v2574, 5
        %v2577 = vsel %vm723, %v2572, %v2576
        %v2579 = vshrl.u32 %v2488, 16
        %v2581 = vrot.slane %v2579, 4
        %v2582 = vshll.u32 %v2488, 16
        %v2584 = vrot.slane %v2582, 5
        %v2585 = vor.u32 %v2581, %v2584
        %v2586 = vrot.slane %v2585, 4
        %v2588 = vshll.u32 %v2489, 16
        %v2590 = vrot.slane %v2588, 5
        %v2591 = vsel %vm723, %v2586, %v2590
        %v2592 = vshrl.u32 %v2489, 16
        %v2594 = vrot.slane %v2592, 4
        %v2595 = vor.u32 %v2594, %v2590
        %v2596 = vrot.slane %v2595, 4
        %v2598 = vshll.u32 %v2490, 16
        %v2600 = vrot.slane %v2598, 5
        %v2601 = vsel %vm723, %v2596, %v2600
        %v2603 = vshrl.u32 %v2491, 16
        %v2605 = vrot.slane %v2603, 4
        %v2606 = vshll.u32 %v2491, 16
        %v2608 = vrot.slane %v2606, 5
        %v2609 = vor.u32 %v2605, %v2608
        %v2610 = vrot.slane %v2609, 4
        %v2612 = vshll.u32 %v2492, 16
        %v2614 = vrot.slane %v2612, 5
        %v2615 = vsel %vm723, %v2610, %v2614
        %v2616 = vshrl.u32 %v2492, 16
        %v2618 = vrot.slane %v2616, 4
        %v2619 = vor.u32 %v2618, %v2614
        %v2620 = vrot.slane %v2619, 4
        %v2622 = vshll.u32 %v2493, 16
        %v2624 = vrot.slane %v2622, 5
        %v2625 = vsel %vm723, %v2620, %v2624
        %v2627 = vshrl.u32 %v2494, 16
        %v2629 = vrot.slane %v2627, 4
        %v2630 = vshll.u32 %v2494, 16
        %v2632 = vrot.slane %v2630, 5
        %v2633 = vor.u32 %v2629, %v2632
        %v2634 = vrot.slane %v2633, 4
        %v2636 = vshll.u32 %v2495, 16
        %v2638 = vrot.slane %v2636, 5
        %v2639 = vsel %vm723, %v2634, %v2638
        %v2640 = vshrl.u32 %v2495, 16
        %v2642 = vrot.slane %v2640, 4
        %v2643 = vor.u32 %v2642, %v2638
        %v2644 = vrot.slane %v2643, 4
        %v2646 = vshll.u32 %v2496, 16
        %v2648 = vrot.slane %v2646, 5
        %v2649 = vsel %vm723, %v2644, %v2648
        %v2651 = vshrl.u32 %v2497, 16
        %v2653 = vrot.slane %v2651, 4
        %v2654 = vshll.u32 %v2497, 16
        %v2656 = vrot.slane %v2654, 5
        %v2657 = vor.u32 %v2653, %v2656
        %v2658 = vrot.slane %v2657, 4
        %v2660 = vshll.u32 %v2498, 16
        %v2662 = vrot.slane %v2660, 5
        %v2663 = vsel %vm723, %v2658, %v2662
        %v2664 = vshrl.u32 %v2498, 16
        %v2666 = vrot.slane %v2664, 4
        %v2667 = vor.u32 %v2666, %v2662
        %v2668 = vrot.slane %v2667, 4
        %v2670 = vshll.u32 %v2499, 16
        %v2672 = vrot.slane %v2670, 5
        %v2673 = vsel %vm723, %v2668, %v2672
        %v2675 = vshrl.u32 %v2500, 16
        %v2677 = vrot.slane %v2675, 4
        %v2678 = vshll.u32 %v2500, 16
        %v2680 = vrot.slane %v2678, 5
        %v2681 = vor.u32 %v2677, %v2680
        %v2682 = vrot.slane %v2681, 4
        %v2684 = vshll.u32 %v2501, 16
        %v2686 = vrot.slane %v2684, 5
        %v2687 = vsel %vm723, %v2682, %v2686
        %v2688 = vshrl.u32 %v2501, 16
        %v2690 = vrot.slane %v2688, 4
        %v2691 = vor.u32 %v2690, %v2686
        %v2692 = vrot.slane %v2691, 4
        %v2694 = vshll.u32 %v2502, 16
        %v2696 = vrot.slane %v2694, 5
        %v2697 = vsel %vm723, %v2692, %v2696
        %v2699 = vshrl.u32 %v2503, 16
        %v2701 = vrot.slane %v2699, 4
        %v2702 = vshll.u32 %v2503, 16
        %v2704 = vrot.slane %v2702, 5
        %v2705 = vor.u32 %v2701, %v2704
        %v2706 = vrot.slane %v2705, 4
        %v2708 = vshll.u32 %v2504, 16
        %v2710 = vrot.slane %v2708, 5
        %v2711 = vsel %vm723, %v2706, %v2710
        %v2712 = vshrl.u32 %v2504, 16
        %v2714 = vrot.slane %v2712, 4
        %v2715 = vor.u32 %v2714, %v2710
        %v2716 = vrot.slane %v2715, 4
        %v2718 = vshll.u32 %v2505, 16
        %v2720 = vrot.slane %v2718, 5
        %v2721 = vsel %vm723, %v2716, %v2720
        %v2723 = vshrl.u32 %v2506, 16
        %v2725 = vrot.slane %v2723, 4
        %v2726 = vshll.u32 %v2506, 16
        %v2728 = vrot.slane %v2726, 5
        %v2729 = vor.u32 %v2725, %v2728
        %v2730 = vrot.slane %v2729, 4
        %v2732 = vshll.u32 %v2507, 16
        %v2734 = vrot.slane %v2732, 5
        %v2735 = vsel %vm723, %v2730, %v2734
        %v2736 = vshrl.u32 %v2507, 16
        %v2738 = vrot.slane %v2736, 4
        %v2739 = vor.u32 %v2738, %v2734
        %v2740 = vrot.slane %v2739, 4
        %v2742 = vshll.u32 %v2508, 16
        %v2744 = vrot.slane %v2742, 5
        %v2745 = vsel %vm723, %v2740, %v2744
        %v2747 = vshrl.u32 %v2509, 16
        %v2749 = vrot.slane %v2747, 4
        %v2750 = vshll.u32 %v2509, 16
        %v2752 = vrot.slane %v2750, 5
        %v2753 = vor.u32 %v2749, %v2752
        %v2754 = vrot.slane %v2753, 4
        %v2756 = vshll.u32 %v2510, 16
        %v2758 = vrot.slane %v2756, 5
        %v2759 = vsel %vm723, %v2754, %v2758
        %v2760 = vshrl.u32 %v2510, 16
        %v2762 = vrot.slane %v2760, 4
        %v2763 = vor.u32 %v2762, %v2758
        %v2764 = vrot.slane %v2763, 4
        %v2766 = vshll.u32 %v2511, 16
        %v2768 = vrot.slane %v2766, 5
        %v2769 = vsel %vm723, %v2764, %v2768
        %v2771 = vshrl.u32 %v2512, 16
        %v2773 = vrot.slane %v2771, 4
        %v2774 = vshll.u32 %v2512, 16
        %v2776 = vrot.slane %v2774, 5
        %v2777 = vor.u32 %v2773, %v2776
        %v2778 = vrot.slane %v2777, 4
        %v2780 = vshll.u32 %v2513, 16
        %v2782 = vrot.slane %v2780, 5
        %v2783 = vsel %vm723, %v2778, %v2782
        %v2784 = vshrl.u32 %v2513, 16
        %v2786 = vrot.slane %v2784, 4
        %v2787 = vor.u32 %v2786, %v2782
        %v2788 = vrot.slane %v2787, 4
        %v2790 = vshll.u32 %v2514, 16
        %v2792 = vrot.slane %v2790, 5
        %v2793 = vsel %vm723, %v2788, %v2792
        %v2795 = vshrl.u32 %v2515, 16
        %v2797 = vrot.slane %v2795, 4
        %v2798 = vshll.u32 %v2515, 16
        %v2800 = vrot.slane %v2798, 5
        %v2801 = vor.u32 %v2797, %v2800
        %v2802 = vrot.slane %v2801, 4
        %v2804 = vshll.u32 %v2516, 16
        %v2806 = vrot.slane %v2804, 5
        %v2807 = vsel %vm723, %v2802, %v2806
        %v2808 = vshrl.u32 %v2516, 16
        %v2810 = vrot.slane %v2808, 4
        %v2811 = vor.u32 %v2810, %v2806
        %v2812 = vrot.slane %v2811, 4
        %v2814 = vshll.u32 %v2517, 16
        %v2816 = vrot.slane %v2814, 5
        %v2817 = vsel %vm723, %v2812, %v2816
        %v2819 = vshrl.u32 %v2518, 16
        %v2821 = vrot.slane %v2819, 4
        %v2822 = vshll.u32 %v2518, 16
        %v2824 = vrot.slane %v2822, 5
        %v2825 = vor.u32 %v2821, %v2824
        %v2826 = vrot.slane %v2825, 4
        %v2828 = vshll.u32 %v2519, 16
        %v2830 = vrot.slane %v2828, 5
        %v2831 = vsel %vm723, %v2826, %v2830
        %v2832 = vshrl.u32 %v2519, 16
        %v2834 = vrot.slane %v2832, 4
        %v2835 = vor.u32 %v2834, %v2830
        %v2836 = vrot.slane %v2835, 4
        %v2838 = vshll.u32 %v2520, 16
        %v2840 = vrot.slane %v2838, 5
        %v2841 = vsel %vm723, %v2836, %v2840
        %v2843 = vshrl.u32 %v2521, 16
        %v2845 = vrot.slane %v2843, 4
        %v2846 = vshll.u32 %v2521, 16
        %v2848 = vrot.slane %v2846, 5
        %v2849 = vor.u32 %v2845, %v2848
        %v2850 = vrot.slane %v2849, 4
        %v2852 = vshll.u32 %v2522, 16
        %v2854 = vrot.slane %v2852, 5
        %v2855 = vsel %vm723, %v2850, %v2854
        %v2856 = vshrl.u32 %v2522, 16
        %v2858 = vrot.slane %v2856, 4
        %v2859 = vor.u32 %v2858, %v2854
        %v2860 = vrot.slane %v2859, 4
        %v2862 = vshll.u32 %v2523, 16
        %v2864 = vrot.slane %v2862, 5
        %v2865 = vsel %vm723, %v2860, %v2864
        %v2867 = vshrl.u32 %v2524, 16
        %v2869 = vrot.slane %v2867, 4
        %v2870 = vshll.u32 %v2524, 16
        %v2872 = vrot.slane %v2870, 5
        %v2873 = vor.u32 %v2869, %v2872
        %v2874 = vrot.slane %v2873, 4
        %v2876 = vshll.u32 %v2525, 16
        %v2878 = vrot.slane %v2876, 5
        %v2879 = vsel %vm723, %v2874, %v2878
        %v2880 = vshrl.u32 %v2525, 16
        %v2882 = vrot.slane %v2880, 4
        %v2883 = vor.u32 %v2882, %v2878
        %v2884 = vrot.slane %v2883, 4
        %v2886 = vshll.u32 %v2526, 16
        %v2888 = vrot.slane %v2886, 5
        %v2889 = vsel %vm723, %v2884, %v2888
        %v2891 = vshrl.u32 %v2527, 16
        %v2893 = vrot.slane %v2891, 4
        %v2894 = vshll.u32 %v2527, 16
        %v2896 = vrot.slane %v2894, 5
        %v2897 = vor.u32 %v2893, %v2896
        %v2898 = vrot.slane %v2897, 4
        %v2900 = vshll.u32 %v2528, 16
        %v2902 = vrot.slane %v2900, 5
        %v2903 = vsel %vm723, %v2898, %v2902
        %v2904 = vshrl.u32 %v2528, 16
        %v2906 = vrot.slane %v2904, 4
        %v2907 = vor.u32 %v2906, %v2902
        %v2908 = vrot.slane %v2907, 4
        %v2910 = vshll.u32 %v2529, 16
        %v2912 = vrot.slane %v2910, 5
        %v2913 = vsel %vm723, %v2908, %v2912
        %s2914 = scalar_lea.vmem %s1, 8
        %v2915 = vld [vmem:[%s2914] sm:$0x3]
        %v2916 = vunpack.c.l.b16 %v2543
        %v2917 = vunpack.c.l.b16 %v2553
        %v2918 = vunpack.c.l.b16 %v2567
        %v2919 = vunpack.c.l.b16 %v2577
        %v2920 = vunpack.c.l.b16 %v2591
        %v2921 = vunpack.c.l.b16 %v2601
        %v2922 = vunpack.c.l.b16 %v2615
        %v2923 = vunpack.c.l.b16 %v2625
        %v2924 = vunpack.c.l.b16 %v2639
        %v2925 = vunpack.c.l.b16 %v2649
        %v2926 = vunpack.c.l.b16 %v2663
        %v2927 = vunpack.c.l.b16 %v2673
        %v2928 = vunpack.c.l.b16 %v2687
        %v2929 = vunpack.c.l.b16 %v2697
        %v2930 = vunpack.c.l.b16 %v2711
        %v2931 = vunpack.c.l.b16 %v2721
        %v2932 = vunpack.c.l.b16 %v2735
        %v2933 = vunpack.c.l.b16 %v2745
        %v2934 = vunpack.c.l.b16 %v2759
        %v2935 = vunpack.c.l.b16 %v2769
        %v2936 = vunpack.c.l.b16 %v2783
        %v2937 = vunpack.c.l.b16 %v2793
        %v2938 = vunpack.c.l.b16 %v2807
        %v2939 = vunpack.c.l.b16 %v2817
        %v2940 = vunpack.c.l.b16 %v2831
        %v2941 = vunpack.c.l.b16 %v2841
        %v2942 = vunpack.c.l.b16 %v2855
        %v2943 = vunpack.c.l.b16 %v2865
        %v2944 = vunpack.c.l.b16 %v2879
        %v2945 = vunpack.c.l.b16 %v2889
        %v2946 = vunpack.c.l.b16 %v2903
        %v2947 = vunpack.c.l.b16 %v2913
        %v2948 = vpack.c.b16 %v2917, %v2916
        %v2949 = vpack.c.b16 %v2919, %v2918
        %v2950 = vpack.c.b16 %v2921, %v2920
        %v2951 = vpack.c.b16 %v2923, %v2922
        %v2952 = vpack.c.b16 %v2925, %v2924
        %v2953 = vpack.c.b16 %v2927, %v2926
        %v2954 = vpack.c.b16 %v2929, %v2928
        %v2955 = vpack.c.b16 %v2931, %v2930
        %v2956 = vpack.c.b16 %v2933, %v2932
        %v2957 = vpack.c.b16 %v2935, %v2934
        %v2958 = vpack.c.b16 %v2937, %v2936
        %v2959 = vpack.c.b16 %v2939, %v2938
        %v2960 = vpack.c.b16 %v2941, %v2940
        %v2961 = vpack.c.b16 %v2943, %v2942
        %v2962 = vpack.c.b16 %v2945, %v2944
        %v2963 = vpack.c.b16 %v2947, %v2946
        %v2965 = vsel %vm1158, %v2948, 0
        %v2968 = vsel %vm1158, %v2949, 0
        %v2971 = vsel %vm1158, %v2950, 0
        %v2974 = vsel %vm1158, %v2951, 0
        %v2977 = vsel %vm1158, %v2952, 0
        %v2980 = vsel %vm1158, %v2953, 0
        %v2983 = vsel %vm1158, %v2954, 0
        %v2986 = vsel %vm1158, %v2955, 0
        %v2989 = vsel %vm1158, %v2956, 0
        %v2992 = vsel %vm1158, %v2957, 0
        %v2995 = vsel %vm1158, %v2958, 0
        %v2998 = vsel %vm1158, %v2959, 0
        %v3001 = vsel %vm1158, %v2960, 0
        %v3004 = vsel %vm1158, %v2961, 0
        %v3007 = vsel %vm1158, %v2962, 0
        %v3010 = vsel %vm1158, %v2963, 0
        %v3013 = vand.u32 %v2915, %v1210
        %3015 = vmatprep.subr.bf16.mxu0 0
        %3016 = vmatpush1.bf16.msra.mxu0 %v3013
        %3017 = vmatprep.subr.bf16.mxu0 0
        %3018 = vmatpush1.bf16.msra.mxu0 0
        %3019 = vmatprep.subr.bf16.mxu0 0
        %3020 = vmatpush1.bf16.msra.mxu0 0
        %3021 = vmatprep.subr.bf16.mxu0 0
        %3022 = vmatpush1.bf16.msra.mxu0 0
        %3023 = vmatprep.subr.bf16.mxu0 0
        %3024 = vmatpush1.bf16.msra.mxu0 0
        %3025 = vmatprep.subr.bf16.mxu0 0
        %3026 = vmatpush1.bf16.msra.mxu0 0
        %3027 = vmatprep.subr.bf16.mxu0 0
        %3028 = vmatpush1.bf16.msra.mxu0 0
        %3029 = vmatprep.subr.bf16.mxu0 0
        %3030 = vmatpush1.bf16.msra.mxu0 0
        %3031 = vmatprep.subr.bf16.mxu0 0
        %3032 = vmatpush1.bf16.msra.mxu0 0
        %3033 = vmatprep.subr.bf16.mxu0 0
        %3034 = vmatpush1.bf16.msra.mxu0 0
        %3035 = vmatprep.subr.bf16.mxu0 0
        %3036 = vmatpush1.bf16.msra.mxu0 0
        %3037 = vmatprep.subr.bf16.mxu0 0
        %3038 = vmatpush1.bf16.msra.mxu0 0
        %3039 = vmatprep.subr.bf16.mxu0 0
        %3040 = vmatpush1.bf16.msra.mxu0 0
        %3041 = vmatprep.subr.bf16.mxu0 0
        %3042 = vmatpush1.bf16.msra.mxu0 0
        %3043 = vmatprep.subr.bf16.mxu0 0
        %3044 = vmatpush1.bf16.msra.mxu0 0
        %3045 = vmatprep.subr.bf16.mxu0 0
        %3046 = vmatpush1.bf16.msra.mxu0 0
        %3047 = vmatprep.mubr.bf16.mxu0 0
        %3048 = vmatmul.mubr.bf16.gmra.mrb[0].mxu0 %v2965
        %v3049 = vpop.f32.mrb[0].mxu0
        %v3050 = vadd.f32 0.0, %v3049
        %v3051 = vpop.f32.mrb[0].mxu0
        %v3052 = vpop.f32.mrb[0].mxu0
        %v3053 = vadd.f32 0.0, %v3052
        %v3054 = vpop.f32.mrb[0].mxu0
        %3055 = vmatprep.mubr.bf16.mxu0 0
        %3056 = vmatmul.mubr.bf16.gmra.mrb[0].mxu0 %v2968
        %v3057 = vpop.f32.mrb[0].mxu0
        %v3058 = vadd.f32 0.0, %v3057
        %v3059 = vpop.f32.mrb[0].mxu0
        %v3060 = vpop.f32.mrb[0].mxu0
        %v3061 = vadd.f32 0.0, %v3060
        %v3062 = vpop.f32.mrb[0].mxu0
        %3063 = vmatprep.mubr.bf16.mxu0 0
        %3064 = vmatmul.mubr.bf16.gmra.mrb[0].mxu0 %v2971
        %v3065 = vpop.f32.mrb[0].mxu0
        %v3066 = vadd.f32 0.0, %v3065
        %v3067 = vpop.f32.mrb[0].mxu0
        %v3068 = vpop.f32.mrb[0].mxu0
        %v3069 = vadd.f32 0.0, %v3068
        %v3070 = vpop.f32.mrb[0].mxu0
        %3071 = vmatprep.mubr.bf16.mxu0 0
        %3072 = vmatmul.mubr.bf16.gmra.mrb[0].mxu0 %v2974
        %v3073 = vpop.f32.mrb[0].mxu0
        %v3074 = vadd.f32 0.0, %v3073
        %v3075 = vpop.f32.mrb[0].mxu0
        %v3076 = vpop.f32.mrb[0].mxu0
        %v3077 = vadd.f32 0.0, %v3076
        %v3078 = vpop.f32.mrb[0].mxu0
        %3079 = vmatprep.mubr.bf16.mxu0 0
        %3080 = vmatmul.mubr.bf16.gmra.mrb[0].mxu0 %v2977
        %v3081 = vpop.f32.mrb[0].mxu0
        %v3082 = vadd.f32 0.0, %v3081
        %v3083 = vpop.f32.mrb[0].mxu0
        %v3084 = vpop.f32.mrb[0].mxu0
        %v3085 = vadd.f32 0.0, %v3084
        %v3086 = vpop.f32.mrb[0].mxu0
        %3087 = vmatprep.mubr.bf16.mxu0 0
        %3088 = vmatmul.mubr.bf16.gmra.mrb[0].mxu0 %v2980
        %v3089 = vpop.f32.mrb[0].mxu0
        %v3090 = vadd.f32 0.0, %v3089
        %v3091 = vpop.f32.mrb[0].mxu0
        %v3092 = vpop.f32.mrb[0].mxu0
        %v3093 = vadd.f32 0.0, %v3092
        %v3094 = vpop.f32.mrb[0].mxu0
        %3095 = vmatprep.mubr.bf16.mxu0 0
        %3096 = vmatmul.mubr.bf16.gmra.mrb[0].mxu0 %v2983
        %v3097 = vpop.f32.mrb[0].mxu0
        %v3098 = vadd.f32 0.0, %v3097
        %v3099 = vpop.f32.mrb[0].mxu0
        %v3100 = vpop.f32.mrb[0].mxu0
        %v3101 = vadd.f32 0.0, %v3100
        %v3102 = vpop.f32.mrb[0].mxu0
        %3103 = vmatprep.mubr.bf16.mxu0 0
        %3104 = vmatmul.mubr.bf16.gmra.mrb[0].mxu0 %v2986
        %v3105 = vpop.f32.mrb[0].mxu0
        %v3106 = vadd.f32 0.0, %v3105
        %v3107 = vpop.f32.mrb[0].mxu0
        %v3108 = vpop.f32.mrb[0].mxu0
        %v3109 = vadd.f32 0.0, %v3108
        %v3110 = vpop.f32.mrb[0].mxu0
        %3111 = vmatprep.mubr.bf16.mxu0 0
        %3112 = vmatmul.mubr.bf16.gmra.mrb[0].mxu0 %v2989
        %v3113 = vpop.f32.mrb[0].mxu0
        %v3114 = vadd.f32 0.0, %v3113
        %v3115 = vpop.f32.mrb[0].mxu0
        %v3116 = vpop.f32.mrb[0].mxu0
        %v3117 = vadd.f32 0.0, %v3116
        %v3118 = vpop.f32.mrb[0].mxu0
        %3119 = vmatprep.mubr.bf16.mxu0 0
        %3120 = vmatmul.mubr.bf16.gmra.mrb[0].mxu0 %v2992
        %v3121 = vpop.f32.mrb[0].mxu0
        %v3122 = vadd.f32 0.0, %v3121
        %v3123 = vpop.f32.mrb[0].mxu0
        %v3124 = vpop.f32.mrb[0].mxu0
        %v3125 = vadd.f32 0.0, %v3124
        %v3126 = vpop.f32.mrb[0].mxu0
        %3127 = vmatprep.mubr.bf16.mxu0 0
        %3128 = vmatmul.mubr.bf16.gmra.mrb[0].mxu0 %v2995
        %v3129 = vpop.f32.mrb[0].mxu0
        %v3130 = vadd.f32 0.0, %v3129
        %v3131 = vpop.f32.mrb[0].mxu0
        %v3132 = vpop.f32.mrb[0].mxu0
        %v3133 = vadd.f32 0.0, %v3132
        %v3134 = vpop.f32.mrb[0].mxu0
        %3135 = vmatprep.mubr.bf16.mxu0 0
        %3136 = vmatmul.mubr.bf16.gmra.mrb[0].mxu0 %v2998
        %v3137 = vpop.f32.mrb[0].mxu0
        %v3138 = vadd.f32 0.0, %v3137
        %v3139 = vpop.f32.mrb[0].mxu0
        %v3140 = vpop.f32.mrb[0].mxu0
        %v3141 = vadd.f32 0.0, %v3140
        %v3142 = vpop.f32.mrb[0].mxu0
        %3143 = vmatprep.mubr.bf16.mxu0 0
        %3144 = vmatmul.mubr.bf16.gmra.mrb[0].mxu0 %v3001
        %v3145 = vpop.f32.mrb[0].mxu0
        %v3146 = vadd.f32 0.0, %v3145
        %v3147 = vpop.f32.mrb[0].mxu0
        %v3148 = vpop.f32.mrb[0].mxu0
        %v3149 = vadd.f32 0.0, %v3148
        %v3150 = vpop.f32.mrb[0].mxu0
        %3151 = vmatprep.mubr.bf16.mxu0 0
        %3152 = vmatmul.mubr.bf16.gmra.mrb[0].mxu0 %v3004
        %v3153 = vpop.f32.mrb[0].mxu0
        %v3154 = vadd.f32 0.0, %v3153
        %v3155 = vpop.f32.mrb[0].mxu0
        %v3156 = vpop.f32.mrb[0].mxu0
        %v3157 = vadd.f32 0.0, %v3156
        %v3158 = vpop.f32.mrb[0].mxu0
        %3159 = vmatprep.mubr.bf16.mxu0 0
        %3160 = vmatmul.mubr.bf16.gmra.mrb[0].mxu0 %v3007
        %v3161 = vpop.f32.mrb[0].mxu0
        %v3162 = vadd.f32 0.0, %v3161
        %v3163 = vpop.f32.mrb[0].mxu0
        %v3164 = vpop.f32.mrb[0].mxu0
        %v3165 = vadd.f32 0.0, %v3164
        %v3166 = vpop.f32.mrb[0].mxu0
        %3167 = vmatprep.mubr.bf16.mxu0 0
        %3168 = vmatmul.mubr.bf16.gmra.mrb[0].mxu0 %v3010
        %v3169 = vpop.f32.mrb[0].mxu0
        %v3170 = vadd.f32 0.0, %v3169
        %v3171 = vpop.f32.mrb[0].mxu0
        %v3172 = vpop.f32.mrb[0].mxu0
        %v3173 = vadd.f32 0.0, %v3172
        %v3174 = vpop.f32.mrb[0].mxu0
        %3175 = vdwg.mxu0
        %v3176 = vadd.f32 %v2450, %v3050
        %v3177 = vadd.f32 %v2451, %v3053
        %v3178 = vadd.f32 %v2452, %v3058
        %v3179 = vadd.f32 %v2453, %v3061
        %v3180 = vadd.f32 %v2454, %v3066
        %v3181 = vadd.f32 %v2455, %v3069
        %v3182 = vadd.f32 %v2456, %v3074
        %v3183 = vadd.f32 %v2457, %v3077
        %v3184 = vadd.f32 %v2458, %v3082
        %v3185 = vadd.f32 %v2459, %v3085
        %v3186 = vadd.f32 %v2460, %v3090
        %v3187 = vadd.f32 %v2461, %v3093
        %v3188 = vadd.f32 %v2462, %v3098
        %v3189 = vadd.f32 %v2463, %v3101
        %v3190 = vadd.f32 %v2464, %v3106
        %v3191 = vadd.f32 %v2465, %v3109
        %v3192 = vadd.f32 %v2466, %v3114
        %v3193 = vadd.f32 %v2467, %v3117
        %v3194 = vadd.f32 %v2468, %v3122
        %v3195 = vadd.f32 %v2469, %v3125
        %v3196 = vadd.f32 %v2470, %v3130
        %v3197 = vadd.f32 %v2471, %v3133
        %v3198 = vadd.f32 %v2472, %v3138
        %v3199 = vadd.f32 %v2473, %v3141
        %v3200 = vadd.f32 %v2474, %v3146
        %v3201 = vadd.f32 %v2475, %v3149
        %v3202 = vadd.f32 %v2476, %v3154
        %v3203 = vadd.f32 %v2477, %v3157
        %v3204 = vadd.f32 %v2478, %v3162
        %v3205 = vadd.f32 %v2479, %v3165
        %v3206 = vadd.f32 %v2480, %v3170
        %v3207 = vadd.f32 %v2481, %v3173
        %v3208 = vld [vmem:[%s554] sm:$0xe]
        %v3209 = vld [vmem:[%s554 + $0xc] sm:$0xe]
        %v3210 = vld [vmem:[%s554 + $0x18] sm:$0xe]
        %v3211 = vld [vmem:[%s554 + $0x24] sm:$0xe]
        %v3212 = vld [vmem:[%s554 + $0x30] sm:$0xe]
        %v3213 = vld [vmem:[%s554 + $0x3c] sm:$0xe]
        %v3214 = vld [vmem:[%s554 + $0x48] sm:$0xe]
        %v3215 = vld [vmem:[%s554 + $0x54] sm:$0xe]
        %v3216 = vld [vmem:[%s554 + $0x60] sm:$0xe]
        %v3217 = vld [vmem:[%s554 + $0x6c] sm:$0xe]
        %v3218 = vld [vmem:[%s554 + $0x78] sm:$0xe]
        %v3219 = vld [vmem:[%s554 + $0x84] sm:$0xe]
        %v3220 = vld [vmem:[%s554 + $0x90] sm:$0xe]
        %v3221 = vld [vmem:[%s554 + $0x9c] sm:$0xe]
        %v3222 = vld [vmem:[%s554 + $0xa8] sm:$0xe]
        %v3223 = vld [vmem:[%s554 + $0xb4] sm:$0xe]
        %v3272 = vrot.slane %v3208, 5
        %v3273 = vrot.slane %v3272, 4
        %v3274 = vrot.slane %v2483, 5
        %v3275 = vsel %vm1717, %v3273, %v3274
        %v3276 = vrot.slane %v3274, 4
        %v3277 = vrot.slane %v2484, 5
        %v3278 = vsel %vm1717, %v3276, %v3277
        %v3279 = vrot.slane %v3209, 5
        %v3280 = vrot.slane %v3279, 4
        %v3281 = vrot.slane %v2486, 5
        %v3282 = vsel %vm1717, %v3280, %v3281
        %v3283 = vrot.slane %v3281, 4
        %v3284 = vrot.slane %v2487, 5
        %v3285 = vsel %vm1717, %v3283, %v3284
        %v3286 = vrot.slane %v3210, 5
        %v3287 = vrot.slane %v3286, 4
        %v3288 = vrot.slane %v2489, 5
        %v3289 = vsel %vm1717, %v3287, %v3288
        %v3290 = vrot.slane %v3288, 4
        %v3291 = vrot.slane %v2490, 5
        %v3292 = vsel %vm1717, %v3290, %v3291
        %v3293 = vrot.slane %v3211, 5
        %v3294 = vrot.slane %v3293, 4
        %v3295 = vrot.slane %v2492, 5
        %v3296 = vsel %vm1717, %v3294, %v3295
        %v3297 = vrot.slane %v3295, 4
        %v3298 = vrot.slane %v2493, 5
        %v3299 = vsel %vm1717, %v3297, %v3298
        %v3300 = vrot.slane %v3212, 5
        %v3301 = vrot.slane %v3300, 4
        %v3302 = vrot.slane %v2495, 5
        %v3303 = vsel %vm1717, %v3301, %v3302
        %v3304 = vrot.slane %v3302, 4
        %v3305 = vrot.slane %v2496, 5
        %v3306 = vsel %vm1717, %v3304, %v3305
        %v3307 = vrot.slane %v3213, 5
        %v3308 = vrot.slane %v3307, 4
        %v3309 = vrot.slane %v2498, 5
        %v3310 = vsel %vm1717, %v3308, %v3309
        %v3311 = vrot.slane %v3309, 4
        %v3312 = vrot.slane %v2499, 5
        %v3313 = vsel %vm1717, %v3311, %v3312
        %v3314 = vrot.slane %v3214, 5
        %v3315 = vrot.slane %v3314, 4
        %v3316 = vrot.slane %v2501, 5
        %v3317 = vsel %vm1717, %v3315, %v3316
        %v3318 = vrot.slane %v3316, 4
        %v3319 = vrot.slane %v2502, 5
        %v3320 = vsel %vm1717, %v3318, %v3319
        %v3321 = vrot.slane %v3215, 5
        %v3322 = vrot.slane %v3321, 4
        %v3323 = vrot.slane %v2504, 5
        %v3324 = vsel %vm1717, %v3322, %v3323
        %v3325 = vrot.slane %v3323, 4
        %v3326 = vrot.slane %v2505, 5
        %v3327 = vsel %vm1717, %v3325, %v3326
        %v3328 = vrot.slane %v3216, 5
        %v3329 = vrot.slane %v3328, 4
        %v3330 = vrot.slane %v2507, 5
        %v3331 = vsel %vm1717, %v3329, %v3330
        %v3332 = vrot.slane %v3330, 4
        %v3333 = vrot.slane %v2508, 5
        %v3334 = vsel %vm1717, %v3332, %v3333
        %v3335 = vrot.slane %v3217, 5
        %v3336 = vrot.slane %v3335, 4
        %v3337 = vrot.slane %v2510, 5
        %v3338 = vsel %vm1717, %v3336, %v3337
        %v3339 = vrot.slane %v3337, 4
        %v3340 = vrot.slane %v2511, 5
        %v3341 = vsel %vm1717, %v3339, %v3340
        %v3342 = vrot.slane %v3218, 5
        %v3343 = vrot.slane %v3342, 4
        %v3344 = vrot.slane %v2513, 5
        %v3345 = vsel %vm1717, %v3343, %v3344
        %v3346 = vrot.slane %v3344, 4
        %v3347 = vrot.slane %v2514, 5
        %v3348 = vsel %vm1717, %v3346, %v3347
        %v3349 = vrot.slane %v3219, 5
        %v3350 = vrot.slane %v3349, 4
        %v3351 = vrot.slane %v2516, 5
        %v3352 = vsel %vm1717, %v3350, %v3351
        %v3353 = vrot.slane %v3351, 4
        %v3354 = vrot.slane %v2517, 5
        %v3355 = vsel %vm1717, %v3353, %v3354
        %v3356 = vrot.slane %v3220, 5
        %v3357 = vrot.slane %v3356, 4
        %v3358 = vrot.slane %v2519, 5
        %v3359 = vsel %vm1717, %v3357, %v3358
        %v3360 = vrot.slane %v3358, 4
        %v3361 = vrot.slane %v2520, 5
        %v3362 = vsel %vm1717, %v3360, %v3361
        %v3363 = vrot.slane %v3221, 5
        %v3364 = vrot.slane %v3363, 4
        %v3365 = vrot.slane %v2522, 5
        %v3366 = vsel %vm1717, %v3364, %v3365
        %v3367 = vrot.slane %v3365, 4
        %v3368 = vrot.slane %v2523, 5
        %v3369 = vsel %vm1717, %v3367, %v3368
        %v3370 = vrot.slane %v3222, 5
        %v3371 = vrot.slane %v3370, 4
        %v3372 = vrot.slane %v2525, 5
        %v3373 = vsel %vm1717, %v3371, %v3372
        %v3374 = vrot.slane %v3372, 4
        %v3375 = vrot.slane %v2526, 5
        %v3376 = vsel %vm1717, %v3374, %v3375
        %v3377 = vrot.slane %v3223, 5
        %v3378 = vrot.slane %v3377, 4
        %v3379 = vrot.slane %v2528, 5
        %v3380 = vsel %vm1717, %v3378, %v3379
        %v3381 = vrot.slane %v3379, 4
        %v3382 = vrot.slane %v2529, 5
        %v3383 = vsel %vm1717, %v3381, %v3382
        %s3384 = scalar_lea.vmem %s1, 10
        %v3385 = vld [vmem:[%s3384] sm:$0x3]
        %v3386 = vunpack.c.l.b16 %v3275
        %v3387 = vunpack.c.l.b16 %v3278
        %v3388 = vunpack.c.l.b16 %v3282
        %v3389 = vunpack.c.l.b16 %v3285
        %v3390 = vunpack.c.l.b16 %v3289
        %v3391 = vunpack.c.l.b16 %v3292
        %v3392 = vunpack.c.l.b16 %v3296
        %v3393 = vunpack.c.l.b16 %v3299
        %v3394 = vunpack.c.l.b16 %v3303
        %v3395 = vunpack.c.l.b16 %v3306
        %v3396 = vunpack.c.l.b16 %v3310
        %v3397 = vunpack.c.l.b16 %v3313
        %v3398 = vunpack.c.l.b16 %v3317
        %v3399 = vunpack.c.l.b16 %v3320
        %v3400 = vunpack.c.l.b16 %v3324
        %v3401 = vunpack.c.l.b16 %v3327
        %v3402 = vunpack.c.l.b16 %v3331
        %v3403 = vunpack.c.l.b16 %v3334
        %v3404 = vunpack.c.l.b16 %v3338
        %v3405 = vunpack.c.l.b16 %v3341
        %v3406 = vunpack.c.l.b16 %v3345
        %v3407 = vunpack.c.l.b16 %v3348
        %v3408 = vunpack.c.l.b16 %v3352
        %v3409 = vunpack.c.l.b16 %v3355
        %v3410 = vunpack.c.l.b16 %v3359
        %v3411 = vunpack.c.l.b16 %v3362
        %v3412 = vunpack.c.l.b16 %v3366
        %v3413 = vunpack.c.l.b16 %v3369
        %v3414 = vunpack.c.l.b16 %v3373
        %v3415 = vunpack.c.l.b16 %v3376
        %v3416 = vunpack.c.l.b16 %v3380
        %v3417 = vunpack.c.l.b16 %v3383
        %v3418 = vpack.c.b16 %v3387, %v3386
        %v3419 = vpack.c.b16 %v3389, %v3388
        %v3420 = vpack.c.b16 %v3391, %v3390
        %v3421 = vpack.c.b16 %v3393, %v3392
        %v3422 = vpack.c.b16 %v3395, %v3394
        %v3423 = vpack.c.b16 %v3397, %v3396
        %v3424 = vpack.c.b16 %v3399, %v3398
        %v3425 = vpack.c.b16 %v3401, %v3400
        %v3426 = vpack.c.b16 %v3403, %v3402
        %v3427 = vpack.c.b16 %v3405, %v3404
        %v3428 = vpack.c.b16 %v3407, %v3406
        %v3429 = vpack.c.b16 %v3409, %v3408
        %v3430 = vpack.c.b16 %v3411, %v3410
        %v3431 = vpack.c.b16 %v3413, %v3412
        %v3432 = vpack.c.b16 %v3415, %v3414
        %v3433 = vpack.c.b16 %v3417, %v3416
        %v3435 = vsel %vm1158, %v3418, 0
        %v3438 = vsel %vm1158, %v3419, 0
        %v3441 = vsel %vm1158, %v3420, 0
        %v3444 = vsel %vm1158, %v3421, 0
        %v3447 = vsel %vm1158, %v3422, 0
        %v3450 = vsel %vm1158, %v3423, 0
        %v3453 = vsel %vm1158, %v3424, 0
        %v3456 = vsel %vm1158, %v3425, 0
        %v3459 = vsel %vm1158, %v3426, 0
        %v3462 = vsel %vm1158, %v3427, 0
        %v3465 = vsel %vm1158, %v3428, 0
        %v3468 = vsel %vm1158, %v3429, 0
        %v3471 = vsel %vm1158, %v3430, 0
        %v3474 = vsel %vm1158, %v3431, 0
        %v3477 = vsel %vm1158, %v3432, 0
        %v3480 = vsel %vm1158, %v3433, 0
        %v3483 = vand.u32 %v3385, %v1210
        %3485 = vmatprep.subr.bf16.mxu0 0
        %3486 = vmatpush1.bf16.msra.mxu0 %v3483
        %3487 = vmatprep.subr.bf16.mxu0 0
        %3488 = vmatpush1.bf16.msra.mxu0 0
        %3489 = vmatprep.subr.bf16.mxu0 0
        %3490 = vmatpush1.bf16.msra.mxu0 0
        %3491 = vmatprep.subr.bf16.mxu0 0
        %3492 = vmatpush1.bf16.msra.mxu0 0
        %3493 = vmatprep.subr.bf16.mxu0 0
        %3494 = vmatpush1.bf16.msra.mxu0 0
        %3495 = vmatprep.subr.bf16.mxu0 0
        %3496 = vmatpush1.bf16.msra.mxu0 0
        %3497 = vmatprep.subr.bf16.mxu0 0
        %3498 = vmatpush1.bf16.msra.mxu0 0
        %3499 = vmatprep.subr.bf16.mxu0 0
        %3500 = vmatpush1.bf16.msra.mxu0 0
        %3501 = vmatprep.subr.bf16.mxu0 0
        %3502 = vmatpush1.bf16.msra.mxu0 0
        %3503 = vmatprep.subr.bf16.mxu0 0
        %3504 = vmatpush1.bf16.msra.mxu0 0
        %3505 = vmatprep.subr.bf16.mxu0 0
        %3506 = vmatpush1.bf16.msra.mxu0 0
        %3507 = vmatprep.subr.bf16.mxu0 0
        %3508 = vmatpush1.bf16.msra.mxu0 0
        %3509 = vmatprep.subr.bf16.mxu0 0
        %3510 = vmatpush1.bf16.msra.mxu0 0
        %3511 = vmatprep.subr.bf16.mxu0 0
        %3512 = vmatpush1.bf16.msra.mxu0 0
        %3513 = vmatprep.subr.bf16.mxu0 0
        %3514 = vmatpush1.bf16.msra.mxu0 0
        %3515 = vmatprep.subr.bf16.mxu0 0
        %3516 = vmatpush1.bf16.msra.mxu0 0
        %3517 = vmatprep.mubr.bf16.mxu0 0
        %3518 = vmatmul.mubr.bf16.gmra.mrb[0].mxu0 %v3435
        %v3519 = vpop.f32.mrb[0].mxu0
        %v3520 = vadd.f32 0.0, %v3519
        %v3521 = vpop.f32.mrb[0].mxu0
        %v3522 = vpop.f32.mrb[0].mxu0
        %v3523 = vadd.f32 0.0, %v3522
        %v3524 = vpop.f32.mrb[0].mxu0
        %3525 = vmatprep.mubr.bf16.mxu0 0
        %3526 = vmatmul.mubr.bf16.gmra.mrb[0].mxu0 %v3438
        %v3527 = vpop.f32.mrb[0].mxu0
        %v3528 = vadd.f32 0.0, %v3527
        %v3529 = vpop.f32.mrb[0].mxu0
        %v3530 = vpop.f32.mrb[0].mxu0
        %v3531 = vadd.f32 0.0, %v3530
        %v3532 = vpop.f32.mrb[0].mxu0
        %3533 = vmatprep.mubr.bf16.mxu0 0
        %3534 = vmatmul.mubr.bf16.gmra.mrb[0].mxu0 %v3441
        %v3535 = vpop.f32.mrb[0].mxu0
        %v3536 = vadd.f32 0.0, %v3535
        %v3537 = vpop.f32.mrb[0].mxu0
        %v3538 = vpop.f32.mrb[0].mxu0
        %v3539 = vadd.f32 0.0, %v3538
        %v3540 = vpop.f32.mrb[0].mxu0
        %3541 = vmatprep.mubr.bf16.mxu0 0
        %3542 = vmatmul.mubr.bf16.gmra.mrb[0].mxu0 %v3444
        %v3543 = vpop.f32.mrb[0].mxu0
        %v3544 = vadd.f32 0.0, %v3543
        %v3545 = vpop.f32.mrb[0].mxu0
        %v3546 = vpop.f32.mrb[0].mxu0
        %v3547 = vadd.f32 0.0, %v3546
        %v3548 = vpop.f32.mrb[0].mxu0
        %3549 = vmatprep.mubr.bf16.mxu0 0
        %3550 = vmatmul.mubr.bf16.gmra.mrb[0].mxu0 %v3447
        %v3551 = vpop.f32.mrb[0].mxu0
        %v3552 = vadd.f32 0.0, %v3551
        %v3553 = vpop.f32.mrb[0].mxu0
        %v3554 = vpop.f32.mrb[0].mxu0
        %v3555 = vadd.f32 0.0, %v3554
        %v3556 = vpop.f32.mrb[0].mxu0
        %3557 = vmatprep.mubr.bf16.mxu0 0
        %3558 = vmatmul.mubr.bf16.gmra.mrb[0].mxu0 %v3450
        %v3559 = vpop.f32.mrb[0].mxu0
        %v3560 = vadd.f32 0.0, %v3559
        %v3561 = vpop.f32.mrb[0].mxu0
        %v3562 = vpop.f32.mrb[0].mxu0
        %v3563 = vadd.f32 0.0, %v3562
        %v3564 = vpop.f32.mrb[0].mxu0
        %3565 = vmatprep.mubr.bf16.mxu0 0
        %3566 = vmatmul.mubr.bf16.gmra.mrb[0].mxu0 %v3453
        %v3567 = vpop.f32.mrb[0].mxu0
        %v3568 = vadd.f32 0.0, %v3567
        %v3569 = vpop.f32.mrb[0].mxu0
        %v3570 = vpop.f32.mrb[0].mxu0
        %v3571 = vadd.f32 0.0, %v3570
        %v3572 = vpop.f32.mrb[0].mxu0
        %3573 = vmatprep.mubr.bf16.mxu0 0
        %3574 = vmatmul.mubr.bf16.gmra.mrb[0].mxu0 %v3456
        %v3575 = vpop.f32.mrb[0].mxu0
        %v3576 = vadd.f32 0.0, %v3575
        %v3577 = vpop.f32.mrb[0].mxu0
        %v3578 = vpop.f32.mrb[0].mxu0
        %v3579 = vadd.f32 0.0, %v3578
        %v3580 = vpop.f32.mrb[0].mxu0
        %3581 = vmatprep.mubr.bf16.mxu0 0
        %3582 = vmatmul.mubr.bf16.gmra.mrb[0].mxu0 %v3459
        %v3583 = vpop.f32.mrb[0].mxu0
        %v3584 = vadd.f32 0.0, %v3583
        %v3585 = vpop.f32.mrb[0].mxu0
        %v3586 = vpop.f32.mrb[0].mxu0
        %v3587 = vadd.f32 0.0, %v3586
        %v3588 = vpop.f32.mrb[0].mxu0
        %3589 = vmatprep.mubr.bf16.mxu0 0
        %3590 = vmatmul.mubr.bf16.gmra.mrb[0].mxu0 %v3462
        %v3591 = vpop.f32.mrb[0].mxu0
        %v3592 = vadd.f32 0.0, %v3591
        %v3593 = vpop.f32.mrb[0].mxu0
        %v3594 = vpop.f32.mrb[0].mxu0
        %v3595 = vadd.f32 0.0, %v3594
        %v3596 = vpop.f32.mrb[0].mxu0
        %3597 = vmatprep.mubr.bf16.mxu0 0
        %3598 = vmatmul.mubr.bf16.gmra.mrb[0].mxu0 %v3465
        %v3599 = vpop.f32.mrb[0].mxu0
        %v3600 = vadd.f32 0.0, %v3599
        %v3601 = vpop.f32.mrb[0].mxu0
        %v3602 = vpop.f32.mrb[0].mxu0
        %v3603 = vadd.f32 0.0, %v3602
        %v3604 = vpop.f32.mrb[0].mxu0
        %3605 = vmatprep.mubr.bf16.mxu0 0
        %3606 = vmatmul.mubr.bf16.gmra.mrb[0].mxu0 %v3468
        %v3607 = vpop.f32.mrb[0].mxu0
        %v3608 = vadd.f32 0.0, %v3607
        %v3609 = vpop.f32.mrb[0].mxu0
        %v3610 = vpop.f32.mrb[0].mxu0
        %v3611 = vadd.f32 0.0, %v3610
        %v3612 = vpop.f32.mrb[0].mxu0
        %3613 = vmatprep.mubr.bf16.mxu0 0
        %3614 = vmatmul.mubr.bf16.gmra.mrb[0].mxu0 %v3471
        %v3615 = vpop.f32.mrb[0].mxu0
        %v3616 = vadd.f32 0.0, %v3615
        %v3617 = vpop.f32.mrb[0].mxu0
        %v3618 = vpop.f32.mrb[0].mxu0
        %v3619 = vadd.f32 0.0, %v3618
        %v3620 = vpop.f32.mrb[0].mxu0
        %3621 = vmatprep.mubr.bf16.mxu0 0
        %3622 = vmatmul.mubr.bf16.gmra.mrb[0].mxu0 %v3474
        %v3623 = vpop.f32.mrb[0].mxu0
        %v3624 = vadd.f32 0.0, %v3623
        %v3625 = vpop.f32.mrb[0].mxu0
        %v3626 = vpop.f32.mrb[0].mxu0
        %v3627 = vadd.f32 0.0, %v3626
        %v3628 = vpop.f32.mrb[0].mxu0
        %3629 = vmatprep.mubr.bf16.mxu0 0
        %3630 = vmatmul.mubr.bf16.gmra.mrb[0].mxu0 %v3477
        %v3631 = vpop.f32.mrb[0].mxu0
        %v3632 = vadd.f32 0.0, %v3631
        %v3633 = vpop.f32.mrb[0].mxu0
        %v3634 = vpop.f32.mrb[0].mxu0
        %v3635 = vadd.f32 0.0, %v3634
        %v3636 = vpop.f32.mrb[0].mxu0
        %3637 = vmatprep.mubr.bf16.mxu0 0
        %3638 = vmatmul.mubr.bf16.gmra.mrb[0].mxu0 %v3480
        %v3639 = vpop.f32.mrb[0].mxu0
        %v3640 = vadd.f32 0.0, %v3639
        %v3641 = vpop.f32.mrb[0].mxu0
        %v3642 = vpop.f32.mrb[0].mxu0
        %v3643 = vadd.f32 0.0, %v3642
        %v3644 = vpop.f32.mrb[0].mxu0
        %3645 = vdwg.mxu0
        %v3646 = vadd.f32 %v3176, %v3520
        %v3647 = vadd.f32 %v3177, %v3523
        %v3648 = vadd.f32 %v3178, %v3528
        %v3649 = vadd.f32 %v3179, %v3531
        %v3650 = vadd.f32 %v3180, %v3536
        %v3651 = vadd.f32 %v3181, %v3539
        %v3652 = vadd.f32 %v3182, %v3544
        %v3653 = vadd.f32 %v3183, %v3547
        %v3654 = vadd.f32 %v3184, %v3552
        %v3655 = vadd.f32 %v3185, %v3555
        %v3656 = vadd.f32 %v3186, %v3560
        %v3657 = vadd.f32 %v3187, %v3563
        %v3658 = vadd.f32 %v3188, %v3568
        %v3659 = vadd.f32 %v3189, %v3571
        %v3660 = vadd.f32 %v3190, %v3576
        %v3661 = vadd.f32 %v3191, %v3579
        %v3662 = vadd.f32 %v3192, %v3584
        %v3663 = vadd.f32 %v3193, %v3587
        %v3664 = vadd.f32 %v3194, %v3592
        %v3665 = vadd.f32 %v3195, %v3595
        %v3666 = vadd.f32 %v3196, %v3600
        %v3667 = vadd.f32 %v3197, %v3603
        %v3668 = vadd.f32 %v3198, %v3608
        %v3669 = vadd.f32 %v3199, %v3611
        %v3670 = vadd.f32 %v3200, %v3616
        %v3671 = vadd.f32 %v3201, %v3619
        %v3672 = vadd.f32 %v3202, %v3624
        %v3673 = vadd.f32 %v3203, %v3627
        %v3674 = vadd.f32 %v3204, %v3632
        %v3675 = vadd.f32 %v3205, %v3635
        %v3676 = vadd.f32 %v3206, %v3640
        %v3677 = vadd.f32 %v3207, %v3643
        %s3678 = scalar_lea.vmem [#allocation2], 24
        %v3679 = vld [vmem:[%s3678] sm:$0xf]
        %v3680 = vld [vmem:[%s3678 + $0x4] sm:$0xf]
        %v3681 = vld [vmem:[%s3678 + $0xc] sm:$0xf]
        %v3682 = vld [vmem:[%s3678 + $0x10] sm:$0xf]
        %v3683 = vld [vmem:[%s3678 + $0x18] sm:$0xf]
        %v3684 = vld [vmem:[%s3678 + $0x1c] sm:$0xf]
        %v3685 = vld [vmem:[%s3678 + $0x24] sm:$0xf]
        %v3686 = vld [vmem:[%s3678 + $0x28] sm:$0xf]
        %v3687 = vld [vmem:[%s3678 + $0x30] sm:$0xf]
        %v3688 = vld [vmem:[%s3678 + $0x34] sm:$0xf]
        %v3689 = vld [vmem:[%s3678 + $0x3c] sm:$0xf]
        %v3690 = vld [vmem:[%s3678 + $0x40] sm:$0xf]
        %v3691 = vld [vmem:[%s3678 + $0x48] sm:$0xf]
        %v3692 = vld [vmem:[%s3678 + $0x4c] sm:$0xf]
        %v3693 = vld [vmem:[%s3678 + $0x54] sm:$0xf]
        %v3694 = vld [vmem:[%s3678 + $0x58] sm:$0xf]
        %v3695 = vld [vmem:[%s3678 + $0x60] sm:$0xf]
        %v3696 = vld [vmem:[%s3678 + $0x64] sm:$0xf]
        %v3697 = vld [vmem:[%s3678 + $0x6c] sm:$0xf]
        %v3698 = vld [vmem:[%s3678 + $0x70] sm:$0xf]
        %v3699 = vld [vmem:[%s3678 + $0x78] sm:$0xf]
        %v3700 = vld [vmem:[%s3678 + $0x7c] sm:$0xf]
        %v3701 = vld [vmem:[%s3678 + $0x84] sm:$0xf]
        %v3702 = vld [vmem:[%s3678 + $0x88] sm:$0xf]
        %v3703 = vld [vmem:[%s3678 + $0x90] sm:$0xf]
        %v3704 = vld [vmem:[%s3678 + $0x94] sm:$0xf]
        %v3705 = vld [vmem:[%s3678 + $0x9c] sm:$0xf]
        %v3706 = vld [vmem:[%s3678 + $0xa0] sm:$0xf]
        %v3707 = vld [vmem:[%s3678 + $0xa8] sm:$0xf]
        %v3708 = vld [vmem:[%s3678 + $0xac] sm:$0xf]
        %v3709 = vld [vmem:[%s3678 + $0xb4] sm:$0xf]
        %v3710 = vld [vmem:[%s3678 + $0xb8] sm:$0xf]
        %s3711 = scalar_lea.vmem %s1, 12
        %v3712 = vld [vmem:[%s3711] sm:$0x3]
        %v3745 = vunpack.c.l.b16 %v3679
        %v3746 = vunpack.c.l.b16 %v3680
        %v3747 = vunpack.c.l.b16 %v3681
        %v3748 = vunpack.c.l.b16 %v3682
        %v3749 = vunpack.c.l.b16 %v3683
        %v3750 = vunpack.c.l.b16 %v3684
        %v3751 = vunpack.c.l.b16 %v3685
        %v3752 = vunpack.c.l.b16 %v3686
        %v3753 = vunpack.c.l.b16 %v3687
        %v3754 = vunpack.c.l.b16 %v3688
        %v3755 = vunpack.c.l.b16 %v3689
        %v3756 = vunpack.c.l.b16 %v3690
        %v3757 = vunpack.c.l.b16 %v3691
        %v3758 = vunpack.c.l.b16 %v3692
        %v3759 = vunpack.c.l.b16 %v3693
        %v3760 = vunpack.c.l.b16 %v3694
        %v3761 = vunpack.c.l.b16 %v3695
        %v3762 = vunpack.c.l.b16 %v3696
        %v3763 = vunpack.c.l.b16 %v3697
        %v3764 = vunpack.c.l.b16 %v3698
        %v3765 = vunpack.c.l.b16 %v3699
        %v3766 = vunpack.c.l.b16 %v3700
        %v3767 = vunpack.c.l.b16 %v3701
        %v3768 = vunpack.c.l.b16 %v3702
        %v3769 = vunpack.c.l.b16 %v3703
        %v3770 = vunpack.c.l.b16 %v3704
        %v3771 = vunpack.c.l.b16 %v3705
        %v3772 = vunpack.c.l.b16 %v3706
        %v3773 = vunpack.c.l.b16 %v3707
        %v3774 = vunpack.c.l.b16 %v3708
        %v3775 = vunpack.c.l.b16 %v3709
        %v3776 = vunpack.c.l.b16 %v3710
        %v3777 = vpack.c.b16 %v3746, %v3745
        %v3778 = vpack.c.b16 %v3748, %v3747
        %v3779 = vpack.c.b16 %v3750, %v3749
        %v3780 = vpack.c.b16 %v3752, %v3751
        %v3781 = vpack.c.b16 %v3754, %v3753
        %v3782 = vpack.c.b16 %v3756, %v3755
        %v3783 = vpack.c.b16 %v3758, %v3757
        %v3784 = vpack.c.b16 %v3760, %v3759
        %v3785 = vpack.c.b16 %v3762, %v3761
        %v3786 = vpack.c.b16 %v3764, %v3763
        %v3787 = vpack.c.b16 %v3766, %v3765
        %v3788 = vpack.c.b16 %v3768, %v3767
        %v3789 = vpack.c.b16 %v3770, %v3769
        %v3790 = vpack.c.b16 %v3772, %v3771
        %v3791 = vpack.c.b16 %v3774, %v3773
        %v3792 = vpack.c.b16 %v3776, %v3775
        %v3794 = vsel %vm1158, %v3777, 0
        %v3797 = vsel %vm1158, %v3778, 0
        %v3800 = vsel %vm1158, %v3779, 0
        %v3803 = vsel %vm1158, %v3780, 0
        %v3806 = vsel %vm1158, %v3781, 0
        %v3809 = vsel %vm1158, %v3782, 0
        %v3812 = vsel %vm1158, %v3783, 0
        %v3815 = vsel %vm1158, %v3784, 0
        %v3818 = vsel %vm1158, %v3785, 0
        %v3821 = vsel %vm1158, %v3786, 0
        %v3824 = vsel %vm1158, %v3787, 0
        %v3827 = vsel %vm1158, %v3788, 0
        %v3830 = vsel %vm1158, %v3789, 0
        %v3833 = vsel %vm1158, %v3790, 0
        %v3836 = vsel %vm1158, %v3791, 0
        %v3839 = vsel %vm1158, %v3792, 0
        %v3842 = vand.u32 %v3712, %v1210
        %3844 = vmatprep.subr.bf16.mxu0 0
        %3845 = vmatpush1.bf16.msra.mxu0 %v3842
        %3846 = vmatprep.subr.bf16.mxu0 0
        %3847 = vmatpush1.bf16.msra.mxu0 0
        %3848 = vmatprep.subr.bf16.mxu0 0
        %3849 = vmatpush1.bf16.msra.mxu0 0
        %3850 = vmatprep.subr.bf16.mxu0 0
        %3851 = vmatpush1.bf16.msra.mxu0 0
        %3852 = vmatprep.subr.bf16.mxu0 0
        %3853 = vmatpush1.bf16.msra.mxu0 0
        %3854 = vmatprep.subr.bf16.mxu0 0
        %3855 = vmatpush1.bf16.msra.mxu0 0
        %3856 = vmatprep.subr.bf16.mxu0 0
        %3857 = vmatpush1.bf16.msra.mxu0 0
        %3858 = vmatprep.subr.bf16.mxu0 0
        %3859 = vmatpush1.bf16.msra.mxu0 0
        %3860 = vmatprep.subr.bf16.mxu0 0
        %3861 = vmatpush1.bf16.msra.mxu0 0
        %3862 = vmatprep.subr.bf16.mxu0 0
        %3863 = vmatpush1.bf16.msra.mxu0 0
        %3864 = vmatprep.subr.bf16.mxu0 0
        %3865 = vmatpush1.bf16.msra.mxu0 0
        %3866 = vmatprep.subr.bf16.mxu0 0
        %3867 = vmatpush1.bf16.msra.mxu0 0
        %3868 = vmatprep.subr.bf16.mxu0 0
        %3869 = vmatpush1.bf16.msra.mxu0 0
        %3870 = vmatprep.subr.bf16.mxu0 0
        %3871 = vmatpush1.bf16.msra.mxu0 0
        %3872 = vmatprep.subr.bf16.mxu0 0
        %3873 = vmatpush1.bf16.msra.mxu0 0
        %3874 = vmatprep.subr.bf16.mxu0 0
        %3875 = vmatpush1.bf16.msra.mxu0 0
        %3876 = vmatprep.mubr.bf16.mxu0 0
        %3877 = vmatmul.mubr.bf16.gmra.mrb[0].mxu0 %v3794
        %v3878 = vpop.f32.mrb[0].mxu0
        %v3879 = vadd.f32 0.0, %v3878
        %v3880 = vpop.f32.mrb[0].mxu0
        %v3881 = vpop.f32.mrb[0].mxu0
        %v3882 = vadd.f32 0.0, %v3881
        %v3883 = vpop.f32.mrb[0].mxu0
        %3884 = vmatprep.mubr.bf16.mxu0 0
        %3885 = vmatmul.mubr.bf16.gmra.mrb[0].mxu0 %v3797
        %v3886 = vpop.f32.mrb[0].mxu0
        %v3887 = vadd.f32 0.0, %v3886
        %v3888 = vpop.f32.mrb[0].mxu0
        %v3889 = vpop.f32.mrb[0].mxu0
        %v3890 = vadd.f32 0.0, %v3889
        %v3891 = vpop.f32.mrb[0].mxu0
        %3892 = vmatprep.mubr.bf16.mxu0 0
        %3893 = vmatmul.mubr.bf16.gmra.mrb[0].mxu0 %v3800
        %v3894 = vpop.f32.mrb[0].mxu0
        %v3895 = vadd.f32 0.0, %v3894
        %v3896 = vpop.f32.mrb[0].mxu0
        %v3897 = vpop.f32.mrb[0].mxu0
        %v3898 = vadd.f32 0.0, %v3897
        %v3899 = vpop.f32.mrb[0].mxu0
        %3900 = vmatprep.mubr.bf16.mxu0 0
        %3901 = vmatmul.mubr.bf16.gmra.mrb[0].mxu0 %v3803
        %v3902 = vpop.f32.mrb[0].mxu0
        %v3903 = vadd.f32 0.0, %v3902
        %v3904 = vpop.f32.mrb[0].mxu0
        %v3905 = vpop.f32.mrb[0].mxu0
        %v3906 = vadd.f32 0.0, %v3905
        %v3907 = vpop.f32.mrb[0].mxu0
        %3908 = vmatprep.mubr.bf16.mxu0 0
        %3909 = vmatmul.mubr.bf16.gmra.mrb[0].mxu0 %v3806
        %v3910 = vpop.f32.mrb[0].mxu0
        %v3911 = vadd.f32 0.0, %v3910
        %v3912 = vpop.f32.mrb[0].mxu0
        %v3913 = vpop.f32.mrb[0].mxu0
        %v3914 = vadd.f32 0.0, %v3913
        %v3915 = vpop.f32.mrb[0].mxu0
        %3916 = vmatprep.mubr.bf16.mxu0 0
        %3917 = vmatmul.mubr.bf16.gmra.mrb[0].mxu0 %v3809
        %v3918 = vpop.f32.mrb[0].mxu0
        %v3919 = vadd.f32 0.0, %v3918
        %v3920 = vpop.f32.mrb[0].mxu0
        %v3921 = vpop.f32.mrb[0].mxu0
        %v3922 = vadd.f32 0.0, %v3921
        %v3923 = vpop.f32.mrb[0].mxu0
        %3924 = vmatprep.mubr.bf16.mxu0 0
        %3925 = vmatmul.mubr.bf16.gmra.mrb[0].mxu0 %v3812
        %v3926 = vpop.f32.mrb[0].mxu0
        %v3927 = vadd.f32 0.0, %v3926
        %v3928 = vpop.f32.mrb[0].mxu0
        %v3929 = vpop.f32.mrb[0].mxu0
        %v3930 = vadd.f32 0.0, %v3929
        %v3931 = vpop.f32.mrb[0].mxu0
        %3932 = vmatprep.mubr.bf16.mxu0 0
        %3933 = vmatmul.mubr.bf16.gmra.mrb[0].mxu0 %v3815
        %v3934 = vpop.f32.mrb[0].mxu0
        %v3935 = vadd.f32 0.0, %v3934
        %v3936 = vpop.f32.mrb[0].mxu0
        %v3937 = vpop.f32.mrb[0].mxu0
        %v3938 = vadd.f32 0.0, %v3937
        %v3939 = vpop.f32.mrb[0].mxu0
        %3940 = vmatprep.mubr.bf16.mxu0 0
        %3941 = vmatmul.mubr.bf16.gmra.mrb[0].mxu0 %v3818
        %v3942 = vpop.f32.mrb[0].mxu0
        %v3943 = vadd.f32 0.0, %v3942
        %v3944 = vpop.f32.mrb[0].mxu0
        %v3945 = vpop.f32.mrb[0].mxu0
        %v3946 = vadd.f32 0.0, %v3945
        %v3947 = vpop.f32.mrb[0].mxu0
        %3948 = vmatprep.mubr.bf16.mxu0 0
        %3949 = vmatmul.mubr.bf16.gmra.mrb[0].mxu0 %v3821
        %v3950 = vpop.f32.mrb[0].mxu0
        %v3951 = vadd.f32 0.0, %v3950
        %v3952 = vpop.f32.mrb[0].mxu0
        %v3953 = vpop.f32.mrb[0].mxu0
        %v3954 = vadd.f32 0.0, %v3953
        %v3955 = vpop.f32.mrb[0].mxu0
        %3956 = vmatprep.mubr.bf16.mxu0 0
        %3957 = vmatmul.mubr.bf16.gmra.mrb[0].mxu0 %v3824
        %v3958 = vpop.f32.mrb[0].mxu0
        %v3959 = vadd.f32 0.0, %v3958
        %v3960 = vpop.f32.mrb[0].mxu0
        %v3961 = vpop.f32.mrb[0].mxu0
        %v3962 = vadd.f32 0.0, %v3961
        %v3963 = vpop.f32.mrb[0].mxu0
        %3964 = vmatprep.mubr.bf16.mxu0 0
        %3965 = vmatmul.mubr.bf16.gmra.mrb[0].mxu0 %v3827
        %v3966 = vpop.f32.mrb[0].mxu0
        %v3967 = vadd.f32 0.0, %v3966
        %v3968 = vpop.f32.mrb[0].mxu0
        %v3969 = vpop.f32.mrb[0].mxu0
        %v3970 = vadd.f32 0.0, %v3969
        %v3971 = vpop.f32.mrb[0].mxu0
        %3972 = vmatprep.mubr.bf16.mxu0 0
        %3973 = vmatmul.mubr.bf16.gmra.mrb[0].mxu0 %v3830
        %v3974 = vpop.f32.mrb[0].mxu0
        %v3975 = vadd.f32 0.0, %v3974
        %v3976 = vpop.f32.mrb[0].mxu0
        %v3977 = vpop.f32.mrb[0].mxu0
        %v3978 = vadd.f32 0.0, %v3977
        %v3979 = vpop.f32.mrb[0].mxu0
        %3980 = vmatprep.mubr.bf16.mxu0 0
        %3981 = vmatmul.mubr.bf16.gmra.mrb[0].mxu0 %v3833
        %v3982 = vpop.f32.mrb[0].mxu0
        %v3983 = vadd.f32 0.0, %v3982
        %v3984 = vpop.f32.mrb[0].mxu0
        %v3985 = vpop.f32.mrb[0].mxu0
        %v3986 = vadd.f32 0.0, %v3985
        %v3987 = vpop.f32.mrb[0].mxu0
        %3988 = vmatprep.mubr.bf16.mxu0 0
        %3989 = vmatmul.mubr.bf16.gmra.mrb[0].mxu0 %v3836
        %v3990 = vpop.f32.mrb[0].mxu0
        %v3991 = vadd.f32 0.0, %v3990
        %v3992 = vpop.f32.mrb[0].mxu0
        %v3993 = vpop.f32.mrb[0].mxu0
        %v3994 = vadd.f32 0.0, %v3993
        %v3995 = vpop.f32.mrb[0].mxu0
        %3996 = vmatprep.mubr.bf16.mxu0 0
        %3997 = vmatmul.mubr.bf16.gmra.mrb[0].mxu0 %v3839
        %v3998 = vpop.f32.mrb[0].mxu0
        %v3999 = vadd.f32 0.0, %v3998
        %v4000 = vpop.f32.mrb[0].mxu0
        %v4001 = vpop.f32.mrb[0].mxu0
        %v4002 = vadd.f32 0.0, %v4001
        %v4003 = vpop.f32.mrb[0].mxu0
        %4004 = vdwg.mxu0
        %v4005 = vadd.f32 %v3646, %v3879
        %v4006 = vadd.f32 %v3647, %v3882
        %v4007 = vadd.f32 %v3648, %v3887
        %v4008 = vadd.f32 %v3649, %v3890
        %v4009 = vadd.f32 %v3650, %v3895
        %v4010 = vadd.f32 %v3651, %v3898
        %v4011 = vadd.f32 %v3652, %v3903
        %v4012 = vadd.f32 %v3653, %v3906
        %v4013 = vadd.f32 %v3654, %v3911
        %v4014 = vadd.f32 %v3655, %v3914
        %v4015 = vadd.f32 %v3656, %v3919
        %v4016 = vadd.f32 %v3657, %v3922
        %v4017 = vadd.f32 %v3658, %v3927
        %v4018 = vadd.f32 %v3659, %v3930
        %v4019 = vadd.f32 %v3660, %v3935
        %v4020 = vadd.f32 %v3661, %v3938
        %v4021 = vadd.f32 %v3662, %v3943
        %v4022 = vadd.f32 %v3663, %v3946
        %v4023 = vadd.f32 %v3664, %v3951
        %v4024 = vadd.f32 %v3665, %v3954
        %v4025 = vadd.f32 %v3666, %v3959
        %v4026 = vadd.f32 %v3667, %v3962
        %v4027 = vadd.f32 %v3668, %v3967
        %v4028 = vadd.f32 %v3669, %v3970
        %v4029 = vadd.f32 %v3670, %v3975
        %v4030 = vadd.f32 %v3671, %v3978
        %v4031 = vadd.f32 %v3672, %v3983
        %v4032 = vadd.f32 %v3673, %v3986
        %v4033 = vadd.f32 %v3674, %v3991
        %v4034 = vadd.f32 %v3675, %v3994
        %v4035 = vadd.f32 %v3676, %v3999
        %v4036 = vadd.f32 %v3677, %v4002
        %v4037 = vld [vmem:[%s3678] sm:$0xf]
        %v4038 = vld [vmem:[%s3678 + $0x4] sm:$0xf]
        %v4039 = vld [vmem:[%s3678 + $0x8] sm:$0x1]
        %v4040 = vld [vmem:[%s3678 + $0xc] sm:$0xf]
        %v4041 = vld [vmem:[%s3678 + $0x10] sm:$0xf]
        %v4042 = vld [vmem:[%s3678 + $0x14] sm:$0x1]
        %v4043 = vld [vmem:[%s3678 + $0x18] sm:$0xf]
        %v4044 = vld [vmem:[%s3678 + $0x1c] sm:$0xf]
        %v4045 = vld [vmem:[%s3678 + $0x20] sm:$0x1]
        %v4046 = vld [vmem:[%s3678 + $0x24] sm:$0xf]
        %v4047 = vld [vmem:[%s3678 + $0x28] sm:$0xf]
        %v4048 = vld [vmem:[%s3678 + $0x2c] sm:$0x1]
        %v4049 = vld [vmem:[%s3678 + $0x30] sm:$0xf]
        %v4050 = vld [vmem:[%s3678 + $0x34] sm:$0xf]
        %v4051 = vld [vmem:[%s3678 + $0x38] sm:$0x1]
        %v4052 = vld [vmem:[%s3678 + $0x3c] sm:$0xf]
        %v4053 = vld [vmem:[%s3678 + $0x40] sm:$0xf]
        %v4054 = vld [vmem:[%s3678 + $0x44] sm:$0x1]
        %v4055 = vld [vmem:[%s3678 + $0x48] sm:$0xf]
        %v4056 = vld [vmem:[%s3678 + $0x4c] sm:$0xf]
        %v4057 = vld [vmem:[%s3678 + $0x50] sm:$0x1]
        %v4058 = vld [vmem:[%s3678 + $0x54] sm:$0xf]
        %v4059 = vld [vmem:[%s3678 + $0x58] sm:$0xf]
        %v4060 = vld [vmem:[%s3678 + $0x5c] sm:$0x1]
        %v4061 = vld [vmem:[%s3678 + $0x60] sm:$0xf]
        %v4062 = vld [vmem:[%s3678 + $0x64] sm:$0xf]
        %v4063 = vld [vmem:[%s3678 + $0x68] sm:$0x1]
        %v4064 = vld [vmem:[%s3678 + $0x6c] sm:$0xf]
        %v4065 = vld [vmem:[%s3678 + $0x70] sm:$0xf]
        %v4066 = vld [vmem:[%s3678 + $0x74] sm:$0x1]
        %v4067 = vld [vmem:[%s3678 + $0x78] sm:$0xf]
        %v4068 = vld [vmem:[%s3678 + $0x7c] sm:$0xf]
        %v4069 = vld [vmem:[%s3678 + $0x80] sm:$0x1]
        %v4070 = vld [vmem:[%s3678 + $0x84] sm:$0xf]
        %v4071 = vld [vmem:[%s3678 + $0x88] sm:$0xf]
        %v4072 = vld [vmem:[%s3678 + $0x8c] sm:$0x1]
        %v4073 = vld [vmem:[%s3678 + $0x90] sm:$0xf]
        %v4074 = vld [vmem:[%s3678 + $0x94] sm:$0xf]
        %v4075 = vld [vmem:[%s3678 + $0x98] sm:$0x1]
        %v4076 = vld [vmem:[%s3678 + $0x9c] sm:$0xf]
        %v4077 = vld [vmem:[%s3678 + $0xa0] sm:$0xf]
        %v4078 = vld [vmem:[%s3678 + $0xa4] sm:$0x1]
        %v4079 = vld [vmem:[%s3678 + $0xa8] sm:$0xf]
        %v4080 = vld [vmem:[%s3678 + $0xac] sm:$0xf]
        %v4081 = vld [vmem:[%s3678 + $0xb0] sm:$0x1]
        %v4082 = vld [vmem:[%s3678 + $0xb4] sm:$0xf]
        %v4083 = vld [vmem:[%s3678 + $0xb8] sm:$0xf]
        %v4084 = vld [vmem:[%s3678 + $0xbc] sm:$0x1]
        %v4086 = vshrl.u32 %v4037, 16
        %v4088 = vrot.slane %v4086, 4
        %v4089 = vshll.u32 %v4037, 16
        %v4091 = vrot.slane %v4089, 5
        %v4092 = vor.u32 %v4088, %v4091
        %v4093 = vrot.slane %v4092, 4
        %v4095 = vshll.u32 %v4038, 16
        %v4097 = vrot.slane %v4095, 5
        %v4098 = vsel %vm723, %v4093, %v4097
        %v4099 = vshrl.u32 %v4038, 16
        %v4101 = vrot.slane %v4099, 4
        %v4102 = vor.u32 %v4101, %v4097
        %v4103 = vrot.slane %v4102, 4
        %v4105 = vshll.u32 %v4039, 16
        %v4107 = vrot.slane %v4105, 5
        %v4108 = vsel %vm723, %v4103, %v4107
        %v4110 = vshrl.u32 %v4040, 16
        %v4112 = vrot.slane %v4110, 4
        %v4113 = vshll.u32 %v4040, 16
        %v4115 = vrot.slane %v4113, 5
        %v4116 = vor.u32 %v4112, %v4115
        %v4117 = vrot.slane %v4116, 4
        %v4119 = vshll.u32 %v4041, 16
        %v4121 = vrot.slane %v4119, 5
        %v4122 = vsel %vm723, %v4117, %v4121
        %v4123 = vshrl.u32 %v4041, 16
        %v4125 = vrot.slane %v4123, 4
        %v4126 = vor.u32 %v4125, %v4121
        %v4127 = vrot.slane %v4126, 4
        %v4129 = vshll.u32 %v4042, 16
        %v4131 = vrot.slane %v4129, 5
        %v4132 = vsel %vm723, %v4127, %v4131
        %v4134 = vshrl.u32 %v4043, 16
        %v4136 = vrot.slane %v4134, 4
        %v4137 = vshll.u32 %v4043, 16
        %v4139 = vrot.slane %v4137, 5
        %v4140 = vor.u32 %v4136, %v4139
        %v4141 = vrot.slane %v4140, 4
        %v4143 = vshll.u32 %v4044, 16
        %v4145 = vrot.slane %v4143, 5
        %v4146 = vsel %vm723, %v4141, %v4145
        %v4147 = vshrl.u32 %v4044, 16
        %v4149 = vrot.slane %v4147, 4
        %v4150 = vor.u32 %v4149, %v4145
        %v4151 = vrot.slane %v4150, 4
        %v4153 = vshll.u32 %v4045, 16
        %v4155 = vrot.slane %v4153, 5
        %v4156 = vsel %vm723, %v4151, %v4155
        %v4158 = vshrl.u32 %v4046, 16
        %v4160 = vrot.slane %v4158, 4
        %v4161 = vshll.u32 %v4046, 16
        %v4163 = vrot.slane %v4161, 5
        %v4164 = vor.u32 %v4160, %v4163
        %v4165 = vrot.slane %v4164, 4
        %v4167 = vshll.u32 %v4047, 16
        %v4169 = vrot.slane %v4167, 5
        %v4170 = vsel %vm723, %v4165, %v4169
        %v4171 = vshrl.u32 %v4047, 16
        %v4173 = vrot.slane %v4171, 4
        %v4174 = vor.u32 %v4173, %v4169
        %v4175 = vrot.slane %v4174, 4
        %v4177 = vshll.u32 %v4048, 16
        %v4179 = vrot.slane %v4177, 5
        %v4180 = vsel %vm723, %v4175, %v4179
        %v4182 = vshrl.u32 %v4049, 16
        %v4184 = vrot.slane %v4182, 4
        %v4185 = vshll.u32 %v4049, 16
        %v4187 = vrot.slane %v4185, 5
        %v4188 = vor.u32 %v4184, %v4187
        %v4189 = vrot.slane %v4188, 4
        %v4191 = vshll.u32 %v4050, 16
        %v4193 = vrot.slane %v4191, 5
        %v4194 = vsel %vm723, %v4189, %v4193
        %v4195 = vshrl.u32 %v4050, 16
        %v4197 = vrot.slane %v4195, 4
        %v4198 = vor.u32 %v4197, %v4193
        %v4199 = vrot.slane %v4198, 4
        %v4201 = vshll.u32 %v4051, 16
        %v4203 = vrot.slane %v4201, 5
        %v4204 = vsel %vm723, %v4199, %v4203
        %v4206 = vshrl.u32 %v4052, 16
        %v4208 = vrot.slane %v4206, 4
        %v4209 = vshll.u32 %v4052, 16
        %v4211 = vrot.slane %v4209, 5
        %v4212 = vor.u32 %v4208, %v4211
        %v4213 = vrot.slane %v4212, 4
        %v4215 = vshll.u32 %v4053, 16
        %v4217 = vrot.slane %v4215, 5
        %v4218 = vsel %vm723, %v4213, %v4217
        %v4219 = vshrl.u32 %v4053, 16
        %v4221 = vrot.slane %v4219, 4
        %v4222 = vor.u32 %v4221, %v4217
        %v4223 = vrot.slane %v4222, 4
        %v4225 = vshll.u32 %v4054, 16
        %v4227 = vrot.slane %v4225, 5
        %v4228 = vsel %vm723, %v4223, %v4227
        %v4230 = vshrl.u32 %v4055, 16
        %v4232 = vrot.slane %v4230, 4
        %v4233 = vshll.u32 %v4055, 16
        %v4235 = vrot.slane %v4233, 5
        %v4236 = vor.u32 %v4232, %v4235
        %v4237 = vrot.slane %v4236, 4
        %v4239 = vshll.u32 %v4056, 16
        %v4241 = vrot.slane %v4239, 5
        %v4242 = vsel %vm723, %v4237, %v4241
        %v4243 = vshrl.u32 %v4056, 16
        %v4245 = vrot.slane %v4243, 4
        %v4246 = vor.u32 %v4245, %v4241
        %v4247 = vrot.slane %v4246, 4
        %v4249 = vshll.u32 %v4057, 16
        %v4251 = vrot.slane %v4249, 5
        %v4252 = vsel %vm723, %v4247, %v4251
        %v4254 = vshrl.u32 %v4058, 16
        %v4256 = vrot.slane %v4254, 4
        %v4257 = vshll.u32 %v4058, 16
        %v4259 = vrot.slane %v4257, 5
        %v4260 = vor.u32 %v4256, %v4259
        %v4261 = vrot.slane %v4260, 4
        %v4263 = vshll.u32 %v4059, 16
        %v4265 = vrot.slane %v4263, 5
        %v4266 = vsel %vm723, %v4261, %v4265
        %v4267 = vshrl.u32 %v4059, 16
        %v4269 = vrot.slane %v4267, 4
        %v4270 = vor.u32 %v4269, %v4265
        %v4271 = vrot.slane %v4270, 4
        %v4273 = vshll.u32 %v4060, 16
        %v4275 = vrot.slane %v4273, 5
        %v4276 = vsel %vm723, %v4271, %v4275
        %v4278 = vshrl.u32 %v4061, 16
        %v4280 = vrot.slane %v4278, 4
        %v4281 = vshll.u32 %v4061, 16
        %v4283 = vrot.slane %v4281, 5
        %v4284 = vor.u32 %v4280, %v4283
        %v4285 = vrot.slane %v4284, 4
        %v4287 = vshll.u32 %v4062, 16
        %v4289 = vrot.slane %v4287, 5
        %v4290 = vsel %vm723, %v4285, %v4289
        %v4291 = vshrl.u32 %v4062, 16
        %v4293 = vrot.slane %v4291, 4
        %v4294 = vor.u32 %v4293, %v4289
        %v4295 = vrot.slane %v4294, 4
        %v4297 = vshll.u32 %v4063, 16
        %v4299 = vrot.slane %v4297, 5
        %v4300 = vsel %vm723, %v4295, %v4299
        %v4302 = vshrl.u32 %v4064, 16
        %v4304 = vrot.slane %v4302, 4
        %v4305 = vshll.u32 %v4064, 16
        %v4307 = vrot.slane %v4305, 5
        %v4308 = vor.u32 %v4304, %v4307
        %v4309 = vrot.slane %v4308, 4
        %v4311 = vshll.u32 %v4065, 16
        %v4313 = vrot.slane %v4311, 5
        %v4314 = vsel %vm723, %v4309, %v4313
        %v4315 = vshrl.u32 %v4065, 16
        %v4317 = vrot.slane %v4315, 4
        %v4318 = vor.u32 %v4317, %v4313
        %v4319 = vrot.slane %v4318, 4
        %v4321 = vshll.u32 %v4066, 16
        %v4323 = vrot.slane %v4321, 5
        %v4324 = vsel %vm723, %v4319, %v4323
        %v4326 = vshrl.u32 %v4067, 16
        %v4328 = vrot.slane %v4326, 4
        %v4329 = vshll.u32 %v4067, 16
        %v4331 = vrot.slane %v4329, 5
        %v4332 = vor.u32 %v4328, %v4331
        %v4333 = vrot.slane %v4332, 4
        %v4335 = vshll.u32 %v4068, 16
        %v4337 = vrot.slane %v4335, 5
        %v4338 = vsel %vm723, %v4333, %v4337
        %v4339 = vshrl.u32 %v4068, 16
        %v4341 = vrot.slane %v4339, 4
        %v4342 = vor.u32 %v4341, %v4337
        %v4343 = vrot.slane %v4342, 4
        %v4345 = vshll.u32 %v4069, 16
        %v4347 = vrot.slane %v4345, 5
        %v4348 = vsel %vm723, %v4343, %v4347
        %v4350 = vshrl.u32 %v4070, 16
        %v4352 = vrot.slane %v4350, 4
        %v4353 = vshll.u32 %v4070, 16
        %v4355 = vrot.slane %v4353, 5
        %v4356 = vor.u32 %v4352, %v4355
        %v4357 = vrot.slane %v4356, 4
        %v4359 = vshll.u32 %v4071, 16
        %v4361 = vrot.slane %v4359, 5
        %v4362 = vsel %vm723, %v4357, %v4361
        %v4363 = vshrl.u32 %v4071, 16
        %v4365 = vrot.slane %v4363, 4
        %v4366 = vor.u32 %v4365, %v4361
        %v4367 = vrot.slane %v4366, 4
        %v4369 = vshll.u32 %v4072, 16
        %v4371 = vrot.slane %v4369, 5
        %v4372 = vsel %vm723, %v4367, %v4371
        %v4374 = vshrl.u32 %v4073, 16
        %v4376 = vrot.slane %v4374, 4
        %v4377 = vshll.u32 %v4073, 16
        %v4379 = vrot.slane %v4377, 5
        %v4380 = vor.u32 %v4376, %v4379
        %v4381 = vrot.slane %v4380, 4
        %v4383 = vshll.u32 %v4074, 16
        %v4385 = vrot.slane %v4383, 5
        %v4386 = vsel %vm723, %v4381, %v4385
        %v4387 = vshrl.u32 %v4074, 16
        %v4389 = vrot.slane %v4387, 4
        %v4390 = vor.u32 %v4389, %v4385
        %v4391 = vrot.slane %v4390, 4
        %v4393 = vshll.u32 %v4075, 16
        %v4395 = vrot.slane %v4393, 5
        %v4396 = vsel %vm723, %v4391, %v4395
        %v4398 = vshrl.u32 %v4076, 16
        %v4400 = vrot.slane %v4398, 4
        %v4401 = vshll.u32 %v4076, 16
        %v4403 = vrot.slane %v4401, 5
        %v4404 = vor.u32 %v4400, %v4403
        %v4405 = vrot.slane %v4404, 4
        %v4407 = vshll.u32 %v4077, 16
        %v4409 = vrot.slane %v4407, 5
        %v4410 = vsel %vm723, %v4405, %v4409
        %v4411 = vshrl.u32 %v4077, 16
        %v4413 = vrot.slane %v4411, 4
        %v4414 = vor.u32 %v4413, %v4409
        %v4415 = vrot.slane %v4414, 4
        %v4417 = vshll.u32 %v4078, 16
        %v4419 = vrot.slane %v4417, 5
        %v4420 = vsel %vm723, %v4415, %v4419
        %v4422 = vshrl.u32 %v4079, 16
        %v4424 = vrot.slane %v4422, 4
        %v4425 = vshll.u32 %v4079, 16
        %v4427 = vrot.slane %v4425, 5
        %v4428 = vor.u32 %v4424, %v4427
        %v4429 = vrot.slane %v4428, 4
        %v4431 = vshll.u32 %v4080, 16
        %v4433 = vrot.slane %v4431, 5
        %v4434 = vsel %vm723, %v4429, %v4433
        %v4435 = vshrl.u32 %v4080, 16
        %v4437 = vrot.slane %v4435, 4
        %v4438 = vor.u32 %v4437, %v4433
        %v4439 = vrot.slane %v4438, 4
        %v4441 = vshll.u32 %v4081, 16
        %v4443 = vrot.slane %v4441, 5
        %v4444 = vsel %vm723, %v4439, %v4443
        %v4446 = vshrl.u32 %v4082, 16
        %v4448 = vrot.slane %v4446, 4
        %v4449 = vshll.u32 %v4082, 16
        %v4451 = vrot.slane %v4449, 5
        %v4452 = vor.u32 %v4448, %v4451
        %v4453 = vrot.slane %v4452, 4
        %v4455 = vshll.u32 %v4083, 16
        %v4457 = vrot.slane %v4455, 5
        %v4458 = vsel %vm723, %v4453, %v4457
        %v4459 = vshrl.u32 %v4083, 16
        %v4461 = vrot.slane %v4459, 4
        %v4462 = vor.u32 %v4461, %v4457
        %v4463 = vrot.slane %v4462, 4
        %v4465 = vshll.u32 %v4084, 16
        %v4467 = vrot.slane %v4465, 5
        %v4468 = vsel %vm723, %v4463, %v4467
        %s4469 = scalar_lea.vmem %s1, 14
        %v4470 = vld [vmem:[%s4469] sm:$0x3]
        %v4471 = vunpack.c.l.b16 %v4098
        %v4472 = vunpack.c.l.b16 %v4108
        %v4473 = vunpack.c.l.b16 %v4122
        %v4474 = vunpack.c.l.b16 %v4132
        %v4475 = vunpack.c.l.b16 %v4146
        %v4476 = vunpack.c.l.b16 %v4156
        %v4477 = vunpack.c.l.b16 %v4170
        %v4478 = vunpack.c.l.b16 %v4180
        %v4479 = vunpack.c.l.b16 %v4194
        %v4480 = vunpack.c.l.b16 %v4204
        %v4481 = vunpack.c.l.b16 %v4218
        %v4482 = vunpack.c.l.b16 %v4228
        %v4483 = vunpack.c.l.b16 %v4242
        %v4484 = vunpack.c.l.b16 %v4252
        %v4485 = vunpack.c.l.b16 %v4266
        %v4486 = vunpack.c.l.b16 %v4276
        %v4487 = vunpack.c.l.b16 %v4290
        %v4488 = vunpack.c.l.b16 %v4300
        %v4489 = vunpack.c.l.b16 %v4314
        %v4490 = vunpack.c.l.b16 %v4324
        %v4491 = vunpack.c.l.b16 %v4338
        %v4492 = vunpack.c.l.b16 %v4348
        %v4493 = vunpack.c.l.b16 %v4362
        %v4494 = vunpack.c.l.b16 %v4372
        %v4495 = vunpack.c.l.b16 %v4386
        %v4496 = vunpack.c.l.b16 %v4396
        %v4497 = vunpack.c.l.b16 %v4410
        %v4498 = vunpack.c.l.b16 %v4420
        %v4499 = vunpack.c.l.b16 %v4434
        %v4500 = vunpack.c.l.b16 %v4444
        %v4501 = vunpack.c.l.b16 %v4458
        %v4502 = vunpack.c.l.b16 %v4468
        %v4503 = vpack.c.b16 %v4472, %v4471
        %v4504 = vpack.c.b16 %v4474, %v4473
        %v4505 = vpack.c.b16 %v4476, %v4475
        %v4506 = vpack.c.b16 %v4478, %v4477
        %v4507 = vpack.c.b16 %v4480, %v4479
        %v4508 = vpack.c.b16 %v4482, %v4481
        %v4509 = vpack.c.b16 %v4484, %v4483
        %v4510 = vpack.c.b16 %v4486, %v4485
        %v4511 = vpack.c.b16 %v4488, %v4487
        %v4512 = vpack.c.b16 %v4490, %v4489
        %v4513 = vpack.c.b16 %v4492, %v4491
        %v4514 = vpack.c.b16 %v4494, %v4493
        %v4515 = vpack.c.b16 %v4496, %v4495
        %v4516 = vpack.c.b16 %v4498, %v4497
        %v4517 = vpack.c.b16 %v4500, %v4499
        %v4518 = vpack.c.b16 %v4502, %v4501
        %v4520 = vsel %vm1158, %v4503, 0
        %v4523 = vsel %vm1158, %v4504, 0
        %v4526 = vsel %vm1158, %v4505, 0
        %v4529 = vsel %vm1158, %v4506, 0
        %v4532 = vsel %vm1158, %v4507, 0
        %v4535 = vsel %vm1158, %v4508, 0
        %v4538 = vsel %vm1158, %v4509, 0
        %v4541 = vsel %vm1158, %v4510, 0
        %v4544 = vsel %vm1158, %v4511, 0
        %v4547 = vsel %vm1158, %v4512, 0
        %v4550 = vsel %vm1158, %v4513, 0
        %v4553 = vsel %vm1158, %v4514, 0
        %v4556 = vsel %vm1158, %v4515, 0
        %v4559 = vsel %vm1158, %v4516, 0
        %v4562 = vsel %vm1158, %v4517, 0
        %v4565 = vsel %vm1158, %v4518, 0
        %v4568 = vand.u32 %v4470, %v1210
        %4570 = vmatprep.subr.bf16.mxu0 0
        %4571 = vmatpush1.bf16.msra.mxu0 %v4568
        %4572 = vmatprep.subr.bf16.mxu0 0
        %4573 = vmatpush1.bf16.msra.mxu0 0
        %4574 = vmatprep.subr.bf16.mxu0 0
        %4575 = vmatpush1.bf16.msra.mxu0 0
        %4576 = vmatprep.subr.bf16.mxu0 0
        %4577 = vmatpush1.bf16.msra.mxu0 0
        %4578 = vmatprep.subr.bf16.mxu0 0
        %4579 = vmatpush1.bf16.msra.mxu0 0
        %4580 = vmatprep.subr.bf16.mxu0 0
        %4581 = vmatpush1.bf16.msra.mxu0 0
        %4582 = vmatprep.subr.bf16.mxu0 0
        %4583 = vmatpush1.bf16.msra.mxu0 0
        %4584 = vmatprep.subr.bf16.mxu0 0
        %4585 = vmatpush1.bf16.msra.mxu0 0
        %4586 = vmatprep.subr.bf16.mxu0 0
        %4587 = vmatpush1.bf16.msra.mxu0 0
        %4588 = vmatprep.subr.bf16.mxu0 0
        %4589 = vmatpush1.bf16.msra.mxu0 0
        %4590 = vmatprep.subr.bf16.mxu0 0
        %4591 = vmatpush1.bf16.msra.mxu0 0
        %4592 = vmatprep.subr.bf16.mxu0 0
        %4593 = vmatpush1.bf16.msra.mxu0 0
        %4594 = vmatprep.subr.bf16.mxu0 0
        %4595 = vmatpush1.bf16.msra.mxu0 0
        %4596 = vmatprep.subr.bf16.mxu0 0
        %4597 = vmatpush1.bf16.msra.mxu0 0
        %4598 = vmatprep.subr.bf16.mxu0 0
        %4599 = vmatpush1.bf16.msra.mxu0 0
        %4600 = vmatprep.subr.bf16.mxu0 0
        %4601 = vmatpush1.bf16.msra.mxu0 0
        %4602 = vmatprep.mubr.bf16.mxu0 0
        %4603 = vmatmul.mubr.bf16.gmra.mrb[0].mxu0 %v4520
        %v4604 = vpop.f32.mrb[0].mxu0
        %v4605 = vadd.f32 0.0, %v4604
        %v4606 = vpop.f32.mrb[0].mxu0
        %v4607 = vpop.f32.mrb[0].mxu0
        %v4608 = vadd.f32 0.0, %v4607
        %v4609 = vpop.f32.mrb[0].mxu0
        %4610 = vmatprep.mubr.bf16.mxu0 0
        %4611 = vmatmul.mubr.bf16.gmra.mrb[0].mxu0 %v4523
        %v4612 = vpop.f32.mrb[0].mxu0
        %v4613 = vadd.f32 0.0, %v4612
        %v4614 = vpop.f32.mrb[0].mxu0
        %v4615 = vpop.f32.mrb[0].mxu0
        %v4616 = vadd.f32 0.0, %v4615
        %v4617 = vpop.f32.mrb[0].mxu0
        %4618 = vmatprep.mubr.bf16.mxu0 0
        %4619 = vmatmul.mubr.bf16.gmra.mrb[0].mxu0 %v4526
        %v4620 = vpop.f32.mrb[0].mxu0
        %v4621 = vadd.f32 0.0, %v4620
        %v4622 = vpop.f32.mrb[0].mxu0
        %v4623 = vpop.f32.mrb[0].mxu0
        %v4624 = vadd.f32 0.0, %v4623
        %v4625 = vpop.f32.mrb[0].mxu0
        %4626 = vmatprep.mubr.bf16.mxu0 0
        %4627 = vmatmul.mubr.bf16.gmra.mrb[0].mxu0 %v4529
        %v4628 = vpop.f32.mrb[0].mxu0
        %v4629 = vadd.f32 0.0, %v4628
        %v4630 = vpop.f32.mrb[0].mxu0
        %v4631 = vpop.f32.mrb[0].mxu0
        %v4632 = vadd.f32 0.0, %v4631
        %v4633 = vpop.f32.mrb[0].mxu0
        %4634 = vmatprep.mubr.bf16.mxu0 0
        %4635 = vmatmul.mubr.bf16.gmra.mrb[0].mxu0 %v4532
        %v4636 = vpop.f32.mrb[0].mxu0
        %v4637 = vadd.f32 0.0, %v4636
        %v4638 = vpop.f32.mrb[0].mxu0
        %v4639 = vpop.f32.mrb[0].mxu0
        %v4640 = vadd.f32 0.0, %v4639
        %v4641 = vpop.f32.mrb[0].mxu0
        %4642 = vmatprep.mubr.bf16.mxu0 0
        %4643 = vmatmul.mubr.bf16.gmra.mrb[0].mxu0 %v4535
        %v4644 = vpop.f32.mrb[0].mxu0
        %v4645 = vadd.f32 0.0, %v4644
        %v4646 = vpop.f32.mrb[0].mxu0
        %v4647 = vpop.f32.mrb[0].mxu0
        %v4648 = vadd.f32 0.0, %v4647
        %v4649 = vpop.f32.mrb[0].mxu0
        %4650 = vmatprep.mubr.bf16.mxu0 0
        %4651 = vmatmul.mubr.bf16.gmra.mrb[0].mxu0 %v4538
        %v4652 = vpop.f32.mrb[0].mxu0
        %v4653 = vadd.f32 0.0, %v4652
        %v4654 = vpop.f32.mrb[0].mxu0
        %v4655 = vpop.f32.mrb[0].mxu0
        %v4656 = vadd.f32 0.0, %v4655
        %v4657 = vpop.f32.mrb[0].mxu0
        %4658 = vmatprep.mubr.bf16.mxu0 0
        %4659 = vmatmul.mubr.bf16.gmra.mrb[0].mxu0 %v4541
        %v4660 = vpop.f32.mrb[0].mxu0
        %v4661 = vadd.f32 0.0, %v4660
        %v4662 = vpop.f32.mrb[0].mxu0
        %v4663 = vpop.f32.mrb[0].mxu0
        %v4664 = vadd.f32 0.0, %v4663
        %v4665 = vpop.f32.mrb[0].mxu0
        %4666 = vmatprep.mubr.bf16.mxu0 0
        %4667 = vmatmul.mubr.bf16.gmra.mrb[0].mxu0 %v4544
        %v4668 = vpop.f32.mrb[0].mxu0
        %v4669 = vadd.f32 0.0, %v4668
        %v4670 = vpop.f32.mrb[0].mxu0
        %v4671 = vpop.f32.mrb[0].mxu0
        %v4672 = vadd.f32 0.0, %v4671
        %v4673 = vpop.f32.mrb[0].mxu0
        %4674 = vmatprep.mubr.bf16.mxu0 0
        %4675 = vmatmul.mubr.bf16.gmra.mrb[0].mxu0 %v4547
        %v4676 = vpop.f32.mrb[0].mxu0
        %v4677 = vadd.f32 0.0, %v4676
        %v4678 = vpop.f32.mrb[0].mxu0
        %v4679 = vpop.f32.mrb[0].mxu0
        %v4680 = vadd.f32 0.0, %v4679
        %v4681 = vpop.f32.mrb[0].mxu0
        %4682 = vmatprep.mubr.bf16.mxu0 0
        %4683 = vmatmul.mubr.bf16.gmra.mrb[0].mxu0 %v4550
        %v4684 = vpop.f32.mrb[0].mxu0
        %v4685 = vadd.f32 0.0, %v4684
        %v4686 = vpop.f32.mrb[0].mxu0
        %v4687 = vpop.f32.mrb[0].mxu0
        %v4688 = vadd.f32 0.0, %v4687
        %v4689 = vpop.f32.mrb[0].mxu0
        %4690 = vmatprep.mubr.bf16.mxu0 0
        %4691 = vmatmul.mubr.bf16.gmra.mrb[0].mxu0 %v4553
        %v4692 = vpop.f32.mrb[0].mxu0
        %v4693 = vadd.f32 0.0, %v4692
        %v4694 = vpop.f32.mrb[0].mxu0
        %v4695 = vpop.f32.mrb[0].mxu0
        %v4696 = vadd.f32 0.0, %v4695
        %v4697 = vpop.f32.mrb[0].mxu0
        %4698 = vmatprep.mubr.bf16.mxu0 0
        %4699 = vmatmul.mubr.bf16.gmra.mrb[0].mxu0 %v4556
        %v4700 = vpop.f32.mrb[0].mxu0
        %v4701 = vadd.f32 0.0, %v4700
        %v4702 = vpop.f32.mrb[0].mxu0
        %v4703 = vpop.f32.mrb[0].mxu0
        %v4704 = vadd.f32 0.0, %v4703
        %v4705 = vpop.f32.mrb[0].mxu0
        %4706 = vmatprep.mubr.bf16.mxu0 0
        %4707 = vmatmul.mubr.bf16.gmra.mrb[0].mxu0 %v4559
        %v4708 = vpop.f32.mrb[0].mxu0
        %v4709 = vadd.f32 0.0, %v4708
        %v4710 = vpop.f32.mrb[0].mxu0
        %v4711 = vpop.f32.mrb[0].mxu0
        %v4712 = vadd.f32 0.0, %v4711
        %v4713 = vpop.f32.mrb[0].mxu0
        %4714 = vmatprep.mubr.bf16.mxu0 0
        %4715 = vmatmul.mubr.bf16.gmra.mrb[0].mxu0 %v4562
        %v4716 = vpop.f32.mrb[0].mxu0
        %v4717 = vadd.f32 0.0, %v4716
        %v4718 = vpop.f32.mrb[0].mxu0
        %v4719 = vpop.f32.mrb[0].mxu0
        %v4720 = vadd.f32 0.0, %v4719
        %v4721 = vpop.f32.mrb[0].mxu0
        %4722 = vmatprep.mubr.bf16.mxu0 0
        %4723 = vmatmul.mubr.bf16.gmra.mrb[0].mxu0 %v4565
        %v4724 = vpop.f32.mrb[0].mxu0
        %v4725 = vadd.f32 0.0, %v4724
        %v4726 = vpop.f32.mrb[0].mxu0
        %v4727 = vpop.f32.mrb[0].mxu0
        %v4728 = vadd.f32 0.0, %v4727
        %v4729 = vpop.f32.mrb[0].mxu0
        %4730 = vdwg.mxu0
        %v4731 = vadd.f32 %v4005, %v4605
        %v4732 = vadd.f32 %v4006, %v4608
        %v4733 = vadd.f32 %v4007, %v4613
        %v4734 = vadd.f32 %v4008, %v4616
        %v4735 = vadd.f32 %v4009, %v4621
        %v4736 = vadd.f32 %v4010, %v4624
        %v4737 = vadd.f32 %v4011, %v4629
        %v4738 = vadd.f32 %v4012, %v4632
        %v4739 = vadd.f32 %v4013, %v4637
        %v4740 = vadd.f32 %v4014, %v4640
        %v4741 = vadd.f32 %v4015, %v4645
        %v4742 = vadd.f32 %v4016, %v4648
        %v4743 = vadd.f32 %v4017, %v4653
        %v4744 = vadd.f32 %v4018, %v4656
        %v4745 = vadd.f32 %v4019, %v4661
        %v4746 = vadd.f32 %v4020, %v4664
        %v4747 = vadd.f32 %v4021, %v4669
        %v4748 = vadd.f32 %v4022, %v4672
        %v4749 = vadd.f32 %v4023, %v4677
        %v4750 = vadd.f32 %v4024, %v4680
        %v4751 = vadd.f32 %v4025, %v4685
        %v4752 = vadd.f32 %v4026, %v4688
        %v4753 = vadd.f32 %v4027, %v4693
        %v4754 = vadd.f32 %v4028, %v4696
        %v4755 = vadd.f32 %v4029, %v4701
        %v4756 = vadd.f32 %v4030, %v4704
        %v4757 = vadd.f32 %v4031, %v4709
        %v4758 = vadd.f32 %v4032, %v4712
        %v4759 = vadd.f32 %v4033, %v4717
        %v4760 = vadd.f32 %v4034, %v4720
        %v4761 = vadd.f32 %v4035, %v4725
        %v4762 = vadd.f32 %v4036, %v4728
        %v4763 = vld [vmem:[%s3678] sm:$0xe]
        %v4764 = vld [vmem:[%s3678 + $0xc] sm:$0xe]
        %v4765 = vld [vmem:[%s3678 + $0x18] sm:$0xe]
        %v4766 = vld [vmem:[%s3678 + $0x24] sm:$0xe]
        %v4767 = vld [vmem:[%s3678 + $0x30] sm:$0xe]
        %v4768 = vld [vmem:[%s3678 + $0x3c] sm:$0xe]
        %v4769 = vld [vmem:[%s3678 + $0x48] sm:$0xe]
        %v4770 = vld [vmem:[%s3678 + $0x54] sm:$0xe]
        %v4771 = vld [vmem:[%s3678 + $0x60] sm:$0xe]
        %v4772 = vld [vmem:[%s3678 + $0x6c] sm:$0xe]
        %v4773 = vld [vmem:[%s3678 + $0x78] sm:$0xe]
        %v4774 = vld [vmem:[%s3678 + $0x84] sm:$0xe]
        %v4775 = vld [vmem:[%s3678 + $0x90] sm:$0xe]
        %v4776 = vld [vmem:[%s3678 + $0x9c] sm:$0xe]
        %v4777 = vld [vmem:[%s3678 + $0xa8] sm:$0xe]
        %v4778 = vld [vmem:[%s3678 + $0xb4] sm:$0xe]
        %v4827 = vrot.slane %v4763, 5
        %v4828 = vrot.slane %v4827, 4
        %v4829 = vrot.slane %v4038, 5
        %v4830 = vsel %vm1717, %v4828, %v4829
        %v4831 = vrot.slane %v4829, 4
        %v4832 = vrot.slane %v4039, 5
        %v4833 = vsel %vm1717, %v4831, %v4832
        %v4834 = vrot.slane %v4764, 5
        %v4835 = vrot.slane %v4834, 4
        %v4836 = vrot.slane %v4041, 5
        %v4837 = vsel %vm1717, %v4835, %v4836
        %v4838 = vrot.slane %v4836, 4
        %v4839 = vrot.slane %v4042, 5
        %v4840 = vsel %vm1717, %v4838, %v4839
        %v4841 = vrot.slane %v4765, 5
        %v4842 = vrot.slane %v4841, 4
        %v4843 = vrot.slane %v4044, 5
        %v4844 = vsel %vm1717, %v4842, %v4843
        %v4845 = vrot.slane %v4843, 4
        %v4846 = vrot.slane %v4045, 5
        %v4847 = vsel %vm1717, %v4845, %v4846
        %v4848 = vrot.slane %v4766, 5
        %v4849 = vrot.slane %v4848, 4
        %v4850 = vrot.slane %v4047, 5
        %v4851 = vsel %vm1717, %v4849, %v4850
        %v4852 = vrot.slane %v4850, 4
        %v4853 = vrot.slane %v4048, 5
        %v4854 = vsel %vm1717, %v4852, %v4853
        %v4855 = vrot.slane %v4767, 5
        %v4856 = vrot.slane %v4855, 4
        %v4857 = vrot.slane %v4050, 5
        %v4858 = vsel %vm1717, %v4856, %v4857
        %v4859 = vrot.slane %v4857, 4
        %v4860 = vrot.slane %v4051, 5
        %v4861 = vsel %vm1717, %v4859, %v4860
        %v4862 = vrot.slane %v4768, 5
        %v4863 = vrot.slane %v4862, 4
        %v4864 = vrot.slane %v4053, 5
        %v4865 = vsel %vm1717, %v4863, %v4864
        %v4866 = vrot.slane %v4864, 4
        %v4867 = vrot.slane %v4054, 5
        %v4868 = vsel %vm1717, %v4866, %v4867
        %v4869 = vrot.slane %v4769, 5
        %v4870 = vrot.slane %v4869, 4
        %v4871 = vrot.slane %v4056, 5
        %v4872 = vsel %vm1717, %v4870, %v4871
        %v4873 = vrot.slane %v4871, 4
        %v4874 = vrot.slane %v4057, 5
        %v4875 = vsel %vm1717, %v4873, %v4874
        %v4876 = vrot.slane %v4770, 5
        %v4877 = vrot.slane %v4876, 4
        %v4878 = vrot.slane %v4059, 5
        %v4879 = vsel %vm1717, %v4877, %v4878
        %v4880 = vrot.slane %v4878, 4
        %v4881 = vrot.slane %v4060, 5
        %v4882 = vsel %vm1717, %v4880, %v4881
        %v4883 = vrot.slane %v4771, 5
        %v4884 = vrot.slane %v4883, 4
        %v4885 = vrot.slane %v4062, 5
        %v4886 = vsel %vm1717, %v4884, %v4885
        %v4887 = vrot.slane %v4885, 4
        %v4888 = vrot.slane %v4063, 5
        %v4889 = vsel %vm1717, %v4887, %v4888
        %v4890 = vrot.slane %v4772, 5
        %v4891 = vrot.slane %v4890, 4
        %v4892 = vrot.slane %v4065, 5
        %v4893 = vsel %vm1717, %v4891, %v4892
        %v4894 = vrot.slane %v4892, 4
        %v4895 = vrot.slane %v4066, 5
        %v4896 = vsel %vm1717, %v4894, %v4895
        %v4897 = vrot.slane %v4773, 5
        %v4898 = vrot.slane %v4897, 4
        %v4899 = vrot.slane %v4068, 5
        %v4900 = vsel %vm1717, %v4898, %v4899
        %v4901 = vrot.slane %v4899, 4
        %v4902 = vrot.slane %v4069, 5
        %v4903 = vsel %vm1717, %v4901, %v4902
        %v4904 = vrot.slane %v4774, 5
        %v4905 = vrot.slane %v4904, 4
        %v4906 = vrot.slane %v4071, 5
        %v4907 = vsel %vm1717, %v4905, %v4906
        %v4908 = vrot.slane %v4906, 4
        %v4909 = vrot.slane %v4072, 5
        %v4910 = vsel %vm1717, %v4908, %v4909
        %v4911 = vrot.slane %v4775, 5
        %v4912 = vrot.slane %v4911, 4
        %v4913 = vrot.slane %v4074, 5
        %v4914 = vsel %vm1717, %v4912, %v4913
        %v4915 = vrot.slane %v4913, 4
        %v4916 = vrot.slane %v4075, 5
        %v4917 = vsel %vm1717, %v4915, %v4916
        %v4918 = vrot.slane %v4776, 5
        %v4919 = vrot.slane %v4918, 4
        %v4920 = vrot.slane %v4077, 5
        %v4921 = vsel %vm1717, %v4919, %v4920
        %v4922 = vrot.slane %v4920, 4
        %v4923 = vrot.slane %v4078, 5
        %v4924 = vsel %vm1717, %v4922, %v4923
        %v4925 = vrot.slane %v4777, 5
        %v4926 = vrot.slane %v4925, 4
        %v4927 = vrot.slane %v4080, 5
        %v4928 = vsel %vm1717, %v4926, %v4927
        %v4929 = vrot.slane %v4927, 4
        %v4930 = vrot.slane %v4081, 5
        %v4931 = vsel %vm1717, %v4929, %v4930
        %v4932 = vrot.slane %v4778, 5
        %v4933 = vrot.slane %v4932, 4
        %v4934 = vrot.slane %v4083, 5
        %v4935 = vsel %vm1717, %v4933, %v4934
        %v4936 = vrot.slane %v4934, 4
        %v4937 = vrot.slane %v4084, 5
        %v4938 = vsel %vm1717, %v4936, %v4937
        %s4939 = scalar_lea.vmem %s1, 16
        %v4940 = vld [vmem:[%s4939] sm:$0x3]
        %v4941 = vunpack.c.l.b16 %v4830
        %v4942 = vunpack.c.l.b16 %v4833
        %v4943 = vunpack.c.l.b16 %v4837
        %v4944 = vunpack.c.l.b16 %v4840
        %v4945 = vunpack.c.l.b16 %v4844
        %v4946 = vunpack.c.l.b16 %v4847
        %v4947 = vunpack.c.l.b16 %v4851
        %v4948 = vunpack.c.l.b16 %v4854
        %v4949 = vunpack.c.l.b16 %v4858
        %v4950 = vunpack.c.l.b16 %v4861
        %v4951 = vunpack.c.l.b16 %v4865
        %v4952 = vunpack.c.l.b16 %v4868
        %v4953 = vunpack.c.l.b16 %v4872
        %v4954 = vunpack.c.l.b16 %v4875
        %v4955 = vunpack.c.l.b16 %v4879
        %v4956 = vunpack.c.l.b16 %v4882
        %v4957 = vunpack.c.l.b16 %v4886
        %v4958 = vunpack.c.l.b16 %v4889
        %v4959 = vunpack.c.l.b16 %v4893
        %v4960 = vunpack.c.l.b16 %v4896
        %v4961 = vunpack.c.l.b16 %v4900
        %v4962 = vunpack.c.l.b16 %v4903
        %v4963 = vunpack.c.l.b16 %v4907
        %v4964 = vunpack.c.l.b16 %v4910
        %v4965 = vunpack.c.l.b16 %v4914
        %v4966 = vunpack.c.l.b16 %v4917
        %v4967 = vunpack.c.l.b16 %v4921
        %v4968 = vunpack.c.l.b16 %v4924
        %v4969 = vunpack.c.l.b16 %v4928
        %v4970 = vunpack.c.l.b16 %v4931
        %v4971 = vunpack.c.l.b16 %v4935
        %v4972 = vunpack.c.l.b16 %v4938
        %v4973 = vpack.c.b16 %v4942, %v4941
        %v4974 = vpack.c.b16 %v4944, %v4943
        %v4975 = vpack.c.b16 %v4946, %v4945
        %v4976 = vpack.c.b16 %v4948, %v4947
        %v4977 = vpack.c.b16 %v4950, %v4949
        %v4978 = vpack.c.b16 %v4952, %v4951
        %v4979 = vpack.c.b16 %v4954, %v4953
        %v4980 = vpack.c.b16 %v4956, %v4955
        %v4981 = vpack.c.b16 %v4958, %v4957
        %v4982 = vpack.c.b16 %v4960, %v4959
        %v4983 = vpack.c.b16 %v4962, %v4961
        %v4984 = vpack.c.b16 %v4964, %v4963
        %v4985 = vpack.c.b16 %v4966, %v4965
        %v4986 = vpack.c.b16 %v4968, %v4967
        %v4987 = vpack.c.b16 %v4970, %v4969
        %v4988 = vpack.c.b16 %v4972, %v4971
        %v4990 = vsel %vm1158, %v4973, 0
        %v4993 = vsel %vm1158, %v4974, 0
        %v4996 = vsel %vm1158, %v4975, 0
        %v4999 = vsel %vm1158, %v4976, 0
        %v5002 = vsel %vm1158, %v4977, 0
        %v5005 = vsel %vm1158, %v4978, 0
        %v5008 = vsel %vm1158, %v4979, 0
        %v5011 = vsel %vm1158, %v4980, 0
        %v5014 = vsel %vm1158, %v4981, 0
        %v5017 = vsel %vm1158, %v4982, 0
        %v5020 = vsel %vm1158, %v4983, 0
        %v5023 = vsel %vm1158, %v4984, 0
        %v5026 = vsel %vm1158, %v4985, 0
        %v5029 = vsel %vm1158, %v4986, 0
        %v5032 = vsel %vm1158, %v4987, 0
        %v5035 = vsel %vm1158, %v4988, 0
        %v5038 = vand.u32 %v4940, %v1210
        %5040 = vmatprep.subr.bf16.mxu0 0
        %5041 = vmatpush1.bf16.msra.mxu0 %v5038
        %5042 = vmatprep.subr.bf16.mxu0 0
        %5043 = vmatpush1.bf16.msra.mxu0 0
        %5044 = vmatprep.subr.bf16.mxu0 0
        %5045 = vmatpush1.bf16.msra.mxu0 0
        %5046 = vmatprep.subr.bf16.mxu0 0
        %5047 = vmatpush1.bf16.msra.mxu0 0
        %5048 = vmatprep.subr.bf16.mxu0 0
        %5049 = vmatpush1.bf16.msra.mxu0 0
        %5050 = vmatprep.subr.bf16.mxu0 0
        %5051 = vmatpush1.bf16.msra.mxu0 0
        %5052 = vmatprep.subr.bf16.mxu0 0
        %5053 = vmatpush1.bf16.msra.mxu0 0
        %5054 = vmatprep.subr.bf16.mxu0 0
        %5055 = vmatpush1.bf16.msra.mxu0 0
        %5056 = vmatprep.subr.bf16.mxu0 0
        %5057 = vmatpush1.bf16.msra.mxu0 0
        %5058 = vmatprep.subr.bf16.mxu0 0
        %5059 = vmatpush1.bf16.msra.mxu0 0
        %5060 = vmatprep.subr.bf16.mxu0 0
        %5061 = vmatpush1.bf16.msra.mxu0 0
        %5062 = vmatprep.subr.bf16.mxu0 0
        %5063 = vmatpush1.bf16.msra.mxu0 0
        %5064 = vmatprep.subr.bf16.mxu0 0
        %5065 = vmatpush1.bf16.msra.mxu0 0
        %5066 = vmatprep.subr.bf16.mxu0 0
        %5067 = vmatpush1.bf16.msra.mxu0 0
        %5068 = vmatprep.subr.bf16.mxu0 0
        %5069 = vmatpush1.bf16.msra.mxu0 0
        %5070 = vmatprep.subr.bf16.mxu0 0
        %5071 = vmatpush1.bf16.msra.mxu0 0
        %5072 = vmatprep.mubr.bf16.mxu0 0
        %5073 = vmatmul.mubr.bf16.gmra.mrb[0].mxu0 %v4990
        %v5074 = vpop.f32.mrb[0].mxu0
        %v5075 = vadd.f32 0.0, %v5074
        %v5076 = vpop.f32.mrb[0].mxu0
        %v5077 = vpop.f32.mrb[0].mxu0
        %v5078 = vadd.f32 0.0, %v5077
        %v5079 = vpop.f32.mrb[0].mxu0
        %5080 = vmatprep.mubr.bf16.mxu0 0
        %5081 = vmatmul.mubr.bf16.gmra.mrb[0].mxu0 %v4993
        %v5082 = vpop.f32.mrb[0].mxu0
        %v5083 = vadd.f32 0.0, %v5082
        %v5084 = vpop.f32.mrb[0].mxu0
        %v5085 = vpop.f32.mrb[0].mxu0
        %v5086 = vadd.f32 0.0, %v5085
        %v5087 = vpop.f32.mrb[0].mxu0
        %5088 = vmatprep.mubr.bf16.mxu0 0
        %5089 = vmatmul.mubr.bf16.gmra.mrb[0].mxu0 %v4996
        %v5090 = vpop.f32.mrb[0].mxu0
        %v5091 = vadd.f32 0.0, %v5090
        %v5092 = vpop.f32.mrb[0].mxu0
        %v5093 = vpop.f32.mrb[0].mxu0
        %v5094 = vadd.f32 0.0, %v5093
        %v5095 = vpop.f32.mrb[0].mxu0
        %5096 = vmatprep.mubr.bf16.mxu0 0
        %5097 = vmatmul.mubr.bf16.gmra.mrb[0].mxu0 %v4999
        %v5098 = vpop.f32.mrb[0].mxu0
        %v5099 = vadd.f32 0.0, %v5098
        %v5100 = vpop.f32.mrb[0].mxu0
        %v5101 = vpop.f32.mrb[0].mxu0
        %v5102 = vadd.f32 0.0, %v5101
        %v5103 = vpop.f32.mrb[0].mxu0
        %5104 = vmatprep.mubr.bf16.mxu0 0
        %5105 = vmatmul.mubr.bf16.gmra.mrb[0].mxu0 %v5002
        %v5106 = vpop.f32.mrb[0].mxu0
        %v5107 = vadd.f32 0.0, %v5106
        %v5108 = vpop.f32.mrb[0].mxu0
        %v5109 = vpop.f32.mrb[0].mxu0
        %v5110 = vadd.f32 0.0, %v5109
        %v5111 = vpop.f32.mrb[0].mxu0
        %5112 = vmatprep.mubr.bf16.mxu0 0
        %5113 = vmatmul.mubr.bf16.gmra.mrb[0].mxu0 %v5005
        %v5114 = vpop.f32.mrb[0].mxu0
        %v5115 = vadd.f32 0.0, %v5114
        %v5116 = vpop.f32.mrb[0].mxu0
        %v5117 = vpop.f32.mrb[0].mxu0
        %v5118 = vadd.f32 0.0, %v5117
        %v5119 = vpop.f32.mrb[0].mxu0
        %5120 = vmatprep.mubr.bf16.mxu0 0
        %5121 = vmatmul.mubr.bf16.gmra.mrb[0].mxu0 %v5008
        %v5122 = vpop.f32.mrb[0].mxu0
        %v5123 = vadd.f32 0.0, %v5122
        %v5124 = vpop.f32.mrb[0].mxu0
        %v5125 = vpop.f32.mrb[0].mxu0
        %v5126 = vadd.f32 0.0, %v5125
        %v5127 = vpop.f32.mrb[0].mxu0
        %5128 = vmatprep.mubr.bf16.mxu0 0
        %5129 = vmatmul.mubr.bf16.gmra.mrb[0].mxu0 %v5011
        %v5130 = vpop.f32.mrb[0].mxu0
        %v5131 = vadd.f32 0.0, %v5130
        %v5132 = vpop.f32.mrb[0].mxu0
        %v5133 = vpop.f32.mrb[0].mxu0
        %v5134 = vadd.f32 0.0, %v5133
        %v5135 = vpop.f32.mrb[0].mxu0
        %5136 = vmatprep.mubr.bf16.mxu0 0
        %5137 = vmatmul.mubr.bf16.gmra.mrb[0].mxu0 %v5014
        %v5138 = vpop.f32.mrb[0].mxu0
        %v5139 = vadd.f32 0.0, %v5138
        %v5140 = vpop.f32.mrb[0].mxu0
        %v5141 = vpop.f32.mrb[0].mxu0
        %v5142 = vadd.f32 0.0, %v5141
        %v5143 = vpop.f32.mrb[0].mxu0
        %5144 = vmatprep.mubr.bf16.mxu0 0
        %5145 = vmatmul.mubr.bf16.gmra.mrb[0].mxu0 %v5017
        %v5146 = vpop.f32.mrb[0].mxu0
        %v5147 = vadd.f32 0.0, %v5146
        %v5148 = vpop.f32.mrb[0].mxu0
        %v5149 = vpop.f32.mrb[0].mxu0
        %v5150 = vadd.f32 0.0, %v5149
        %v5151 = vpop.f32.mrb[0].mxu0
        %5152 = vmatprep.mubr.bf16.mxu0 0
        %5153 = vmatmul.mubr.bf16.gmra.mrb[0].mxu0 %v5020
        %v5154 = vpop.f32.mrb[0].mxu0
        %v5155 = vadd.f32 0.0, %v5154
        %v5156 = vpop.f32.mrb[0].mxu0
        %v5157 = vpop.f32.mrb[0].mxu0
        %v5158 = vadd.f32 0.0, %v5157
        %v5159 = vpop.f32.mrb[0].mxu0
        %5160 = vmatprep.mubr.bf16.mxu0 0
        %5161 = vmatmul.mubr.bf16.gmra.mrb[0].mxu0 %v5023
        %v5162 = vpop.f32.mrb[0].mxu0
        %v5163 = vadd.f32 0.0, %v5162
        %v5164 = vpop.f32.mrb[0].mxu0
        %v5165 = vpop.f32.mrb[0].mxu0
        %v5166 = vadd.f32 0.0, %v5165
        %v5167 = vpop.f32.mrb[0].mxu0
        %5168 = vmatprep.mubr.bf16.mxu0 0
        %5169 = vmatmul.mubr.bf16.gmra.mrb[0].mxu0 %v5026
        %v5170 = vpop.f32.mrb[0].mxu0
        %v5171 = vadd.f32 0.0, %v5170
        %v5172 = vpop.f32.mrb[0].mxu0
        %v5173 = vpop.f32.mrb[0].mxu0
        %v5174 = vadd.f32 0.0, %v5173
        %v5175 = vpop.f32.mrb[0].mxu0
        %5176 = vmatprep.mubr.bf16.mxu0 0
        %5177 = vmatmul.mubr.bf16.gmra.mrb[0].mxu0 %v5029
        %v5178 = vpop.f32.mrb[0].mxu0
        %v5179 = vadd.f32 0.0, %v5178
        %v5180 = vpop.f32.mrb[0].mxu0
        %v5181 = vpop.f32.mrb[0].mxu0
        %v5182 = vadd.f32 0.0, %v5181
        %v5183 = vpop.f32.mrb[0].mxu0
        %5184 = vmatprep.mubr.bf16.mxu0 0
        %5185 = vmatmul.mubr.bf16.gmra.mrb[0].mxu0 %v5032
        %v5186 = vpop.f32.mrb[0].mxu0
        %v5187 = vadd.f32 0.0, %v5186
        %v5188 = vpop.f32.mrb[0].mxu0
        %v5189 = vpop.f32.mrb[0].mxu0
        %v5190 = vadd.f32 0.0, %v5189
        %v5191 = vpop.f32.mrb[0].mxu0
        %5192 = vmatprep.mubr.bf16.mxu0 0
        %5193 = vmatmul.mubr.bf16.gmra.mrb[0].mxu0 %v5035
        %v5194 = vpop.f32.mrb[0].mxu0
        %v5195 = vadd.f32 0.0, %v5194
        %v5196 = vpop.f32.mrb[0].mxu0
        %v5197 = vpop.f32.mrb[0].mxu0
        %v5198 = vadd.f32 0.0, %v5197
        %v5199 = vpop.f32.mrb[0].mxu0
        %5200 = vdwg.mxu0
        %v5201 = vadd.f32 %v4731, %v5075
        %v5202 = vadd.f32 %v4732, %v5078
        %v5203 = vadd.f32 %v4733, %v5083
        %v5204 = vadd.f32 %v4734, %v5086
        %v5205 = vadd.f32 %v4735, %v5091
        %v5206 = vadd.f32 %v4736, %v5094
        %v5207 = vadd.f32 %v4737, %v5099
        %v5208 = vadd.f32 %v4738, %v5102
        %v5209 = vadd.f32 %v4739, %v5107
        %v5210 = vadd.f32 %v4740, %v5110
        %v5211 = vadd.f32 %v4741, %v5115
        %v5212 = vadd.f32 %v4742, %v5118
        %v5213 = vadd.f32 %v4743, %v5123
        %v5214 = vadd.f32 %v4744, %v5126
        %v5215 = vadd.f32 %v4745, %v5131
        %v5216 = vadd.f32 %v4746, %v5134
        %v5217 = vadd.f32 %v4747, %v5139
        %v5218 = vadd.f32 %v4748, %v5142
        %v5219 = vadd.f32 %v4749, %v5147
        %v5220 = vadd.f32 %v4750, %v5150
        %v5221 = vadd.f32 %v4751, %v5155
        %v5222 = vadd.f32 %v4752, %v5158
        %v5223 = vadd.f32 %v4753, %v5163
        %v5224 = vadd.f32 %v4754, %v5166
        %v5225 = vadd.f32 %v4755, %v5171
        %v5226 = vadd.f32 %v4756, %v5174
        %v5227 = vadd.f32 %v4757, %v5179
        %v5228 = vadd.f32 %v4758, %v5182
        %v5229 = vadd.f32 %v4759, %v5187
        %v5230 = vadd.f32 %v4760, %v5190
        %v5231 = vadd.f32 %v4761, %v5195
        %v5232 = vadd.f32 %v4762, %v5198
        %vm5233 = vcmp.ge.f32.partialorder %v5201, 0.0
        %vm5234 = vcmp.ge.f32.partialorder %v5202, 0.0
        %vm5235 = vcmp.ge.f32.partialorder %v5203, 0.0
        %vm5236 = vcmp.ge.f32.partialorder %v5204, 0.0
        %vm5237 = vcmp.ge.f32.partialorder %v5205, 0.0
        %vm5238 = vcmp.ge.f32.partialorder %v5206, 0.0
        %vm5239 = vcmp.ge.f32.partialorder %v5207, 0.0
        %vm5240 = vcmp.ge.f32.partialorder %v5208, 0.0
        %vm5241 = vcmp.ge.f32.partialorder %v5209, 0.0
        %vm5242 = vcmp.ge.f32.partialorder %v5210, 0.0
        %vm5243 = vcmp.ge.f32.partialorder %v5211, 0.0
        %vm5244 = vcmp.ge.f32.partialorder %v5212, 0.0
        %vm5245 = vcmp.ge.f32.partialorder %v5213, 0.0
        %vm5246 = vcmp.ge.f32.partialorder %v5214, 0.0
        %vm5247 = vcmp.ge.f32.partialorder %v5215, 0.0
        %vm5248 = vcmp.ge.f32.partialorder %v5216, 0.0
        %vm5249 = vcmp.ge.f32.partialorder %v5217, 0.0
        %vm5250 = vcmp.ge.f32.partialorder %v5218, 0.0
        %vm5251 = vcmp.ge.f32.partialorder %v5219, 0.0
        %vm5252 = vcmp.ge.f32.partialorder %v5220, 0.0
        %vm5253 = vcmp.ge.f32.partialorder %v5221, 0.0
        %vm5254 = vcmp.ge.f32.partialorder %v5222, 0.0
        %vm5255 = vcmp.ge.f32.partialorder %v5223, 0.0
        %vm5256 = vcmp.ge.f32.partialorder %v5224, 0.0
        %vm5257 = vcmp.ge.f32.partialorder %v5225, 0.0
        %vm5258 = vcmp.ge.f32.partialorder %v5226, 0.0
        %vm5259 = vcmp.ge.f32.partialorder %v5227, 0.0
        %vm5260 = vcmp.ge.f32.partialorder %v5228, 0.0
        %vm5261 = vcmp.ge.f32.partialorder %v5229, 0.0
        %vm5262 = vcmp.ge.f32.partialorder %v5230, 0.0
        %vm5263 = vcmp.ge.f32.partialorder %v5231, 0.0
        %vm5264 = vcmp.ge.f32.partialorder %v5232, 0.0
        %v5265 = vmul.f32 %v5201, 0.2
        %v5266 = vmul.f32 %v5202, 0.2
        %v5267 = vmul.f32 %v5203, 0.2
        %v5268 = vmul.f32 %v5204, 0.2
        %v5269 = vmul.f32 %v5205, 0.2
        %v5270 = vmul.f32 %v5206, 0.2
        %v5271 = vmul.f32 %v5207, 0.2
        %v5272 = vmul.f32 %v5208, 0.2
        %v5273 = vmul.f32 %v5209, 0.2
        %v5274 = vmul.f32 %v5210, 0.2
        %v5275 = vmul.f32 %v5211, 0.2
        %v5276 = vmul.f32 %v5212, 0.2
        %v5277 = vmul.f32 %v5213, 0.2
        %v5278 = vmul.f32 %v5214, 0.2
        %v5279 = vmul.f32 %v5215, 0.2
        %v5280 = vmul.f32 %v5216, 0.2
        %v5281 = vmul.f32 %v5217, 0.2
        %v5282 = vmul.f32 %v5218, 0.2
        %v5283 = vmul.f32 %v5219, 0.2
        %v5284 = vmul.f32 %v5220, 0.2
        %v5285 = vmul.f32 %v5221, 0.2
        %v5286 = vmul.f32 %v5222, 0.2
        %v5287 = vmul.f32 %v5223, 0.2
        %v5288 = vmul.f32 %v5224, 0.2
        %v5289 = vmul.f32 %v5225, 0.2
        %v5290 = vmul.f32 %v5226, 0.2
        %v5291 = vmul.f32 %v5227, 0.2
        %v5292 = vmul.f32 %v5228, 0.2
        %v5293 = vmul.f32 %v5229, 0.2
        %v5294 = vmul.f32 %v5230, 0.2
        %v5295 = vmul.f32 %v5231, 0.2
        %v5296 = vmul.f32 %v5232, 0.2
        %v5297 = vsel %vm5233, %v5201, %v5265
        %v5298 = vsel %vm5234, %v5202, %v5266
        %v5299 = vsel %vm5235, %v5203, %v5267
        %v5300 = vsel %vm5236, %v5204, %v5268
        %v5301 = vsel %vm5237, %v5205, %v5269
        %v5302 = vsel %vm5238, %v5206, %v5270
        %v5303 = vsel %vm5239, %v5207, %v5271
        %v5304 = vsel %vm5240, %v5208, %v5272
        %v5305 = vsel %vm5241, %v5209, %v5273
        %v5306 = vsel %vm5242, %v5210, %v5274
        %v5307 = vsel %vm5243, %v5211, %v5275
        %v5308 = vsel %vm5244, %v5212, %v5276
        %v5309 = vsel %vm5245, %v5213, %v5277
        %v5310 = vsel %vm5246, %v5214, %v5278
        %v5311 = vsel %vm5247, %v5215, %v5279
        %v5312 = vsel %vm5248, %v5216, %v5280
        %v5313 = vsel %vm5249, %v5217, %v5281
        %v5314 = vsel %vm5250, %v5218, %v5282
        %v5315 = vsel %vm5251, %v5219, %v5283
        %v5316 = vsel %vm5252, %v5220, %v5284
        %v5317 = vsel %vm5253, %v5221, %v5285
        %v5318 = vsel %vm5254, %v5222, %v5286
        %v5319 = vsel %vm5255, %v5223, %v5287
        %v5320 = vsel %vm5256, %v5224, %v5288
        %v5321 = vsel %vm5257, %v5225, %v5289
        %v5322 = vsel %vm5258, %v5226, %v5290
        %v5323 = vsel %vm5259, %v5227, %v5291
        %v5324 = vsel %vm5260, %v5228, %v5292
        %v5325 = vsel %vm5261, %v5229, %v5293
        %v5326 = vsel %vm5262, %v5230, %v5294
        %v5327 = vsel %vm5263, %v5231, %v5295
        %v5328 = vsel %vm5264, %v5232, %v5296
        %v5329 = vpack.c.bf16 %v5298, %v5297
        %v5330 = vpack.c.bf16 %v5300, %v5299
        %v5331 = vpack.c.bf16 %v5302, %v5301
        %v5332 = vpack.c.bf16 %v5304, %v5303
        %v5333 = vpack.c.bf16 %v5306, %v5305
        %v5334 = vpack.c.bf16 %v5308, %v5307
        %v5335 = vpack.c.bf16 %v5310, %v5309
        %v5336 = vpack.c.bf16 %v5312, %v5311
        %v5337 = vpack.c.bf16 %v5314, %v5313
        %v5338 = vpack.c.bf16 %v5316, %v5315
        %v5339 = vpack.c.bf16 %v5318, %v5317
        %v5340 = vpack.c.bf16 %v5320, %v5319
        %v5341 = vpack.c.bf16 %v5322, %v5321
        %v5342 = vpack.c.bf16 %v5324, %v5323
        %v5343 = vpack.c.bf16 %v5326, %v5325
        %v5344 = vpack.c.bf16 %v5328, %v5327
        %v5361 = vunpack.c.l.b16 %v5329
        %v5362 = vunpack.c.h.b16 %v5329
        %v5363 = vunpack.c.l.b16 %v5330
        %v5364 = vunpack.c.h.b16 %v5330
        %v5365 = vunpack.c.l.b16 %v5331
        %v5366 = vunpack.c.h.b16 %v5331
        %v5367 = vunpack.c.l.b16 %v5332
        %v5368 = vunpack.c.h.b16 %v5332
        %v5369 = vunpack.c.l.b16 %v5333
        %v5370 = vunpack.c.h.b16 %v5333
        %v5371 = vunpack.c.l.b16 %v5334
        %v5372 = vunpack.c.h.b16 %v5334
        %v5373 = vunpack.c.l.b16 %v5335
        %v5374 = vunpack.c.h.b16 %v5335
        %v5375 = vunpack.c.l.b16 %v5336
        %v5376 = vunpack.c.h.b16 %v5336
        %v5377 = vunpack.c.l.b16 %v5337
        %v5378 = vunpack.c.h.b16 %v5337
        %v5379 = vunpack.c.l.b16 %v5338
        %v5380 = vunpack.c.h.b16 %v5338
        %v5381 = vunpack.c.l.b16 %v5339
        %v5382 = vunpack.c.h.b16 %v5339
        %v5383 = vunpack.c.l.b16 %v5340
        %v5384 = vunpack.c.h.b16 %v5340
        %v5385 = vunpack.c.l.b16 %v5341
        %v5386 = vunpack.c.h.b16 %v5341
        %v5387 = vunpack.c.l.b16 %v5342
        %v5388 = vunpack.c.h.b16 %v5342
        %v5389 = vunpack.c.l.b16 %v5343
        %v5390 = vunpack.c.h.b16 %v5343
        %v5391 = vunpack.c.l.b16 %v5344
        %v5392 = vunpack.c.h.b16 %v5344
        %v5393 = vpack.c.b16 %v5361, %v5361
        %v5394 = vpack.c.b16 %v5362, %v5362
        %v5395 = vpack.c.b16 %v5363, %v5363
        %v5396 = vpack.c.b16 %v5364, %v5364
        %v5397 = vpack.c.b16 %v5365, %v5365
        %v5398 = vpack.c.b16 %v5366, %v5366
        %v5399 = vpack.c.b16 %v5367, %v5367
        %v5400 = vpack.c.b16 %v5368, %v5368
        %v5401 = vpack.c.b16 %v5369, %v5369
        %v5402 = vpack.c.b16 %v5370, %v5370
        %v5403 = vpack.c.b16 %v5371, %v5371
        %v5404 = vpack.c.b16 %v5372, %v5372
        %v5405 = vpack.c.b16 %v5373, %v5373
        %v5406 = vpack.c.b16 %v5374, %v5374
        %v5407 = vpack.c.b16 %v5375, %v5375
        %v5408 = vpack.c.b16 %v5376, %v5376
        %v5409 = vpack.c.b16 %v5377, %v5377
        %v5410 = vpack.c.b16 %v5378, %v5378
        %v5411 = vpack.c.b16 %v5379, %v5379
        %v5412 = vpack.c.b16 %v5380, %v5380
        %v5413 = vpack.c.b16 %v5381, %v5381
        %v5414 = vpack.c.b16 %v5382, %v5382
        %v5415 = vpack.c.b16 %v5383, %v5383
        %v5416 = vpack.c.b16 %v5384, %v5384
        %v5417 = vpack.c.b16 %v5385, %v5385
        %v5418 = vpack.c.b16 %v5386, %v5386
        %v5419 = vpack.c.b16 %v5387, %v5387
        %v5420 = vpack.c.b16 %v5388, %v5388
        %v5421 = vpack.c.b16 %v5389, %v5389
        %v5422 = vpack.c.b16 %v5390, %v5390
        %v5423 = vpack.c.b16 %v5391, %v5391
        %v5424 = vpack.c.b16 %v5392, %v5392
        %vm5457 = vcmask 257024
        %5458 = vst.msk [vmem:[%s136] sm:$0xf] %vm5457, %v5393
        %5459 = vst.msk [vmem:[%s136 + $0x4] sm:$0xf] %vm5457, %v5394
        %5460 = vst.msk [vmem:[%s136 + $0x8] sm:$0xf] %vm5457, %v5395
        %5461 = vst.msk [vmem:[%s136 + $0xc] sm:$0xf] %vm5457, %v5396
        %5462 = vst.msk [vmem:[%s136 + $0x10] sm:$0xf] %vm5457, %v5397
        %5463 = vst.msk [vmem:[%s136 + $0x14] sm:$0xf] %vm5457, %v5398
        %5464 = vst.msk [vmem:[%s136 + $0x18] sm:$0xf] %vm5457, %v5399
        %5465 = vst.msk [vmem:[%s136 + $0x1c] sm:$0xf] %vm5457, %v5400
        %5466 = vst.msk [vmem:[%s136 + $0x20] sm:$0xf] %vm5457, %v5401
        %5467 = vst.msk [vmem:[%s136 + $0x24] sm:$0xf] %vm5457, %v5402
        %5468 = vst.msk [vmem:[%s136 + $0x28] sm:$0xf] %vm5457, %v5403
        %5469 = vst.msk [vmem:[%s136 + $0x2c] sm:$0xf] %vm5457, %v5404
        %5470 = vst.msk [vmem:[%s136 + $0x30] sm:$0xf] %vm5457, %v5405
        %5471 = vst.msk [vmem:[%s136 + $0x34] sm:$0xf] %vm5457, %v5406
        %5472 = vst.msk [vmem:[%s136 + $0x38] sm:$0xf] %vm5457, %v5407
        %5473 = vst.msk [vmem:[%s136 + $0x3c] sm:$0xf] %vm5457, %v5408
        %5474 = vst.msk [vmem:[%s136 + $0x40] sm:$0xf] %vm5457, %v5409
        %5475 = vst.msk [vmem:[%s136 + $0x44] sm:$0xf] %vm5457, %v5410
        %5476 = vst.msk [vmem:[%s136 + $0x48] sm:$0xf] %vm5457, %v5411
        %5477 = vst.msk [vmem:[%s136 + $0x4c] sm:$0xf] %vm5457, %v5412
        %5478 = vst.msk [vmem:[%s136 + $0x50] sm:$0xf] %vm5457, %v5413
        %5479 = vst.msk [vmem:[%s136 + $0x54] sm:$0xf] %vm5457, %v5414
        %5480 = vst.msk [vmem:[%s136 + $0x58] sm:$0xf] %vm5457, %v5415
        %5481 = vst.msk [vmem:[%s136 + $0x5c] sm:$0xf] %vm5457, %v5416
        %5482 = vst.msk [vmem:[%s136 + $0x60] sm:$0xf] %vm5457, %v5417
        %5483 = vst.msk [vmem:[%s136 + $0x64] sm:$0xf] %vm5457, %v5418
        %5484 = vst.msk [vmem:[%s136 + $0x68] sm:$0xf] %vm5457, %v5419
        %5485 = vst.msk [vmem:[%s136 + $0x6c] sm:$0xf] %vm5457, %v5420
        %5486 = vst.msk [vmem:[%s136 + $0x70] sm:$0xf] %vm5457, %v5421
        %5487 = vst.msk [vmem:[%s136 + $0x74] sm:$0xf] %vm5457, %v5422
        %5488 = vst.msk [vmem:[%s136 + $0x78] sm:$0xf] %vm5457, %v5423
        %5489 = vst.msk [vmem:[%s136 + $0x7c] sm:$0xf] %vm5457, %v5424
        %s5490 = sand.u32 %s71, 1
        %s5491 = scalar_lea.sflag [#allocation4], %s5490
        %s5492 = sand.u32 %s71, 1
        %s5493 = smul.addr %s5492, 128
        %s5494 = scalar_lea.vmem [#allocation3], %s5493
        // Predicated region
        $region29: #{tpu_custom_call.1} parent=27 // pred_check
          %p5495 = pneg %p81
        $region30: #{tpu_custom_call.1} parent=27 // pred_check_branch
          %5497 = sbr.rel (%p5495) target = $region32
        $region31: #{tpu_custom_call.1} parent=27 // pred_region
          %s5499 = ssub.s32 2048, 2048
          %5500 = vsyncadd %s5491, %s5499
          %s5501 = smul.addr %s16, 32
          %s5502 = smul.addr %s5501, 64
          %s5503 = scalar_lea.hbm %s2, %s5502
          %s5504 = sshll.u32 %s5494, 4
          %s5505 = int_to_ptr.vmem [resolvable:$true] %s5504
          %5510 = dma.vmem_to_hbm [thread:$0]  %s5505, 2048, %s5503, %s5491, 64, 64, 4
        $region32: #{tpu_custom_call.1} parent=27 // pred_fallthru
          _
      $region28: #{tpu_custom_call.1} parent=5 // pred_fallthru
        _
      %p5511 = scmp.le.s32.totalorder 2, %s11
      // Predicated region
      $region33: #{tpu_custom_call.1} parent=5 // pred_check
        %p5512 = pneg %p5511
      $region34: #{tpu_custom_call.1} parent=5 // pred_check_branch
        %5514 = sbr.rel (%p5512) target = $region36
      $region35: #{tpu_custom_call.1} parent=5 // pred_region
        %s5515 = ssub.s32 %s11, 2
        // Predicated region
        $region37: #{tpu_custom_call.1} parent=35 // pred_check
          %p5516 = pneg %p87
        $region38: #{tpu_custom_call.1} parent=35 // pred_check_branch
          %5518 = sbr.rel (%p5516) target = $region40
        $region39: #{tpu_custom_call.1} parent=35 // pred_region
          %s5519 = sand.u32 %s72, 1
          %s5520 = scalar_lea.sflag [#allocation4], %s5519
          %s5521 = sand.u32 %s72, 1
          %s5522 = smul.addr %s5521, 128
          %s5523 = scalar_lea.vmem [#allocation3], %s5522
          %5524 = dma.done %s5520, 2048
        $region40: #{tpu_custom_call.1} parent=35 // pred_fallthru
          _
      $region36: #{tpu_custom_call.1} parent=5 // pred_fallthru
        _
    $region6: #{tpu_custom_call.1} parent=1 // loop_footer
      %s15 = sadd.s32 1, %s11
    $region7: #{tpu_custom_call.1} parent=1 // loop_footer_branch
      %10 = sbr.rel target = $region3
    $region8: #{tpu_custom_call.1} parent=1 // loop_exit
      _
    %5525 = vsyncpa [#allocation4], 1
    %s5526 = scalar_lea.sflag [#allocation4], 1
    %5527 = vsyncpa %s5526, 1

</llo_original>
